<compile_context>
chip_gen: v5e
topology: v5e:2x2
jax: 0.10.0
libtpu: 0.0.40
codegen_flags: <defaults>
</compile_context>

<pallas_src>
import jax
import jax.numpy as jnp
from jax.experimental import pallas as pl
from jax.experimental.pallas import tpu as pltpu

H = 64          # hidden size
IN = 50         # LSTM input size
IN_PAD = 64     # padded input feature dim (zero columns contribute nothing)
B_PAD = 8       # padded batch (sublane alignment)


# ----------------------------- Pallas kernel --------------------------------
def _lstm_gates(g, c_prev):
    """Apply LSTM gate nonlinearities.

    Gate columns are pre-permuted to (i, f, o, g): sigmoid hits one contiguous
    (Bp, 3H) slab, tanh hits the trailing (Bp, H) slab.
    """
    sig = jax.nn.sigmoid(g[:, :3 * H])
    gg = jnp.tanh(g[:, 3 * H:])
    i = sig[:, 0 * H:1 * H]
    f = sig[:, 1 * H:2 * H]
    o = sig[:, 2 * H:3 * H]
    c_new = f * c_prev + i * gg
    h_new = o * jnp.tanh(c_new)
    return h_new, c_new


def rnnet_kernel(x_ref,                      # (T*B_PAD, IN_PAD)
                 wih0_ref, whh0_ref, b0_ref,  # (IN_PAD,4H) (H,4H) (1,4H)
                 w1_ref, b1_ref,              # (2H,4H) (1,4H)  fused [Wih;Whh]
                 w2_ref, b2_ref,              # (2H,4H) (1,4H)  fused [Wih;Whh]
                 wout_ref, bout_ref,          # (H,1) (1,1)
                 out_ref,                     # (B_PAD, 1)
                 xproj_ref):                  # scratch (T*B_PAD, 4H)
    Bp = B_PAD
    T = x_ref.shape[0] // Bp

    # ---- layer-0 input projection for ALL timesteps in one big matmul ------
    # (T*Bp, IN_PAD) @ (IN_PAD, 4H) + b0  -> VMEM scratch.
    xproj_ref[...] = (
        jnp.dot(x_ref[...], wih0_ref[...], preferred_element_type=jnp.float32)
        + b0_ref[...])

    zeros = jnp.zeros((Bp, H), jnp.float32)
    h0, c0 = zeros, zeros
    h1, c1 = zeros, zeros
    h2, c2 = zeros, zeros

    b1 = b1_ref[...]                       # tiny (1, 4H): fine to hoist
    b2 = b2_ref[...]

    # ---- statically unrolled recurrence ------------------------------------
    for t in range(T):
        # layer 0: only the recurrent matmul remains on the critical path.
        g0 = (xproj_ref[pl.ds(t * Bp, Bp), :]
              + jnp.dot(h0, whh0_ref[...], preferred_element_type=jnp.float32))
        h0, c0 = _lstm_gates(g0, c0)

        # layer 1: fused [x|h] (8,128) @ (128,256) K=128 matmul.
        g1 = jnp.dot(jnp.concatenate([h0, h1], axis=1), w1_ref[...],
                     preferred_element_type=jnp.float32) + b1
        h1, c1 = _lstm_gates(g1, c1)

        # layer 2: fused [x|h] (8,128) @ (128,256) K=128 matmul.
        g2 = jnp.dot(jnp.concatenate([h1, h2], axis=1), w2_ref[...],
                     preferred_element_type=jnp.float32) + b2
        h2, c2 = _lstm_gates(g2, c2)

    # ---- output head: Linear(64, 1) + sigmoid on the last hidden state -----
    logits = jnp.dot(h2, wout_ref[...],
                     preferred_element_type=jnp.float32) + bout_ref[...]
    out_ref[...] = jax.nn.sigmoid(logits)


# ------------------------------- JAX glue ------------------------------------
def init_params(key):
    """Deterministic init mirroring PyTorch shapes (uniform(-1/sqrt(H), 1/sqrt(H)))."""
    keys = jax.random.split(key, 14)
    bound = 1.0 / jnp.sqrt(jnp.float32(H))

    def u(k, shape):
        return jax.random.uniform(k, shape, jnp.float32, -bound, bound)

    in_sizes = [IN, H, H]
    layers = []
    ki = 0
    for l in range(3):
        w_ih = u(keys[ki], (4 * H, in_sizes[l])); ki += 1
        w_hh = u(keys[ki], (4 * H, H)); ki += 1
        b_ih = u(keys[ki], (4 * H,)); ki += 1
        b_hh = u(keys[ki], (4 * H,)); ki += 1
        layers.append((w_ih, w_hh, b_ih, b_hh))
    w_out = u(keys[ki], (1, H)); ki += 1
    b_out = u(keys[ki], (1,)); ki += 1
    return layers, (w_out, b_out)


def _permute_gates(w):
    """Permute last-axis gate blocks from PyTorch (i,f,g,o) to (i,f,o,g)."""
    return jnp.concatenate(
        [w[..., 0 * H:2 * H], w[..., 3 * H:4 * H], w[..., 2 * H:3 * H]],
        axis=-1)


def prepare_kernel_params(layers, out_params):
    """Transpose / pad / fuse PyTorch-shaped params into kernel tensors."""
    # Layer 0: keep Wih separate (used once, pre-loop), fold both biases.
    w_ih0, w_hh0, b_ih0, b_hh0 = layers[0]
    wih0 = jnp.pad(jnp.transpose(w_ih0), ((0, IN_PAD - IN), (0, 0)))  # (IN_PAD,4H)
    whh0 = jnp.transpose(w_hh0)                                       # (H,4H)
    b0 = (b_ih0 + b_hh0).reshape(1, 4 * H)
    wih0, whh0, b0 = _permute_gates(wih0), _permute_gates(whh0), _permute_gates(b0)

    # Layers 1/2: fuse [Wih; Whh] into one (2H, 4H) matrix for a K=128 dot.
    fused = []
    for l in (1, 2):
        w_ih, w_hh, b_ih, b_hh = layers[l]
        w = jnp.concatenate([jnp.transpose(w_ih), jnp.transpose(w_hh)], axis=0)
        b = (b_ih + b_hh).reshape(1, 4 * H)
        fused.append((_permute_gates(w), _permute_gates(b)))

    w_out, b_out = out_params
    return [wih0, whh0, b0,
            fused[0][0], fused[0][1],
            fused[1][0], fused[1][1],
            jnp.transpose(w_out), b_out.reshape(1, 1)]


def rnnet_forward(x, layers, out_params):
    """x: (B, T, 50) batch-first, like the PyTorch module.  Returns (B, 1)."""
    B, T, _ = x.shape
    # time-major, padded, and flattened to (T*B_PAD, IN_PAD) so the layer-0
    # projection is one big lane-aligned matmul inside the kernel.
    x_tm = jnp.transpose(x, (1, 0, 2)).astype(jnp.float32)          # (T, B, 50)
    x_pad = jnp.pad(x_tm, ((0, 0), (0, B_PAD - B), (0, IN_PAD - IN)))
    x_flat = x_pad.reshape(T * B_PAD, IN_PAD)

    args = [x_flat] + prepare_kernel_params(layers, out_params)
    vmem_spec = pl.BlockSpec(memory_space=pltpu.MemorySpace.VMEM)

    # Advisory cost hint so XLA can schedule around this tiny kernel.
    flops = (2 * (T * B_PAD) * IN_PAD * 4 * H               # layer-0 projection
             + 2 * T * B_PAD * (H + 2 * H + 2 * H) * 4 * H  # recurrent matmuls
             + 2 * B_PAD * H)                               # output head
    cost = pl.CostEstimate(
        flops=int(flops),
        transcendentals=int(T * 3 * 5 * B_PAD * H),
        bytes_accessed=int(sum(a.size * 4 for a in args) + B_PAD * 4),
    )

    out = pl.pallas_call(
        rnnet_kernel,
        out_shape=jax.ShapeDtypeStruct((B_PAD, 1), jnp.float32),
        in_specs=[vmem_spec] * len(args),
        out_specs=vmem_spec,
        scratch_shapes=[pltpu.VMEM((T * B_PAD, 4 * H), jnp.float32)],
        compiler_params=pltpu.CompilerParams(vmem_limit_bytes=8 << 20),
        cost_estimate=cost,
    )(*args)
    return out[:B, :]


# --------------------------- pure-JAX reference ------------------------------
def ref_forward(x, layers, out_params):
    B, T, _ = x.shape
    inp = x.astype(jnp.float32)
    for (w_ih, w_hh, b_ih, b_hh) in layers:
        h_t = jnp.zeros((B, H), jnp.float32)
        c_t = jnp.zeros((B, H), jnp.float32)
        hs = []
        for t in range(T):
            g = inp[:, t, :] @ w_ih.T + h_t @ w_hh.T + b_ih + b_hh
            i = jax.nn.sigmoid(g[:, 0 * H:1 * H])
            f = jax.nn.sigmoid(g[:, 1 * H:2 * H])
            gg = jnp.tanh(g[:, 2 * H:3 * H])
            o = jax.nn.sigmoid(g[:, 3 * H:4 * H])
            c_t = f * c_t + i * gg
            h_t = o * jnp.tanh(c_t)
            hs.append(h_t)
        inp = jnp.stack(hs, axis=1)
    w_out, b_out = out_params
    return jax.nn.sigmoid(inp[:, -1, :] @ w_out.T + b_out)


if __name__ == "__main__":
    key = jax.random.PRNGKey(0)
    k_param, k_x = jax.random.split(key)

    layers, out_params = init_params(k_param)

    B, T = 2, 8
    x = jax.random.normal(k_x, (B, T, IN), jnp.float32)

    y = rnnet_forward(x, layers, out_params)
    y = jax.block_until_ready(y)

    y_ref = ref_forward(x, layers, out_params)
    assert y.shape == (B, 1), y.shape
    assert jnp.allclose(y, y_ref, atol=2e-5, rtol=2e-5), (y, y_ref)

    print("KERNEL_OK")
</pallas_src>

<mosaic_0001>
module attributes {stable_mosaic.version = 11 : i64} {
  func.func @rnnet_kernel(%arg0: memref<64x64xf32, #tpu.memory_space<vmem>>, %arg1: memref<64x256xf32, #tpu.memory_space<vmem>>, %arg2: memref<64x256xf32, #tpu.memory_space<vmem>>, %arg3: memref<1x256xf32, #tpu.memory_space<vmem>>, %arg4: memref<128x256xf32, #tpu.memory_space<vmem>>, %arg5: memref<1x256xf32, #tpu.memory_space<vmem>>, %arg6: memref<128x256xf32, #tpu.memory_space<vmem>>, %arg7: memref<1x256xf32, #tpu.memory_space<vmem>>, %arg8: memref<64x1xf32, #tpu.memory_space<vmem>>, %arg9: memref<1x1xf32, #tpu.memory_space<vmem>>, %arg10: memref<8x1xf32, #tpu.memory_space<vmem>>, %arg11: memref<64x256xf32, #tpu.memory_space<vmem>>) attributes {dimension_semantics = [], scalar_prefetch = 0 : i64, scratch_operands = 1 : i64, tpu.core_type = #tpu.core_type<tc>} {
    %c0 = arith.constant 0 : index
    %c0_0 = arith.constant 0 : index
    %0 = vector.load %arg0[%c0, %c0_0] : memref<64x64xf32, #tpu.memory_space<vmem>>, vector<64x64xf32>
    %c0_1 = arith.constant 0 : index
    %c0_2 = arith.constant 0 : index
    %1 = vector.load %arg1[%c0_1, %c0_2] : memref<64x256xf32, #tpu.memory_space<vmem>>, vector<64x256xf32>
    %cst = arith.constant dense<0.000000e+00> : vector<64x256xf32>
    %2 = tpu.matmul %0, %1, %cst {dimension_numbers = #tpu.dot_dimension_numbers<[1], [0], [0], [1], [0, 0, 1, 1], [], []>} : vector<64x64xf32>, vector<64x256xf32>, vector<64x256xf32> -> vector<64x256xf32>
    %c0_3 = arith.constant 0 : index
    %c0_4 = arith.constant 0 : index
    %3 = vector.load %arg3[%c0_3, %c0_4] : memref<1x256xf32, #tpu.memory_space<vmem>>, vector<1x256xf32>
    %4 = vector.broadcast %3 : vector<1x256xf32> to vector<64x256xf32>
    %5 = arith.addf %2, %4 : vector<64x256xf32>
    %c0_5 = arith.constant 0 : index
    %c0_6 = arith.constant 0 : index
    %6 = vector.load %arg11[%c0_5, %c0_6] : memref<64x256xf32, #tpu.memory_space<vmem>>, vector<64x256xf32>
    tpu.vector_store %arg11[%c0_5, %c0_6], %5 {strides = array<i32>} : memref<64x256xf32, #tpu.memory_space<vmem>>, vector<64x256xf32>,
    %cst_7 = arith.constant 0.000000e+00 : f32
    %7 = vector.broadcast %cst_7 : f32 to vector<8x64xf32>
    %c0_8 = arith.constant 0 : index
    %c0_9 = arith.constant 0 : index
    %8 = vector.load %arg5[%c0_8, %c0_9] : memref<1x256xf32, #tpu.memory_space<vmem>>, vector<1x256xf32>
    %c0_10 = arith.constant 0 : index
    %c0_11 = arith.constant 0 : index
    %9 = vector.load %arg7[%c0_10, %c0_11] : memref<1x256xf32, #tpu.memory_space<vmem>>, vector<1x256xf32>
    %c0_12 = arith.constant 0 : index
    %c0_13 = arith.constant 0 : index
    %10 = vector.load %arg11[%c0_12, %c0_13] : memref<64x256xf32, #tpu.memory_space<vmem>>, vector<8x256xf32>
    %c0_14 = arith.constant 0 : index
    %c0_15 = arith.constant 0 : index
    %11 = vector.load %arg2[%c0_14, %c0_15] : memref<64x256xf32, #tpu.memory_space<vmem>>, vector<64x256xf32>
    %cst_16 = arith.constant dense<0.000000e+00> : vector<8x256xf32>
    %12 = tpu.matmul %7, %11, %cst_16 {dimension_numbers = #tpu.dot_dimension_numbers<[1], [0], [0], [1], [0, 0, 1, 1], [], []>} : vector<8x64xf32>, vector<64x256xf32>, vector<8x256xf32> -> vector<8x256xf32>
    %13 = arith.addf %10, %12 : vector<8x256xf32>
    %14 = vector.extract_strided_slice %13 {offsets = [0, 0], sizes = [8, 192], strides = [1, 1]} : vector<8x256xf32> to vector<8x192xf32>
    %15 = arith.negf %14 : vector<8x192xf32>
    %16 = math.exp %15 : vector<8x192xf32>
    %cst_17 = arith.constant 1.000000e+00 : f32
    %17 = vector.broadcast %cst_17 : f32 to vector<8x192xf32>
    %18 = arith.addf %17, %16 : vector<8x192xf32>
    %19 = arith.divf %17, %18 : vector<8x192xf32>
    %20 = vector.extract_strided_slice %13 {offsets = [0, 192], sizes = [8, 64], strides = [1, 1]} : vector<8x256xf32> to vector<8x64xf32>
    %21 = math.tanh %20 : vector<8x64xf32>
    %22 = vector.extract_strided_slice %19 {offsets = [0, 0], sizes = [8, 64], strides = [1, 1]} : vector<8x192xf32> to vector<8x64xf32>
    %23 = vector.extract_strided_slice %19 {offsets = [0, 64], sizes = [8, 64], strides = [1, 1]} : vector<8x192xf32> to vector<8x64xf32>
    %24 = vector.extract_strided_slice %19 {offsets = [0, 128], sizes = [8, 64], strides = [1, 1]} : vector<8x192xf32> to vector<8x64xf32>
    %25 = arith.mulf %23, %7 : vector<8x64xf32>
    %26 = arith.mulf %22, %21 : vector<8x64xf32>
    %27 = arith.addf %25, %26 : vector<8x64xf32>
    %28 = math.tanh %27 : vector<8x64xf32>
    %29 = arith.mulf %24, %28 : vector<8x64xf32>
    %30 = tpu.concatenate %29, %7 in 1 : vector<8x64xf32>, vector<8x64xf32> -> vector<8x128xf32>
    %c0_18 = arith.constant 0 : index
    %c0_19 = arith.constant 0 : index
    %31 = vector.load %arg4[%c0_18, %c0_19] : memref<128x256xf32, #tpu.memory_space<vmem>>, vector<128x256xf32>
    %cst_20 = arith.constant dense<0.000000e+00> : vector<8x256xf32>
    %32 = tpu.matmul %30, %31, %cst_20 {dimension_numbers = #tpu.dot_dimension_numbers<[1], [0], [0], [1], [0, 0, 1, 1], [], []>} : vector<8x128xf32>, vector<128x256xf32>, vector<8x256xf32> -> vector<8x256xf32>
    %33 = vector.broadcast %8 : vector<1x256xf32> to vector<8x256xf32>
    %34 = arith.addf %32, %33 : vector<8x256xf32>
    %35 = vector.extract_strided_slice %34 {offsets = [0, 0], sizes = [8, 192], strides = [1, 1]} : vector<8x256xf32> to vector<8x192xf32>
    %36 = arith.negf %35 : vector<8x192xf32>
    %37 = math.exp %36 : vector<8x192xf32>
    %cst_21 = arith.constant 1.000000e+00 : f32
    %38 = vector.broadcast %cst_21 : f32 to vector<8x192xf32>
    %39 = arith.addf %38, %37 : vector<8x192xf32>
    %40 = arith.divf %38, %39 : vector<8x192xf32>
    %41 = vector.extract_strided_slice %34 {offsets = [0, 192], sizes = [8, 64], strides = [1, 1]} : vector<8x256xf32> to vector<8x64xf32>
    %42 = math.tanh %41 : vector<8x64xf32>
    %43 = vector.extract_strided_slice %40 {offsets = [0, 0], sizes = [8, 64], strides = [1, 1]} : vector<8x192xf32> to vector<8x64xf32>
    %44 = vector.extract_strided_slice %40 {offsets = [0, 64], sizes = [8, 64], strides = [1, 1]} : vector<8x192xf32> to vector<8x64xf32>
    %45 = vector.extract_strided_slice %40 {offsets = [0, 128], sizes = [8, 64], strides = [1, 1]} : vector<8x192xf32> to vector<8x64xf32>
    %46 = arith.mulf %44, %7 : vector<8x64xf32>
    %47 = arith.mulf %43, %42 : vector<8x64xf32>
    %48 = arith.addf %46, %47 : vector<8x64xf32>
    %49 = math.tanh %48 : vector<8x64xf32>
    %50 = arith.mulf %45, %49 : vector<8x64xf32>
    %51 = tpu.concatenate %50, %7 in 1 : vector<8x64xf32>, vector<8x64xf32> -> vector<8x128xf32>
    %c0_22 = arith.constant 0 : index
    %c0_23 = arith.constant 0 : index
    %52 = vector.load %arg6[%c0_22, %c0_23] : memref<128x256xf32, #tpu.memory_space<vmem>>, vector<128x256xf32>
    %cst_24 = arith.constant dense<0.000000e+00> : vector<8x256xf32>
    %53 = tpu.matmul %51, %52, %cst_24 {dimension_numbers = #tpu.dot_dimension_numbers<[1], [0], [0], [1], [0, 0, 1, 1], [], []>} : vector<8x128xf32>, vector<128x256xf32>, vector<8x256xf32> -> vector<8x256xf32>
    %54 = vector.broadcast %9 : vector<1x256xf32> to vector<8x256xf32>
    %55 = arith.addf %53, %54 : vector<8x256xf32>
    %56 = vector.extract_strided_slice %55 {offsets = [0, 0], sizes = [8, 192], strides = [1, 1]} : vector<8x256xf32> to vector<8x192xf32>
    %57 = arith.negf %56 : vector<8x192xf32>
    %58 = math.exp %57 : vector<8x192xf32>
    %cst_25 = arith.constant 1.000000e+00 : f32
    %59 = vector.broadcast %cst_25 : f32 to vector<8x192xf32>
    %60 = arith.addf %59, %58 : vector<8x192xf32>
    %61 = arith.divf %59, %60 : vector<8x192xf32>
    %62 = vector.extract_strided_slice %55 {offsets = [0, 192], sizes = [8, 64], strides = [1, 1]} : vector<8x256xf32> to vector<8x64xf32>
    %63 = math.tanh %62 : vector<8x64xf32>
    %64 = vector.extract_strided_slice %61 {offsets = [0, 0], sizes = [8, 64], strides = [1, 1]} : vector<8x192xf32> to vector<8x64xf32>
    %65 = vector.extract_strided_slice %61 {offsets = [0, 64], sizes = [8, 64], strides = [1, 1]} : vector<8x192xf32> to vector<8x64xf32>
    %66 = vector.extract_strided_slice %61 {offsets = [0, 128], sizes = [8, 64], strides = [1, 1]} : vector<8x192xf32> to vector<8x64xf32>
    %67 = arith.mulf %65, %7 : vector<8x64xf32>
    %68 = arith.mulf %64, %63 : vector<8x64xf32>
    %69 = arith.addf %67, %68 : vector<8x64xf32>
    %70 = math.tanh %69 : vector<8x64xf32>
    %71 = arith.mulf %66, %70 : vector<8x64xf32>
    %c8 = arith.constant 8 : index
    %c0_26 = arith.constant 0 : index
    %72 = vector.load %arg11[%c8, %c0_26] : memref<64x256xf32, #tpu.memory_space<vmem>>, vector<8x256xf32>
    %c0_27 = arith.constant 0 : index
    %c0_28 = arith.constant 0 : index
    %73 = vector.load %arg2[%c0_27, %c0_28] : memref<64x256xf32, #tpu.memory_space<vmem>>, vector<64x256xf32>
    %cst_29 = arith.constant dense<0.000000e+00> : vector<8x256xf32>
    %74 = tpu.matmul %29, %73, %cst_29 {dimension_numbers = #tpu.dot_dimension_numbers<[1], [0], [0], [1], [0, 0, 1, 1], [], []>} : vector<8x64xf32>, vector<64x256xf32>, vector<8x256xf32> -> vector<8x256xf32>
    %75 = arith.addf %72, %74 : vector<8x256xf32>
    %76 = vector.extract_strided_slice %75 {offsets = [0, 0], sizes = [8, 192], strides = [1, 1]} : vector<8x256xf32> to vector<8x192xf32>
    %77 = arith.negf %76 : vector<8x192xf32>
    %78 = math.exp %77 : vector<8x192xf32>
    %cst_30 = arith.constant 1.000000e+00 : f32
    %79 = vector.broadcast %cst_30 : f32 to vector<8x192xf32>
    %80 = arith.addf %79, %78 : vector<8x192xf32>
    %81 = arith.divf %79, %80 : vector<8x192xf32>
    %82 = vector.extract_strided_slice %75 {offsets = [0, 192], sizes = [8, 64], strides = [1, 1]} : vector<8x256xf32> to vector<8x64xf32>
    %83 = math.tanh %82 : vector<8x64xf32>
    %84 = vector.extract_strided_slice %81 {offsets = [0, 0], sizes = [8, 64], strides = [1, 1]} : vector<8x192xf32> to vector<8x64xf32>
    %85 = vector.extract_strided_slice %81 {offsets = [0, 64], sizes = [8, 64], strides = [1, 1]} : vector<8x192xf32> to vector<8x64xf32>
    %86 = vector.extract_strided_slice %81 {offsets = [0, 128], sizes = [8, 64], strides = [1, 1]} : vector<8x192xf32> to vector<8x64xf32>
    %87 = arith.mulf %85, %27 : vector<8x64xf32>
    %88 = arith.mulf %84, %83 : vector<8x64xf32>
    %89 = arith.addf %87, %88 : vector<8x64xf32>
    %90 = math.tanh %89 : vector<8x64xf32>
    %91 = arith.mulf %86, %90 : vector<8x64xf32>
    %92 = tpu.concatenate %91, %50 in 1 : vector<8x64xf32>, vector<8x64xf32> -> vector<8x128xf32>
    %c0_31 = arith.constant 0 : index
    %c0_32 = arith.constant 0 : index
    %93 = vector.load %arg4[%c0_31, %c0_32] : memref<128x256xf32, #tpu.memory_space<vmem>>, vector<128x256xf32>
    %cst_33 = arith.constant dense<0.000000e+00> : vector<8x256xf32>
    %94 = tpu.matmul %92, %93, %cst_33 {dimension_numbers = #tpu.dot_dimension_numbers<[1], [0], [0], [1], [0, 0, 1, 1], [], []>} : vector<8x128xf32>, vector<128x256xf32>, vector<8x256xf32> -> vector<8x256xf32>
    %95 = vector.broadcast %8 : vector<1x256xf32> to vector<8x256xf32>
    %96 = arith.addf %94, %95 : vector<8x256xf32>
    %97 = vector.extract_strided_slice %96 {offsets = [0, 0], sizes = [8, 192], strides = [1, 1]} : vector<8x256xf32> to vector<8x192xf32>
    %98 = arith.negf %97 : vector<8x192xf32>
    %99 = math.exp %98 : vector<8x192xf32>
    %cst_34 = arith.constant 1.000000e+00 : f32
    %100 = vector.broadcast %cst_34 : f32 to vector<8x192xf32>
    %101 = arith.addf %100, %99 : vector<8x192xf32>
    %102 = arith.divf %100, %101 : vector<8x192xf32>
    %103 = vector.extract_strided_slice %96 {offsets = [0, 192], sizes = [8, 64], strides = [1, 1]} : vector<8x256xf32> to vector<8x64xf32>
    %104 = math.tanh %103 : vector<8x64xf32>
    %105 = vector.extract_strided_slice %102 {offsets = [0, 0], sizes = [8, 64], strides = [1, 1]} : vector<8x192xf32> to vector<8x64xf32>
    %106 = vector.extract_strided_slice %102 {offsets = [0, 64], sizes = [8, 64], strides = [1, 1]} : vector<8x192xf32> to vector<8x64xf32>
    %107 = vector.extract_strided_slice %102 {offsets = [0, 128], sizes = [8, 64], strides = [1, 1]} : vector<8x192xf32> to vector<8x64xf32>
    %108 = arith.mulf %106, %48 : vector<8x64xf32>
    %109 = arith.mulf %105, %104 : vector<8x64xf32>
    %110 = arith.addf %108, %109 : vector<8x64xf32>
    %111 = math.tanh %110 : vector<8x64xf32>
    %112 = arith.mulf %107, %111 : vector<8x64xf32>
    %113 = tpu.concatenate %112, %71 in 1 : vector<8x64xf32>, vector<8x64xf32> -> vector<8x128xf32>
    %c0_35 = arith.constant 0 : index
    %c0_36 = arith.constant 0 : index
    %114 = vector.load %arg6[%c0_35, %c0_36] : memref<128x256xf32, #tpu.memory_space<vmem>>, vector<128x256xf32>
    %cst_37 = arith.constant dense<0.000000e+00> : vector<8x256xf32>
    %115 = tpu.matmul %113, %114, %cst_37 {dimension_numbers = #tpu.dot_dimension_numbers<[1], [0], [0], [1], [0, 0, 1, 1], [], []>} : vector<8x128xf32>, vector<128x256xf32>, vector<8x256xf32> -> vector<8x256xf32>
    %116 = vector.broadcast %9 : vector<1x256xf32> to vector<8x256xf32>
    %117 = arith.addf %115, %116 : vector<8x256xf32>
    %118 = vector.extract_strided_slice %117 {offsets = [0, 0], sizes = [8, 192], strides = [1, 1]} : vector<8x256xf32> to vector<8x192xf32>
    %119 = arith.negf %118 : vector<8x192xf32>
    %120 = math.exp %119 : vector<8x192xf32>
    %cst_38 = arith.constant 1.000000e+00 : f32
    %121 = vector.broadcast %cst_38 : f32 to vector<8x192xf32>
    %122 = arith.addf %121, %120 : vector<8x192xf32>
    %123 = arith.divf %121, %122 : vector<8x192xf32>
    %124 = vector.extract_strided_slice %117 {offsets = [0, 192], sizes = [8, 64], strides = [1, 1]} : vector<8x256xf32> to vector<8x64xf32>
    %125 = math.tanh %124 : vector<8x64xf32>
    %126 = vector.extract_strided_slice %123 {offsets = [0, 0], sizes = [8, 64], strides = [1, 1]} : vector<8x192xf32> to vector<8x64xf32>
    %127 = vector.extract_strided_slice %123 {offsets = [0, 64], sizes = [8, 64], strides = [1, 1]} : vector<8x192xf32> to vector<8x64xf32>
    %128 = vector.extract_strided_slice %123 {offsets = [0, 128], sizes = [8, 64], strides = [1, 1]} : vector<8x192xf32> to vector<8x64xf32>
    %129 = arith.mulf %127, %69 : vector<8x64xf32>
    %130 = arith.mulf %126, %125 : vector<8x64xf32>
    %131 = arith.addf %129, %130 : vector<8x64xf32>
    %132 = math.tanh %131 : vector<8x64xf32>
    %133 = arith.mulf %128, %132 : vector<8x64xf32>
    %c16 = arith.constant 16 : index
    %c0_39 = arith.constant 0 : index
    %134 = vector.load %arg11[%c16, %c0_39] : memref<64x256xf32, #tpu.memory_space<vmem>>, vector<8x256xf32>
    %c0_40 = arith.constant 0 : index
    %c0_41 = arith.constant 0 : index
    %135 = vector.load %arg2[%c0_40, %c0_41] : memref<64x256xf32, #tpu.memory_space<vmem>>, vector<64x256xf32>
    %cst_42 = arith.constant dense<0.000000e+00> : vector<8x256xf32>
    %136 = tpu.matmul %91, %135, %cst_42 {dimension_numbers = #tpu.dot_dimension_numbers<[1], [0], [0], [1], [0, 0, 1, 1], [], []>} : vector<8x64xf32>, vector<64x256xf32>, vector<8x256xf32> -> vector<8x256xf32>
    %137 = arith.addf %134, %136 : vector<8x256xf32>
    %138 = vector.extract_strided_slice %137 {offsets = [0, 0], sizes = [8, 192], strides = [1, 1]} : vector<8x256xf32> to vector<8x192xf32>
    %139 = arith.negf %138 : vector<8x192xf32>
    %140 = math.exp %139 : vector<8x192xf32>
    %cst_43 = arith.constant 1.000000e+00 : f32
    %141 = vector.broadcast %cst_43 : f32 to vector<8x192xf32>
    %142 = arith.addf %141, %140 : vector<8x192xf32>
    %143 = arith.divf %141, %142 : vector<8x192xf32>
    %144 = vector.extract_strided_slice %137 {offsets = [0, 192], sizes = [8, 64], strides = [1, 1]} : vector<8x256xf32> to vector<8x64xf32>
    %145 = math.tanh %144 : vector<8x64xf32>
    %146 = vector.extract_strided_slice %143 {offsets = [0, 0], sizes = [8, 64], strides = [1, 1]} : vector<8x192xf32> to vector<8x64xf32>
    %147 = vector.extract_strided_slice %143 {offsets = [0, 64], sizes = [8, 64], strides = [1, 1]} : vector<8x192xf32> to vector<8x64xf32>
    %148 = vector.extract_strided_slice %143 {offsets = [0, 128], sizes = [8, 64], strides = [1, 1]} : vector<8x192xf32> to vector<8x64xf32>
    %149 = arith.mulf %147, %89 : vector<8x64xf32>
    %150 = arith.mulf %146, %145 : vector<8x64xf32>
    %151 = arith.addf %149, %150 : vector<8x64xf32>
    %152 = math.tanh %151 : vector<8x64xf32>
    %153 = arith.mulf %148, %152 : vector<8x64xf32>
    %154 = tpu.concatenate %153, %112 in 1 : vector<8x64xf32>, vector<8x64xf32> -> vector<8x128xf32>
    %c0_44 = arith.constant 0 : index
    %c0_45 = arith.constant 0 : index
    %155 = vector.load %arg4[%c0_44, %c0_45] : memref<128x256xf32, #tpu.memory_space<vmem>>, vector<128x256xf32>
    %cst_46 = arith.constant dense<0.000000e+00> : vector<8x256xf32>
    %156 = tpu.matmul %154, %155, %cst_46 {dimension_numbers = #tpu.dot_dimension_numbers<[1], [0], [0], [1], [0, 0, 1, 1], [], []>} : vector<8x128xf32>, vector<128x256xf32>, vector<8x256xf32> -> vector<8x256xf32>
    %157 = vector.broadcast %8 : vector<1x256xf32> to vector<8x256xf32>
    %158 = arith.addf %156, %157 : vector<8x256xf32>
    %159 = vector.extract_strided_slice %158 {offsets = [0, 0], sizes = [8, 192], strides = [1, 1]} : vector<8x256xf32> to vector<8x192xf32>
    %160 = arith.negf %159 : vector<8x192xf32>
    %161 = math.exp %160 : vector<8x192xf32>
    %cst_47 = arith.constant 1.000000e+00 : f32
    %162 = vector.broadcast %cst_47 : f32 to vector<8x192xf32>
    %163 = arith.addf %162, %161 : vector<8x192xf32>
    %164 = arith.divf %162, %163 : vector<8x192xf32>
    %165 = vector.extract_strided_slice %158 {offsets = [0, 192], sizes = [8, 64], strides = [1, 1]} : vector<8x256xf32> to vector<8x64xf32>
    %166 = math.tanh %165 : vector<8x64xf32>
    %167 = vector.extract_strided_slice %164 {offsets = [0, 0], sizes = [8, 64], strides = [1, 1]} : vector<8x192xf32> to vector<8x64xf32>
    %168 = vector.extract_strided_slice %164 {offsets = [0, 64], sizes = [8, 64], strides = [1, 1]} : vector<8x192xf32> to vector<8x64xf32>
    %169 = vector.extract_strided_slice %164 {offsets = [0, 128], sizes = [8, 64], strides = [1, 1]} : vector<8x192xf32> to vector<8x64xf32>
    %170 = arith.mulf %168, %110 : vector<8x64xf32>
    %171 = arith.mulf %167, %166 : vector<8x64xf32>
    %172 = arith.addf %170, %171 : vector<8x64xf32>
    %173 = math.tanh %172 : vector<8x64xf32>
    %174 = arith.mulf %169, %173 : vector<8x64xf32>
    %175 = tpu.concatenate %174, %133 in 1 : vector<8x64xf32>, vector<8x64xf32> -> vector<8x128xf32>
    %c0_48 = arith.constant 0 : index
    %c0_49 = arith.constant 0 : index
    %176 = vector.load %arg6[%c0_48, %c0_49] : memref<128x256xf32, #tpu.memory_space<vmem>>, vector<128x256xf32>
    %cst_50 = arith.constant dense<0.000000e+00> : vector<8x256xf32>
    %177 = tpu.matmul %175, %176, %cst_50 {dimension_numbers = #tpu.dot_dimension_numbers<[1], [0], [0], [1], [0, 0, 1, 1], [], []>} : vector<8x128xf32>, vector<128x256xf32>, vector<8x256xf32> -> vector<8x256xf32>
    %178 = vector.broadcast %9 : vector<1x256xf32> to vector<8x256xf32>
    %179 = arith.addf %177, %178 : vector<8x256xf32>
    %180 = vector.extract_strided_slice %179 {offsets = [0, 0], sizes = [8, 192], strides = [1, 1]} : vector<8x256xf32> to vector<8x192xf32>
    %181 = arith.negf %180 : vector<8x192xf32>
    %182 = math.exp %181 : vector<8x192xf32>
    %cst_51 = arith.constant 1.000000e+00 : f32
    %183 = vector.broadcast %cst_51 : f32 to vector<8x192xf32>
    %184 = arith.addf %183, %182 : vector<8x192xf32>
    %185 = arith.divf %183, %184 : vector<8x192xf32>
    %186 = vector.extract_strided_slice %179 {offsets = [0, 192], sizes = [8, 64], strides = [1, 1]} : vector<8x256xf32> to vector<8x64xf32>
    %187 = math.tanh %186 : vector<8x64xf32>
    %188 = vector.extract_strided_slice %185 {offsets = [0, 0], sizes = [8, 64], strides = [1, 1]} : vector<8x192xf32> to vector<8x64xf32>
    %189 = vector.extract_strided_slice %185 {offsets = [0, 64], sizes = [8, 64], strides = [1, 1]} : vector<8x192xf32> to vector<8x64xf32>
    %190 = vector.extract_strided_slice %185 {offsets = [0, 128], sizes = [8, 64], strides = [1, 1]} : vector<8x192xf32> to vector<8x64xf32>
    %191 = arith.mulf %189, %131 : vector<8x64xf32>
    %192 = arith.mulf %188, %187 : vector<8x64xf32>
    %193 = arith.addf %191, %192 : vector<8x64xf32>
    %194 = math.tanh %193 : vector<8x64xf32>
    %195 = arith.mulf %190, %194 : vector<8x64xf32>
    %c24 = arith.constant 24 : index
    %c0_52 = arith.constant 0 : index
    %196 = vector.load %arg11[%c24, %c0_52] : memref<64x256xf32, #tpu.memory_space<vmem>>, vector<8x256xf32>
    %c0_53 = arith.constant 0 : index
    %c0_54 = arith.constant 0 : index
    %197 = vector.load %arg2[%c0_53, %c0_54] : memref<64x256xf32, #tpu.memory_space<vmem>>, vector<64x256xf32>
    %cst_55 = arith.constant dense<0.000000e+00> : vector<8x256xf32>
    %198 = tpu.matmul %153, %197, %cst_55 {dimension_numbers = #tpu.dot_dimension_numbers<[1], [0], [0], [1], [0, 0, 1, 1], [], []>} : vector<8x64xf32>, vector<64x256xf32>, vector<8x256xf32> -> vector<8x256xf32>
    %199 = arith.addf %196, %198 : vector<8x256xf32>
    %200 = vector.extract_strided_slice %199 {offsets = [0, 0], sizes = [8, 192], strides = [1, 1]} : vector<8x256xf32> to vector<8x192xf32>
    %201 = arith.negf %200 : vector<8x192xf32>
    %202 = math.exp %201 : vector<8x192xf32>
    %cst_56 = arith.constant 1.000000e+00 : f32
    %203 = vector.broadcast %cst_56 : f32 to vector<8x192xf32>
    %204 = arith.addf %203, %202 : vector<8x192xf32>
    %205 = arith.divf %203, %204 : vector<8x192xf32>
    %206 = vector.extract_strided_slice %199 {offsets = [0, 192], sizes = [8, 64], strides = [1, 1]} : vector<8x256xf32> to vector<8x64xf32>
    %207 = math.tanh %206 : vector<8x64xf32>
    %208 = vector.extract_strided_slice %205 {offsets = [0, 0], sizes = [8, 64], strides = [1, 1]} : vector<8x192xf32> to vector<8x64xf32>
    %209 = vector.extract_strided_slice %205 {offsets = [0, 64], sizes = [8, 64], strides = [1, 1]} : vector<8x192xf32> to vector<8x64xf32>
    %210 = vector.extract_strided_slice %205 {offsets = [0, 128], sizes = [8, 64], strides = [1, 1]} : vector<8x192xf32> to vector<8x64xf32>
    %211 = arith.mulf %209, %151 : vector<8x64xf32>
    %212 = arith.mulf %208, %207 : vector<8x64xf32>
    %213 = arith.addf %211, %212 : vector<8x64xf32>
    %214 = math.tanh %213 : vector<8x64xf32>
    %215 = arith.mulf %210, %214 : vector<8x64xf32>
    %216 = tpu.concatenate %215, %174 in 1 : vector<8x64xf32>, vector<8x64xf32> -> vector<8x128xf32>
    %c0_57 = arith.constant 0 : index
    %c0_58 = arith.constant 0 : index
    %217 = vector.load %arg4[%c0_57, %c0_58] : memref<128x256xf32, #tpu.memory_space<vmem>>, vector<128x256xf32>
    %cst_59 = arith.constant dense<0.000000e+00> : vector<8x256xf32>
    %218 = tpu.matmul %216, %217, %cst_59 {dimension_numbers = #tpu.dot_dimension_numbers<[1], [0], [0], [1], [0, 0, 1, 1], [], []>} : vector<8x128xf32>, vector<128x256xf32>, vector<8x256xf32> -> vector<8x256xf32>
    %219 = vector.broadcast %8 : vector<1x256xf32> to vector<8x256xf32>
    %220 = arith.addf %218, %219 : vector<8x256xf32>
    %221 = vector.extract_strided_slice %220 {offsets = [0, 0], sizes = [8, 192], strides = [1, 1]} : vector<8x256xf32> to vector<8x192xf32>
    %222 = arith.negf %221 : vector<8x192xf32>
    %223 = math.exp %222 : vector<8x192xf32>
    %cst_60 = arith.constant 1.000000e+00 : f32
    %224 = vector.broadcast %cst_60 : f32 to vector<8x192xf32>
    %225 = arith.addf %224, %223 : vector<8x192xf32>
    %226 = arith.divf %224, %225 : vector<8x192xf32>
    %227 = vector.extract_strided_slice %220 {offsets = [0, 192], sizes = [8, 64], strides = [1, 1]} : vector<8x256xf32> to vector<8x64xf32>
    %228 = math.tanh %227 : vector<8x64xf32>
    %229 = vector.extract_strided_slice %226 {offsets = [0, 0], sizes = [8, 64], strides = [1, 1]} : vector<8x192xf32> to vector<8x64xf32>
    %230 = vector.extract_strided_slice %226 {offsets = [0, 64], sizes = [8, 64], strides = [1, 1]} : vector<8x192xf32> to vector<8x64xf32>
    %231 = vector.extract_strided_slice %226 {offsets = [0, 128], sizes = [8, 64], strides = [1, 1]} : vector<8x192xf32> to vector<8x64xf32>
    %232 = arith.mulf %230, %172 : vector<8x64xf32>
    %233 = arith.mulf %229, %228 : vector<8x64xf32>
    %234 = arith.addf %232, %233 : vector<8x64xf32>
    %235 = math.tanh %234 : vector<8x64xf32>
    %236 = arith.mulf %231, %235 : vector<8x64xf32>
    %237 = tpu.concatenate %236, %195 in 1 : vector<8x64xf32>, vector<8x64xf32> -> vector<8x128xf32>
    %c0_61 = arith.constant 0 : index
    %c0_62 = arith.constant 0 : index
    %238 = vector.load %arg6[%c0_61, %c0_62] : memref<128x256xf32, #tpu.memory_space<vmem>>, vector<128x256xf32>
    %cst_63 = arith.constant dense<0.000000e+00> : vector<8x256xf32>
    %239 = tpu.matmul %237, %238, %cst_63 {dimension_numbers = #tpu.dot_dimension_numbers<[1], [0], [0], [1], [0, 0, 1, 1], [], []>} : vector<8x128xf32>, vector<128x256xf32>, vector<8x256xf32> -> vector<8x256xf32>
    %240 = vector.broadcast %9 : vector<1x256xf32> to vector<8x256xf32>
    %241 = arith.addf %239, %240 : vector<8x256xf32>
    %242 = vector.extract_strided_slice %241 {offsets = [0, 0], sizes = [8, 192], strides = [1, 1]} : vector<8x256xf32> to vector<8x192xf32>
    %243 = arith.negf %242 : vector<8x192xf32>
    %244 = math.exp %243 : vector<8x192xf32>
    %cst_64 = arith.constant 1.000000e+00 : f32
    %245 = vector.broadcast %cst_64 : f32 to vector<8x192xf32>
    %246 = arith.addf %245, %244 : vector<8x192xf32>
    %247 = arith.divf %245, %246 : vector<8x192xf32>
    %248 = vector.extract_strided_slice %241 {offsets = [0, 192], sizes = [8, 64], strides = [1, 1]} : vector<8x256xf32> to vector<8x64xf32>
    %249 = math.tanh %248 : vector<8x64xf32>
    %250 = vector.extract_strided_slice %247 {offsets = [0, 0], sizes = [8, 64], strides = [1, 1]} : vector<8x192xf32> to vector<8x64xf32>
    %251 = vector.extract_strided_slice %247 {offsets = [0, 64], sizes = [8, 64], strides = [1, 1]} : vector<8x192xf32> to vector<8x64xf32>
    %252 = vector.extract_strided_slice %247 {offsets = [0, 128], sizes = [8, 64], strides = [1, 1]} : vector<8x192xf32> to vector<8x64xf32>
    %253 = arith.mulf %251, %193 : vector<8x64xf32>
    %254 = arith.mulf %250, %249 : vector<8x64xf32>
    %255 = arith.addf %253, %254 : vector<8x64xf32>
    %256 = math.tanh %255 : vector<8x64xf32>
    %257 = arith.mulf %252, %256 : vector<8x64xf32>
    %c32 = arith.constant 32 : index
    %c0_65 = arith.constant 0 : index
    %258 = vector.load %arg11[%c32, %c0_65] : memref<64x256xf32, #tpu.memory_space<vmem>>, vector<8x256xf32>
    %c0_66 = arith.constant 0 : index
    %c0_67 = arith.constant 0 : index
    %259 = vector.load %arg2[%c0_66, %c0_67] : memref<64x256xf32, #tpu.memory_space<vmem>>, vector<64x256xf32>
    %cst_68 = arith.constant dense<0.000000e+00> : vector<8x256xf32>
    %260 = tpu.matmul %215, %259, %cst_68 {dimension_numbers = #tpu.dot_dimension_numbers<[1], [0], [0], [1], [0, 0, 1, 1], [], []>} : vector<8x64xf32>, vector<64x256xf32>, vector<8x256xf32> -> vector<8x256xf32>
    %261 = arith.addf %258, %260 : vector<8x256xf32>
    %262 = vector.extract_strided_slice %261 {offsets = [0, 0], sizes = [8, 192], strides = [1, 1]} : vector<8x256xf32> to vector<8x192xf32>
    %263 = arith.negf %262 : vector<8x192xf32>
    %264 = math.exp %263 : vector<8x192xf32>
    %cst_69 = arith.constant 1.000000e+00 : f32
    %265 = vector.broadcast %cst_69 : f32 to vector<8x192xf32>
    %266 = arith.addf %265, %264 : vector<8x192xf32>
    %267 = arith.divf %265, %266 : vector<8x192xf32>
    %268 = vector.extract_strided_slice %261 {offsets = [0, 192], sizes = [8, 64], strides = [1, 1]} : vector<8x256xf32> to vector<8x64xf32>
    %269 = math.tanh %268 : vector<8x64xf32>
    %270 = vector.extract_strided_slice %267 {offsets = [0, 0], sizes = [8, 64], strides = [1, 1]} : vector<8x192xf32> to vector<8x64xf32>
    %271 = vector.extract_strided_slice %267 {offsets = [0, 64], sizes = [8, 64], strides = [1, 1]} : vector<8x192xf32> to vector<8x64xf32>
    %272 = vector.extract_strided_slice %267 {offsets = [0, 128], sizes = [8, 64], strides = [1, 1]} : vector<8x192xf32> to vector<8x64xf32>
    %273 = arith.mulf %271, %213 : vector<8x64xf32>
    %274 = arith.mulf %270, %269 : vector<8x64xf32>
    %275 = arith.addf %273, %274 : vector<8x64xf32>
    %276 = math.tanh %275 : vector<8x64xf32>
    %277 = arith.mulf %272, %276 : vector<8x64xf32>
    %278 = tpu.concatenate %277, %236 in 1 : vector<8x64xf32>, vector<8x64xf32> -> vector<8x128xf32>
    %c0_70 = arith.constant 0 : index
    %c0_71 = arith.constant 0 : index
    %279 = vector.load %arg4[%c0_70, %c0_71] : memref<128x256xf32, #tpu.memory_space<vmem>>, vector<128x256xf32>
    %cst_72 = arith.constant dense<0.000000e+00> : vector<8x256xf32>
    %280 = tpu.matmul %278, %279, %cst_72 {dimension_numbers = #tpu.dot_dimension_numbers<[1], [0], [0], [1], [0, 0, 1, 1], [], []>} : vector<8x128xf32>, vector<128x256xf32>, vector<8x256xf32> -> vector<8x256xf32>
    %281 = vector.broadcast %8 : vector<1x256xf32> to vector<8x256xf32>
    %282 = arith.addf %280, %281 : vector<8x256xf32>
    %283 = vector.extract_strided_slice %282 {offsets = [0, 0], sizes = [8, 192], strides = [1, 1]} : vector<8x256xf32> to vector<8x192xf32>
    %284 = arith.negf %283 : vector<8x192xf32>
    %285 = math.exp %284 : vector<8x192xf32>
    %cst_73 = arith.constant 1.000000e+00 : f32
    %286 = vector.broadcast %cst_73 : f32 to vector<8x192xf32>
    %287 = arith.addf %286, %285 : vector<8x192xf32>
    %288 = arith.divf %286, %287 : vector<8x192xf32>
    %289 = vector.extract_strided_slice %282 {offsets = [0, 192], sizes = [8, 64], strides = [1, 1]} : vector<8x256xf32> to vector<8x64xf32>
    %290 = math.tanh %289 : vector<8x64xf32>
    %291 = vector.extract_strided_slice %288 {offsets = [0, 0], sizes = [8, 64], strides = [1, 1]} : vector<8x192xf32> to vector<8x64xf32>
    %292 = vector.extract_strided_slice %288 {offsets = [0, 64], sizes = [8, 64], strides = [1, 1]} : vector<8x192xf32> to vector<8x64xf32>
    %293 = vector.extract_strided_slice %288 {offsets = [0, 128], sizes = [8, 64], strides = [1, 1]} : vector<8x192xf32> to vector<8x64xf32>
    %294 = arith.mulf %292, %234 : vector<8x64xf32>
    %295 = arith.mulf %291, %290 : vector<8x64xf32>
    %296 = arith.addf %294, %295 : vector<8x64xf32>
    %297 = math.tanh %296 : vector<8x64xf32>
    %298 = arith.mulf %293, %297 : vector<8x64xf32>
    %299 = tpu.concatenate %298, %257 in 1 : vector<8x64xf32>, vector<8x64xf32> -> vector<8x128xf32>
    %c0_74 = arith.constant 0 : index
    %c0_75 = arith.constant 0 : index
    %300 = vector.load %arg6[%c0_74, %c0_75] : memref<128x256xf32, #tpu.memory_space<vmem>>, vector<128x256xf32>
    %cst_76 = arith.constant dense<0.000000e+00> : vector<8x256xf32>
    %301 = tpu.matmul %299, %300, %cst_76 {dimension_numbers = #tpu.dot_dimension_numbers<[1], [0], [0], [1], [0, 0, 1, 1], [], []>} : vector<8x128xf32>, vector<128x256xf32>, vector<8x256xf32> -> vector<8x256xf32>
    %302 = vector.broadcast %9 : vector<1x256xf32> to vector<8x256xf32>
    %303 = arith.addf %301, %302 : vector<8x256xf32>
    %304 = vector.extract_strided_slice %303 {offsets = [0, 0], sizes = [8, 192], strides = [1, 1]} : vector<8x256xf32> to vector<8x192xf32>
    %305 = arith.negf %304 : vector<8x192xf32>
    %306 = math.exp %305 : vector<8x192xf32>
    %cst_77 = arith.constant 1.000000e+00 : f32
    %307 = vector.broadcast %cst_77 : f32 to vector<8x192xf32>
    %308 = arith.addf %307, %306 : vector<8x192xf32>
    %309 = arith.divf %307, %308 : vector<8x192xf32>
    %310 = vector.extract_strided_slice %303 {offsets = [0, 192], sizes = [8, 64], strides = [1, 1]} : vector<8x256xf32> to vector<8x64xf32>
    %311 = math.tanh %310 : vector<8x64xf32>
    %312 = vector.extract_strided_slice %309 {offsets = [0, 0], sizes = [8, 64], strides = [1, 1]} : vector<8x192xf32> to vector<8x64xf32>
    %313 = vector.extract_strided_slice %309 {offsets = [0, 64], sizes = [8, 64], strides = [1, 1]} : vector<8x192xf32> to vector<8x64xf32>
    %314 = vector.extract_strided_slice %309 {offsets = [0, 128], sizes = [8, 64], strides = [1, 1]} : vector<8x192xf32> to vector<8x64xf32>
    %315 = arith.mulf %313, %255 : vector<8x64xf32>
    %316 = arith.mulf %312, %311 : vector<8x64xf32>
    %317 = arith.addf %315, %316 : vector<8x64xf32>
    %318 = math.tanh %317 : vector<8x64xf32>
    %319 = arith.mulf %314, %318 : vector<8x64xf32>
    %c40 = arith.constant 40 : index
    %c0_78 = arith.constant 0 : index
    %320 = vector.load %arg11[%c40, %c0_78] : memref<64x256xf32, #tpu.memory_space<vmem>>, vector<8x256xf32>
    %c0_79 = arith.constant 0 : index
    %c0_80 = arith.constant 0 : index
    %321 = vector.load %arg2[%c0_79, %c0_80] : memref<64x256xf32, #tpu.memory_space<vmem>>, vector<64x256xf32>
    %cst_81 = arith.constant dense<0.000000e+00> : vector<8x256xf32>
    %322 = tpu.matmul %277, %321, %cst_81 {dimension_numbers = #tpu.dot_dimension_numbers<[1], [0], [0], [1], [0, 0, 1, 1], [], []>} : vector<8x64xf32>, vector<64x256xf32>, vector<8x256xf32> -> vector<8x256xf32>
    %323 = arith.addf %320, %322 : vector<8x256xf32>
    %324 = vector.extract_strided_slice %323 {offsets = [0, 0], sizes = [8, 192], strides = [1, 1]} : vector<8x256xf32> to vector<8x192xf32>
    %325 = arith.negf %324 : vector<8x192xf32>
    %326 = math.exp %325 : vector<8x192xf32>
    %cst_82 = arith.constant 1.000000e+00 : f32
    %327 = vector.broadcast %cst_82 : f32 to vector<8x192xf32>
    %328 = arith.addf %327, %326 : vector<8x192xf32>
    %329 = arith.divf %327, %328 : vector<8x192xf32>
    %330 = vector.extract_strided_slice %323 {offsets = [0, 192], sizes = [8, 64], strides = [1, 1]} : vector<8x256xf32> to vector<8x64xf32>
    %331 = math.tanh %330 : vector<8x64xf32>
    %332 = vector.extract_strided_slice %329 {offsets = [0, 0], sizes = [8, 64], strides = [1, 1]} : vector<8x192xf32> to vector<8x64xf32>
    %333 = vector.extract_strided_slice %329 {offsets = [0, 64], sizes = [8, 64], strides = [1, 1]} : vector<8x192xf32> to vector<8x64xf32>
    %334 = vector.extract_strided_slice %329 {offsets = [0, 128], sizes = [8, 64], strides = [1, 1]} : vector<8x192xf32> to vector<8x64xf32>
    %335 = arith.mulf %333, %275 : vector<8x64xf32>
    %336 = arith.mulf %332, %331 : vector<8x64xf32>
    %337 = arith.addf %335, %336 : vector<8x64xf32>
    %338 = math.tanh %337 : vector<8x64xf32>
    %339 = arith.mulf %334, %338 : vector<8x64xf32>
    %340 = tpu.concatenate %339, %298 in 1 : vector<8x64xf32>, vector<8x64xf32> -> vector<8x128xf32>
    %c0_83 = arith.constant 0 : index
    %c0_84 = arith.constant 0 : index
    %341 = vector.load %arg4[%c0_83, %c0_84] : memref<128x256xf32, #tpu.memory_space<vmem>>, vector<128x256xf32>
    %cst_85 = arith.constant dense<0.000000e+00> : vector<8x256xf32>
    %342 = tpu.matmul %340, %341, %cst_85 {dimension_numbers = #tpu.dot_dimension_numbers<[1], [0], [0], [1], [0, 0, 1, 1], [], []>} : vector<8x128xf32>, vector<128x256xf32>, vector<8x256xf32> -> vector<8x256xf32>
    %343 = vector.broadcast %8 : vector<1x256xf32> to vector<8x256xf32>
    %344 = arith.addf %342, %343 : vector<8x256xf32>
    %345 = vector.extract_strided_slice %344 {offsets = [0, 0], sizes = [8, 192], strides = [1, 1]} : vector<8x256xf32> to vector<8x192xf32>
    %346 = arith.negf %345 : vector<8x192xf32>
    %347 = math.exp %346 : vector<8x192xf32>
    %cst_86 = arith.constant 1.000000e+00 : f32
    %348 = vector.broadcast %cst_86 : f32 to vector<8x192xf32>
    %349 = arith.addf %348, %347 : vector<8x192xf32>
    %350 = arith.divf %348, %349 : vector<8x192xf32>
    %351 = vector.extract_strided_slice %344 {offsets = [0, 192], sizes = [8, 64], strides = [1, 1]} : vector<8x256xf32> to vector<8x64xf32>
    %352 = math.tanh %351 : vector<8x64xf32>
    %353 = vector.extract_strided_slice %350 {offsets = [0, 0], sizes = [8, 64], strides = [1, 1]} : vector<8x192xf32> to vector<8x64xf32>
    %354 = vector.extract_strided_slice %350 {offsets = [0, 64], sizes = [8, 64], strides = [1, 1]} : vector<8x192xf32> to vector<8x64xf32>
    %355 = vector.extract_strided_slice %350 {offsets = [0, 128], sizes = [8, 64], strides = [1, 1]} : vector<8x192xf32> to vector<8x64xf32>
    %356 = arith.mulf %354, %296 : vector<8x64xf32>
    %357 = arith.mulf %353, %352 : vector<8x64xf32>
    %358 = arith.addf %356, %357 : vector<8x64xf32>
    %359 = math.tanh %358 : vector<8x64xf32>
    %360 = arith.mulf %355, %359 : vector<8x64xf32>
    %361 = tpu.concatenate %360, %319 in 1 : vector<8x64xf32>, vector<8x64xf32> -> vector<8x128xf32>
    %c0_87 = arith.constant 0 : index
    %c0_88 = arith.constant 0 : index
    %362 = vector.load %arg6[%c0_87, %c0_88] : memref<128x256xf32, #tpu.memory_space<vmem>>, vector<128x256xf32>
    %cst_89 = arith.constant dense<0.000000e+00> : vector<8x256xf32>
    %363 = tpu.matmul %361, %362, %cst_89 {dimension_numbers = #tpu.dot_dimension_numbers<[1], [0], [0], [1], [0, 0, 1, 1], [], []>} : vector<8x128xf32>, vector<128x256xf32>, vector<8x256xf32> -> vector<8x256xf32>
    %364 = vector.broadcast %9 : vector<1x256xf32> to vector<8x256xf32>
    %365 = arith.addf %363, %364 : vector<8x256xf32>
    %366 = vector.extract_strided_slice %365 {offsets = [0, 0], sizes = [8, 192], strides = [1, 1]} : vector<8x256xf32> to vector<8x192xf32>
    %367 = arith.negf %366 : vector<8x192xf32>
    %368 = math.exp %367 : vector<8x192xf32>
    %cst_90 = arith.constant 1.000000e+00 : f32
    %369 = vector.broadcast %cst_90 : f32 to vector<8x192xf32>
    %370 = arith.addf %369, %368 : vector<8x192xf32>
    %371 = arith.divf %369, %370 : vector<8x192xf32>
    %372 = vector.extract_strided_slice %365 {offsets = [0, 192], sizes = [8, 64], strides = [1, 1]} : vector<8x256xf32> to vector<8x64xf32>
    %373 = math.tanh %372 : vector<8x64xf32>
    %374 = vector.extract_strided_slice %371 {offsets = [0, 0], sizes = [8, 64], strides = [1, 1]} : vector<8x192xf32> to vector<8x64xf32>
    %375 = vector.extract_strided_slice %371 {offsets = [0, 64], sizes = [8, 64], strides = [1, 1]} : vector<8x192xf32> to vector<8x64xf32>
    %376 = vector.extract_strided_slice %371 {offsets = [0, 128], sizes = [8, 64], strides = [1, 1]} : vector<8x192xf32> to vector<8x64xf32>
    %377 = arith.mulf %375, %317 : vector<8x64xf32>
    %378 = arith.mulf %374, %373 : vector<8x64xf32>
    %379 = arith.addf %377, %378 : vector<8x64xf32>
    %380 = math.tanh %379 : vector<8x64xf32>
    %381 = arith.mulf %376, %380 : vector<8x64xf32>
    %c48 = arith.constant 48 : index
    %c0_91 = arith.constant 0 : index
    %382 = vector.load %arg11[%c48, %c0_91] : memref<64x256xf32, #tpu.memory_space<vmem>>, vector<8x256xf32>
    %c0_92 = arith.constant 0 : index
    %c0_93 = arith.constant 0 : index
    %383 = vector.load %arg2[%c0_92, %c0_93] : memref<64x256xf32, #tpu.memory_space<vmem>>, vector<64x256xf32>
    %cst_94 = arith.constant dense<0.000000e+00> : vector<8x256xf32>
    %384 = tpu.matmul %339, %383, %cst_94 {dimension_numbers = #tpu.dot_dimension_numbers<[1], [0], [0], [1], [0, 0, 1, 1], [], []>} : vector<8x64xf32>, vector<64x256xf32>, vector<8x256xf32> -> vector<8x256xf32>
    %385 = arith.addf %382, %384 : vector<8x256xf32>
    %386 = vector.extract_strided_slice %385 {offsets = [0, 0], sizes = [8, 192], strides = [1, 1]} : vector<8x256xf32> to vector<8x192xf32>
    %387 = arith.negf %386 : vector<8x192xf32>
    %388 = math.exp %387 : vector<8x192xf32>
    %cst_95 = arith.constant 1.000000e+00 : f32
    %389 = vector.broadcast %cst_95 : f32 to vector<8x192xf32>
    %390 = arith.addf %389, %388 : vector<8x192xf32>
    %391 = arith.divf %389, %390 : vector<8x192xf32>
    %392 = vector.extract_strided_slice %385 {offsets = [0, 192], sizes = [8, 64], strides = [1, 1]} : vector<8x256xf32> to vector<8x64xf32>
    %393 = math.tanh %392 : vector<8x64xf32>
    %394 = vector.extract_strided_slice %391 {offsets = [0, 0], sizes = [8, 64], strides = [1, 1]} : vector<8x192xf32> to vector<8x64xf32>
    %395 = vector.extract_strided_slice %391 {offsets = [0, 64], sizes = [8, 64], strides = [1, 1]} : vector<8x192xf32> to vector<8x64xf32>
    %396 = vector.extract_strided_slice %391 {offsets = [0, 128], sizes = [8, 64], strides = [1, 1]} : vector<8x192xf32> to vector<8x64xf32>
    %397 = arith.mulf %395, %337 : vector<8x64xf32>
    %398 = arith.mulf %394, %393 : vector<8x64xf32>
    %399 = arith.addf %397, %398 : vector<8x64xf32>
    %400 = math.tanh %399 : vector<8x64xf32>
    %401 = arith.mulf %396, %400 : vector<8x64xf32>
    %402 = tpu.concatenate %401, %360 in 1 : vector<8x64xf32>, vector<8x64xf32> -> vector<8x128xf32>
    %c0_96 = arith.constant 0 : index
    %c0_97 = arith.constant 0 : index
    %403 = vector.load %arg4[%c0_96, %c0_97] : memref<128x256xf32, #tpu.memory_space<vmem>>, vector<128x256xf32>
    %cst_98 = arith.constant dense<0.000000e+00> : vector<8x256xf32>
    %404 = tpu.matmul %402, %403, %cst_98 {dimension_numbers = #tpu.dot_dimension_numbers<[1], [0], [0], [1], [0, 0, 1, 1], [], []>} : vector<8x128xf32>, vector<128x256xf32>, vector<8x256xf32> -> vector<8x256xf32>
    %405 = vector.broadcast %8 : vector<1x256xf32> to vector<8x256xf32>
    %406 = arith.addf %404, %405 : vector<8x256xf32>
    %407 = vector.extract_strided_slice %406 {offsets = [0, 0], sizes = [8, 192], strides = [1, 1]} : vector<8x256xf32> to vector<8x192xf32>
    %408 = arith.negf %407 : vector<8x192xf32>
    %409 = math.exp %408 : vector<8x192xf32>
    %cst_99 = arith.constant 1.000000e+00 : f32
    %410 = vector.broadcast %cst_99 : f32 to vector<8x192xf32>
    %411 = arith.addf %410, %409 : vector<8x192xf32>
    %412 = arith.divf %410, %411 : vector<8x192xf32>
    %413 = vector.extract_strided_slice %406 {offsets = [0, 192], sizes = [8, 64], strides = [1, 1]} : vector<8x256xf32> to vector<8x64xf32>
    %414 = math.tanh %413 : vector<8x64xf32>
    %415 = vector.extract_strided_slice %412 {offsets = [0, 0], sizes = [8, 64], strides = [1, 1]} : vector<8x192xf32> to vector<8x64xf32>
    %416 = vector.extract_strided_slice %412 {offsets = [0, 64], sizes = [8, 64], strides = [1, 1]} : vector<8x192xf32> to vector<8x64xf32>
    %417 = vector.extract_strided_slice %412 {offsets = [0, 128], sizes = [8, 64], strides = [1, 1]} : vector<8x192xf32> to vector<8x64xf32>
    %418 = arith.mulf %416, %358 : vector<8x64xf32>
    %419 = arith.mulf %415, %414 : vector<8x64xf32>
    %420 = arith.addf %418, %419 : vector<8x64xf32>
    %421 = math.tanh %420 : vector<8x64xf32>
    %422 = arith.mulf %417, %421 : vector<8x64xf32>
    %423 = tpu.concatenate %422, %381 in 1 : vector<8x64xf32>, vector<8x64xf32> -> vector<8x128xf32>
    %c0_100 = arith.constant 0 : index
    %c0_101 = arith.constant 0 : index
    %424 = vector.load %arg6[%c0_100, %c0_101] : memref<128x256xf32, #tpu.memory_space<vmem>>, vector<128x256xf32>
    %cst_102 = arith.constant dense<0.000000e+00> : vector<8x256xf32>
    %425 = tpu.matmul %423, %424, %cst_102 {dimension_numbers = #tpu.dot_dimension_numbers<[1], [0], [0], [1], [0, 0, 1, 1], [], []>} : vector<8x128xf32>, vector<128x256xf32>, vector<8x256xf32> -> vector<8x256xf32>
    %426 = vector.broadcast %9 : vector<1x256xf32> to vector<8x256xf32>
    %427 = arith.addf %425, %426 : vector<8x256xf32>
    %428 = vector.extract_strided_slice %427 {offsets = [0, 0], sizes = [8, 192], strides = [1, 1]} : vector<8x256xf32> to vector<8x192xf32>
    %429 = arith.negf %428 : vector<8x192xf32>
    %430 = math.exp %429 : vector<8x192xf32>
    %cst_103 = arith.constant 1.000000e+00 : f32
    %431 = vector.broadcast %cst_103 : f32 to vector<8x192xf32>
    %432 = arith.addf %431, %430 : vector<8x192xf32>
    %433 = arith.divf %431, %432 : vector<8x192xf32>
    %434 = vector.extract_strided_slice %427 {offsets = [0, 192], sizes = [8, 64], strides = [1, 1]} : vector<8x256xf32> to vector<8x64xf32>
    %435 = math.tanh %434 : vector<8x64xf32>
    %436 = vector.extract_strided_slice %433 {offsets = [0, 0], sizes = [8, 64], strides = [1, 1]} : vector<8x192xf32> to vector<8x64xf32>
    %437 = vector.extract_strided_slice %433 {offsets = [0, 64], sizes = [8, 64], strides = [1, 1]} : vector<8x192xf32> to vector<8x64xf32>
    %438 = vector.extract_strided_slice %433 {offsets = [0, 128], sizes = [8, 64], strides = [1, 1]} : vector<8x192xf32> to vector<8x64xf32>
    %439 = arith.mulf %437, %379 : vector<8x64xf32>
    %440 = arith.mulf %436, %435 : vector<8x64xf32>
    %441 = arith.addf %439, %440 : vector<8x64xf32>
    %442 = math.tanh %441 : vector<8x64xf32>
    %443 = arith.mulf %438, %442 : vector<8x64xf32>
    %c56 = arith.constant 56 : index
    %c0_104 = arith.constant 0 : index
    %444 = vector.load %arg11[%c56, %c0_104] : memref<64x256xf32, #tpu.memory_space<vmem>>, vector<8x256xf32>
    %c0_105 = arith.constant 0 : index
    %c0_106 = arith.constant 0 : index
    %445 = vector.load %arg2[%c0_105, %c0_106] : memref<64x256xf32, #tpu.memory_space<vmem>>, vector<64x256xf32>
    %cst_107 = arith.constant dense<0.000000e+00> : vector<8x256xf32>
    %446 = tpu.matmul %401, %445, %cst_107 {dimension_numbers = #tpu.dot_dimension_numbers<[1], [0], [0], [1], [0, 0, 1, 1], [], []>} : vector<8x64xf32>, vector<64x256xf32>, vector<8x256xf32> -> vector<8x256xf32>
    %447 = arith.addf %444, %446 : vector<8x256xf32>
    %448 = vector.extract_strided_slice %447 {offsets = [0, 0], sizes = [8, 192], strides = [1, 1]} : vector<8x256xf32> to vector<8x192xf32>
    %449 = arith.negf %448 : vector<8x192xf32>
    %450 = math.exp %449 : vector<8x192xf32>
    %cst_108 = arith.constant 1.000000e+00 : f32
    %451 = vector.broadcast %cst_108 : f32 to vector<8x192xf32>
    %452 = arith.addf %451, %450 : vector<8x192xf32>
    %453 = arith.divf %451, %452 : vector<8x192xf32>
    %454 = vector.extract_strided_slice %447 {offsets = [0, 192], sizes = [8, 64], strides = [1, 1]} : vector<8x256xf32> to vector<8x64xf32>
    %455 = math.tanh %454 : vector<8x64xf32>
    %456 = vector.extract_strided_slice %453 {offsets = [0, 0], sizes = [8, 64], strides = [1, 1]} : vector<8x192xf32> to vector<8x64xf32>
    %457 = vector.extract_strided_slice %453 {offsets = [0, 64], sizes = [8, 64], strides = [1, 1]} : vector<8x192xf32> to vector<8x64xf32>
    %458 = vector.extract_strided_slice %453 {offsets = [0, 128], sizes = [8, 64], strides = [1, 1]} : vector<8x192xf32> to vector<8x64xf32>
    %459 = arith.mulf %457, %399 : vector<8x64xf32>
    %460 = arith.mulf %456, %455 : vector<8x64xf32>
    %461 = arith.addf %459, %460 : vector<8x64xf32>
    %462 = math.tanh %461 : vector<8x64xf32>
    %463 = arith.mulf %458, %462 : vector<8x64xf32>
    %464 = tpu.concatenate %463, %422 in 1 : vector<8x64xf32>, vector<8x64xf32> -> vector<8x128xf32>
    %c0_109 = arith.constant 0 : index
    %c0_110 = arith.constant 0 : index
    %465 = vector.load %arg4[%c0_109, %c0_110] : memref<128x256xf32, #tpu.memory_space<vmem>>, vector<128x256xf32>
    %cst_111 = arith.constant dense<0.000000e+00> : vector<8x256xf32>
    %466 = tpu.matmul %464, %465, %cst_111 {dimension_numbers = #tpu.dot_dimension_numbers<[1], [0], [0], [1], [0, 0, 1, 1], [], []>} : vector<8x128xf32>, vector<128x256xf32>, vector<8x256xf32> -> vector<8x256xf32>
    %467 = vector.broadcast %8 : vector<1x256xf32> to vector<8x256xf32>
    %468 = arith.addf %466, %467 : vector<8x256xf32>
    %469 = vector.extract_strided_slice %468 {offsets = [0, 0], sizes = [8, 192], strides = [1, 1]} : vector<8x256xf32> to vector<8x192xf32>
    %470 = arith.negf %469 : vector<8x192xf32>
    %471 = math.exp %470 : vector<8x192xf32>
    %cst_112 = arith.constant 1.000000e+00 : f32
    %472 = vector.broadcast %cst_112 : f32 to vector<8x192xf32>
    %473 = arith.addf %472, %471 : vector<8x192xf32>
    %474 = arith.divf %472, %473 : vector<8x192xf32>
    %475 = vector.extract_strided_slice %468 {offsets = [0, 192], sizes = [8, 64], strides = [1, 1]} : vector<8x256xf32> to vector<8x64xf32>
    %476 = math.tanh %475 : vector<8x64xf32>
    %477 = vector.extract_strided_slice %474 {offsets = [0, 0], sizes = [8, 64], strides = [1, 1]} : vector<8x192xf32> to vector<8x64xf32>
    %478 = vector.extract_strided_slice %474 {offsets = [0, 64], sizes = [8, 64], strides = [1, 1]} : vector<8x192xf32> to vector<8x64xf32>
    %479 = vector.extract_strided_slice %474 {offsets = [0, 128], sizes = [8, 64], strides = [1, 1]} : vector<8x192xf32> to vector<8x64xf32>
    %480 = arith.mulf %478, %420 : vector<8x64xf32>
    %481 = arith.mulf %477, %476 : vector<8x64xf32>
    %482 = arith.addf %480, %481 : vector<8x64xf32>
    %483 = math.tanh %482 : vector<8x64xf32>
    %484 = arith.mulf %479, %483 : vector<8x64xf32>
    %485 = tpu.concatenate %484, %443 in 1 : vector<8x64xf32>, vector<8x64xf32> -> vector<8x128xf32>
    %c0_113 = arith.constant 0 : index
    %c0_114 = arith.constant 0 : index
    %486 = vector.load %arg6[%c0_113, %c0_114] : memref<128x256xf32, #tpu.memory_space<vmem>>, vector<128x256xf32>
    %cst_115 = arith.constant dense<0.000000e+00> : vector<8x256xf32>
    %487 = tpu.matmul %485, %486, %cst_115 {dimension_numbers = #tpu.dot_dimension_numbers<[1], [0], [0], [1], [0, 0, 1, 1], [], []>} : vector<8x128xf32>, vector<128x256xf32>, vector<8x256xf32> -> vector<8x256xf32>
    %488 = vector.broadcast %9 : vector<1x256xf32> to vector<8x256xf32>
    %489 = arith.addf %487, %488 : vector<8x256xf32>
    %490 = vector.extract_strided_slice %489 {offsets = [0, 0], sizes = [8, 192], strides = [1, 1]} : vector<8x256xf32> to vector<8x192xf32>
    %491 = arith.negf %490 : vector<8x192xf32>
    %492 = math.exp %491 : vector<8x192xf32>
    %cst_116 = arith.constant 1.000000e+00 : f32
    %493 = vector.broadcast %cst_116 : f32 to vector<8x192xf32>
    %494 = arith.addf %493, %492 : vector<8x192xf32>
    %495 = arith.divf %493, %494 : vector<8x192xf32>
    %496 = vector.extract_strided_slice %489 {offsets = [0, 192], sizes = [8, 64], strides = [1, 1]} : vector<8x256xf32> to vector<8x64xf32>
    %497 = math.tanh %496 : vector<8x64xf32>
    %498 = vector.extract_strided_slice %495 {offsets = [0, 0], sizes = [8, 64], strides = [1, 1]} : vector<8x192xf32> to vector<8x64xf32>
    %499 = vector.extract_strided_slice %495 {offsets = [0, 64], sizes = [8, 64], strides = [1, 1]} : vector<8x192xf32> to vector<8x64xf32>
    %500 = vector.extract_strided_slice %495 {offsets = [0, 128], sizes = [8, 64], strides = [1, 1]} : vector<8x192xf32> to vector<8x64xf32>
    %501 = arith.mulf %499, %441 : vector<8x64xf32>
    %502 = arith.mulf %498, %497 : vector<8x64xf32>
    %503 = arith.addf %501, %502 : vector<8x64xf32>
    %504 = math.tanh %503 : vector<8x64xf32>
    %505 = arith.mulf %500, %504 : vector<8x64xf32>
    %c0_117 = arith.constant 0 : index
    %c0_118 = arith.constant 0 : index
    %506 = vector.load %arg8[%c0_117, %c0_118] : memref<64x1xf32, #tpu.memory_space<vmem>>, vector<64x1xf32>
    %cst_119 = arith.constant dense<0.000000e+00> : vector<8x1xf32>
    %507 = tpu.matmul %505, %506, %cst_119 {dimension_numbers = #tpu.dot_dimension_numbers<[1], [0], [0], [1], [0, 0, 1, 1], [], []>} : vector<8x64xf32>, vector<64x1xf32>, vector<8x1xf32> -> vector<8x1xf32>
    %c0_120 = arith.constant 0 : index
    %c0_121 = arith.constant 0 : index
    %508 = vector.load %arg9[%c0_120, %c0_121] : memref<1x1xf32, #tpu.memory_space<vmem>>, vector<1x1xf32>
    %509 = vector.broadcast %508 : vector<1x1xf32> to vector<8x1xf32>
    %510 = arith.addf %507, %509 : vector<8x1xf32>
    %511 = arith.negf %510 : vector<8x1xf32>
    %512 = math.exp %511 : vector<8x1xf32>
    %cst_122 = arith.constant 1.000000e+00 : f32
    %513 = vector.broadcast %cst_122 : f32 to vector<8x1xf32>
    %514 = arith.addf %513, %512 : vector<8x1xf32>
    %515 = arith.divf %513, %514 : vector<8x1xf32>
    %c0_123 = arith.constant 0 : index
    %c0_124 = arith.constant 0 : index
    %516 = vector.load %arg10[%c0_123, %c0_124] : memref<8x1xf32, #tpu.memory_space<vmem>>, vector<8x1xf32>
    tpu.vector_store %arg10[%c0_123, %c0_124], %515 {strides = array<i32>} : memref<8x1xf32, #tpu.memory_space<vmem>>, vector<8x1xf32>,
    return
  }
}

</mosaic_0001>

<llo_original>
// kernel: tpu_custom_call.1
$region0: #{tpu_custom_call.1}
  #allocation0 [shape = 'u32[]', space=smem, size = 0x4, offset = 0x4, fixed_abs, tag = 'smem constant byte address 0x4 - core index']
  #allocation1 [shape = 'u32[72,128]{1,0:T(1,128)}', space=vmem, size = 0x9000, scoped, tag = 'internal scratch']
  #allocation2 [shape = 'f32[64,256]{1,0:T(8,128)}', space=vmem, size = 0x10000, scoped, tag = 'scratch operand']
  #allocation3 [shape = 'f32[1,1]{1,0:T(1,128)S(1)}', space=vmem, size = 0x200, scoped, tag = 'scoped memory for tpu_custom_call.1']
  %s0 = inlined_call_operand.vmem [shape: f32[64,64], index: 0, kind: input, shape index: {}]
  %s1 = inlined_call_operand.hbm [shape: f32[64,256], index: 1, kind: input, shape index: {}]
  %s2 = inlined_call_operand.hbm [shape: f32[64,256], index: 2, kind: input, shape index: {}]
  %s3 = inlined_call_operand.vmem [shape: f32[1,256], index: 3, kind: input, shape index: {}]
  %s4 = inlined_call_operand.hbm [shape: f32[128,256], index: 4, kind: input, shape index: {}]
  %s5 = inlined_call_operand.vmem [shape: f32[1,256], index: 5, kind: input, shape index: {}]
  %s6 = inlined_call_operand.hbm [shape: f32[128,256], index: 6, kind: input, shape index: {}]
  %s7 = inlined_call_operand.vmem [shape: f32[1,256], index: 7, kind: input, shape index: {}]
  %s8 = inlined_call_operand.vmem [shape: f32[64,1], index: 8, kind: input, shape index: {}]
  %s9 = inlined_call_operand.<no memory space> [shape: f32[1,1], index: 9, kind: input, shape index: {}]
  %s10 = inlined_call_operand.vmem [shape: f32[8,1], index: 10, kind: output, shape index: {}]
  %s11 = sld [smem:[#allocation0]]
  $region66: #{tpu_custom_call.1} parent=0
    _
  %s13 = ssub.s32 1, %s11
  %s14 = scalar_select 0, %s13, %s11
  %v15 = vstv %s9
  %16 = vst [vmem:[#allocation3] sm:$0x1] %v15
  $region1: #{tpu_custom_call.1} parent=0
    #allocation4 [shape = 'u8[65536]{0}', space=vmem, size = 0x10000, scoped, tag = 'input window, operand 1, single buffered']
    #allocation5 [shape = 's32[1]{0}', space=sflag, size = 0x4, scoped, tag = 'scoped memory for tpu_custom_call.1']
    #allocation6 [shape = 'u8[65536]{0}', space=vmem, size = 0x10000, scoped, tag = 'input window, operand 2, single buffered']
    #allocation7 [shape = 's32[1]{0}', space=sflag, size = 0x4, scoped, tag = 'scoped memory for tpu_custom_call.1']
    #allocation8 [shape = 'u8[131072]{0}', space=vmem, size = 0x20000, scoped, tag = 'input window, operand 4, single buffered']
    #allocation9 [shape = 'u8[131072]{0}', space=vmem, size = 0x20000, scoped, tag = 'input window, operand 6, single buffered']
    #allocation10 [shape = 's32[1]{0}', space=sflag, size = 0x4, scoped, tag = 'scoped memory for tpu_custom_call.1']
    %17 = vsyncpa [#allocation5], 0
    %18 = vsyncpa [#allocation7], 0
    %19 = vsyncpa [#allocation10], 0
    // Predicated region
    $region2: #{tpu_custom_call.1} parent=1 // pred_check
      _
    $region3: #{tpu_custom_call.1} parent=1 // pred_check_branch
      %21 = sbr.rel (0) target = $region5
    $region4: #{tpu_custom_call.1} parent=1 // pred_region
      _
    $region5: #{tpu_custom_call.1} parent=1 // pred_fallthru
      _
    // Predicated region
    $region6: #{tpu_custom_call.1} parent=1 // pred_check
      _
    $region7: #{tpu_custom_call.1} parent=1 // pred_check_branch
      %23 = sbr.rel (0) target = $region9
    $region8: #{tpu_custom_call.1} parent=1 // pred_region
      %25 = vsyncadd [#allocation5], 0
      %s26 = sshll.u32 %s1, 4
      %s27 = int_to_ptr.hbm [resolvable:$true] %s26
      %s28 = sshll.u32 [#allocation4], 4
      %s29 = int_to_ptr.vmem [resolvable:$true] %s28
      %34 = dma.hbm_to_vmem [thread:$0]  %s27, 2048, %s29, [#allocation5], 256, 256, 16
    $region9: #{tpu_custom_call.1} parent=1 // pred_fallthru
      _
    // Predicated region
    $region10: #{tpu_custom_call.1} parent=1 // pred_check
      _
    $region11: #{tpu_custom_call.1} parent=1 // pred_check_branch
      %36 = sbr.rel (0) target = $region13
    $region12: #{tpu_custom_call.1} parent=1 // pred_region
      %38 = vsyncadd [#allocation7], 0
      %s39 = sshll.u32 %s2, 4
      %s40 = int_to_ptr.hbm [resolvable:$true] %s39
      %s41 = sshll.u32 [#allocation6], 4
      %s42 = int_to_ptr.vmem [resolvable:$true] %s41
      %47 = dma.hbm_to_vmem [thread:$0]  %s40, 2048, %s42, [#allocation7], 256, 256, 16
    $region13: #{tpu_custom_call.1} parent=1 // pred_fallthru
      _
    // Predicated region
    $region14: #{tpu_custom_call.1} parent=1 // pred_check
      _
    $region15: #{tpu_custom_call.1} parent=1 // pred_check_branch
      %49 = sbr.rel (0) target = $region17
    $region16: #{tpu_custom_call.1} parent=1 // pred_region
      _
    $region17: #{tpu_custom_call.1} parent=1 // pred_fallthru
      _
    // Predicated region
    $region18: #{tpu_custom_call.1} parent=1 // pred_check
      _
    $region19: #{tpu_custom_call.1} parent=1 // pred_check_branch
      %51 = sbr.rel (0) target = $region21
    $region20: #{tpu_custom_call.1} parent=1 // pred_region
      %53 = vsyncadd [#allocation7], 0
      %s54 = sshll.u32 %s4, 4
      %s55 = int_to_ptr.hbm [resolvable:$true] %s54
      %s56 = sshll.u32 [#allocation8], 4
      %s57 = int_to_ptr.vmem [resolvable:$true] %s56
      %62 = dma.hbm_to_vmem [thread:$0]  %s55, 4096, %s57, [#allocation7], 256, 256, 16
    $region21: #{tpu_custom_call.1} parent=1 // pred_fallthru
      _
    // Predicated region
    $region22: #{tpu_custom_call.1} parent=1 // pred_check
      _
    $region23: #{tpu_custom_call.1} parent=1 // pred_check_branch
      %64 = sbr.rel (0) target = $region25
    $region24: #{tpu_custom_call.1} parent=1 // pred_region
      _
    $region25: #{tpu_custom_call.1} parent=1 // pred_fallthru
      _
    // Predicated region
    $region26: #{tpu_custom_call.1} parent=1 // pred_check
      _
    $region27: #{tpu_custom_call.1} parent=1 // pred_check_branch
      %66 = sbr.rel (0) target = $region29
    $region28: #{tpu_custom_call.1} parent=1 // pred_region
      %68 = vsyncadd [#allocation10], 0
      %s69 = sshll.u32 %s6, 4
      %s70 = int_to_ptr.hbm [resolvable:$true] %s69
      %s71 = sshll.u32 [#allocation9], 4
      %s72 = int_to_ptr.vmem [resolvable:$true] %s71
      %77 = dma.hbm_to_vmem [thread:$0]  %s70, 4096, %s72, [#allocation10], 256, 256, 16
    $region29: #{tpu_custom_call.1} parent=1 // pred_fallthru
      _
    // Predicated region
    $region30: #{tpu_custom_call.1} parent=1 // pred_check
      _
    $region31: #{tpu_custom_call.1} parent=1 // pred_check_branch
      %79 = sbr.rel (0) target = $region33
    $region32: #{tpu_custom_call.1} parent=1 // pred_region
      _
    $region33: #{tpu_custom_call.1} parent=1 // pred_fallthru
      _
    // Predicated region
    $region34: #{tpu_custom_call.1} parent=1 // pred_check
      _
    $region35: #{tpu_custom_call.1} parent=1 // pred_check_branch
      %81 = sbr.rel (0) target = $region37
    $region36: #{tpu_custom_call.1} parent=1 // pred_region
      _
    $region37: #{tpu_custom_call.1} parent=1 // pred_fallthru
      _
    // Predicated region
    $region38: #{tpu_custom_call.1} parent=1 // pred_check
      _
    $region39: #{tpu_custom_call.1} parent=1 // pred_check_branch
      %83 = sbr.rel (0) target = $region41
    $region40: #{tpu_custom_call.1} parent=1 // pred_region
      _
    $region41: #{tpu_custom_call.1} parent=1 // pred_fallthru
      _
    // Predicated region
    $region42: #{tpu_custom_call.1} parent=1 // pred_check
      _
    $region43: #{tpu_custom_call.1} parent=1 // pred_check_branch
      %85 = sbr.rel (0) target = $region45
    $region44: #{tpu_custom_call.1} parent=1 // pred_region
      %87 = dma.done [#allocation5], 2048
    $region45: #{tpu_custom_call.1} parent=1 // pred_fallthru
      _
    // Predicated region
    $region46: #{tpu_custom_call.1} parent=1 // pred_check
      _
    $region47: #{tpu_custom_call.1} parent=1 // pred_check_branch
      %89 = sbr.rel (0) target = $region49
    $region48: #{tpu_custom_call.1} parent=1 // pred_region
      %91 = dma.done [#allocation7], 2048
    $region49: #{tpu_custom_call.1} parent=1 // pred_fallthru
      _
    // Predicated region
    $region50: #{tpu_custom_call.1} parent=1 // pred_check
      _
    $region51: #{tpu_custom_call.1} parent=1 // pred_check_branch
      %93 = sbr.rel (0) target = $region53
    $region52: #{tpu_custom_call.1} parent=1 // pred_region
      %95 = dma.done [#allocation7], 4096
    $region53: #{tpu_custom_call.1} parent=1 // pred_fallthru
      _
    // Predicated region
    $region54: #{tpu_custom_call.1} parent=1 // pred_check
      _
    $region55: #{tpu_custom_call.1} parent=1 // pred_check_branch
      %97 = sbr.rel (0) target = $region57
    $region56: #{tpu_custom_call.1} parent=1 // pred_region
      %99 = dma.done [#allocation10], 4096
    $region57: #{tpu_custom_call.1} parent=1 // pred_fallthru
      _
    %v100 = vld [vmem:[%s0] sm:$0xff]
    %v101 = vld [vmem:[%s0 + $0x8] sm:$0xff]
    %v102 = vld [vmem:[%s0 + $0x10] sm:$0xff]
    %v103 = vld [vmem:[%s0 + $0x18] sm:$0xff]
    %v104 = vld [vmem:[%s0 + $0x20] sm:$0xff]
    %v105 = vld [vmem:[%s0 + $0x28] sm:$0xff]
    %v106 = vld [vmem:[%s0 + $0x30] sm:$0xff]
    %v107 = vld [vmem:[%s0 + $0x38] sm:$0xff]
    %v108 = vld [vmem:[#allocation4] sm:$0xff]
    %v109 = vld [vmem:[#allocation4 + $0x8] sm:$0xff]
    %v110 = vld [vmem:[#allocation4 + $0x10] sm:$0xff]
    %v111 = vld [vmem:[#allocation4 + $0x18] sm:$0xff]
    %v112 = vld [vmem:[#allocation4 + $0x20] sm:$0xff]
    %v113 = vld [vmem:[#allocation4 + $0x28] sm:$0xff]
    %v114 = vld [vmem:[#allocation4 + $0x30] sm:$0xff]
    %v115 = vld [vmem:[#allocation4 + $0x38] sm:$0xff]
    %v116 = vld [vmem:[#allocation4 + $0x40] sm:$0xff]
    %v117 = vld [vmem:[#allocation4 + $0x48] sm:$0xff]
    %v118 = vld [vmem:[#allocation4 + $0x50] sm:$0xff]
    %v119 = vld [vmem:[#allocation4 + $0x58] sm:$0xff]
    %v120 = vld [vmem:[#allocation4 + $0x60] sm:$0xff]
    %v121 = vld [vmem:[#allocation4 + $0x68] sm:$0xff]
    %v122 = vld [vmem:[#allocation4 + $0x70] sm:$0xff]
    %v123 = vld [vmem:[#allocation4 + $0x78] sm:$0xff]
    %v124 = vld [vmem:[%s3] sm:$0x3]
    %v126 = vperm.slane %v124, 0
    %v127 = vperm.slane %v124, 1
    %vm130 = vcmask 523264
    %v132 = vsel %vm130, %v100, 0
    %v135 = vsel %vm130, %v101, 0
    %v138 = vsel %vm130, %v102, 0
    %v141 = vsel %vm130, %v103, 0
    %v144 = vsel %vm130, %v104, 0
    %v147 = vsel %vm130, %v105, 0
    %v150 = vsel %vm130, %v106, 0
    %v153 = vsel %vm130, %v107, 0
    %155 = vmatpush.msra.mxu0 0.0
    %156 = vmatpush.msra.mxu0 0.0
    %157 = vmatpush.msra.mxu0 0.0
    %158 = vmatpush.msra.mxu0 0.0
    %159 = vmatpush.msra.mxu0 0.0
    %160 = vmatpush.msra.mxu0 0.0
    %161 = vmatpush.msra.mxu0 0.0
    %162 = vmatpush.msra.mxu0 0.0
    %163 = vmatpush.msra.mxu0 %v122
    %164 = vmatpush.msra.mxu0 %v120
    %165 = vmatpush.msra.mxu0 %v118
    %166 = vmatpush.msra.mxu0 %v116
    %167 = vmatpush.msra.mxu0 %v114
    %168 = vmatpush.msra.mxu0 %v112
    %169 = vmatpush.msra.mxu0 %v110
    %170 = vmatpush.msra.mxu0 %v108
    %171 = vmatmul.f32.gmra.mxu0 %v132
    %v172 = vpop.f32.mrf.mxu0
    %v173 = vadd.f32 %v126, %v172
    %174 = vmatmul.f32.gmra.mxu0 %v135
    %v175 = vpop.f32.mrf.mxu0
    %v176 = vadd.f32 %v126, %v175
    %177 = vmatmul.f32.gmra.mxu0 %v138
    %v178 = vpop.f32.mrf.mxu0
    %v179 = vadd.f32 %v126, %v178
    %180 = vmatmul.f32.gmra.mxu0 %v141
    %v181 = vpop.f32.mrf.mxu0
    %v182 = vadd.f32 %v126, %v181
    %183 = vmatmul.f32.gmra.mxu0 %v144
    %v184 = vpop.f32.mrf.mxu0
    %v185 = vadd.f32 %v126, %v184
    %186 = vmatmul.f32.gmra.mxu0 %v147
    %v187 = vpop.f32.mrf.mxu0
    %v188 = vadd.f32 %v126, %v187
    %189 = vmatmul.f32.gmra.mxu0 %v150
    %v190 = vpop.f32.mrf.mxu0
    %v191 = vadd.f32 %v126, %v190
    %192 = vmatmul.f32.gmra.mxu0 %v153
    %v193 = vpop.f32.mrf.mxu0
    %v194 = vadd.f32 %v126, %v193
    %195 = vdwg.mxu0
    %196 = vmatpush.msra.mxu0 0.0
    %197 = vmatpush.msra.mxu0 0.0
    %198 = vmatpush.msra.mxu0 0.0
    %199 = vmatpush.msra.mxu0 0.0
    %200 = vmatpush.msra.mxu0 0.0
    %201 = vmatpush.msra.mxu0 0.0
    %202 = vmatpush.msra.mxu0 0.0
    %203 = vmatpush.msra.mxu0 0.0
    %204 = vmatpush.msra.mxu0 %v123
    %205 = vmatpush.msra.mxu0 %v121
    %206 = vmatpush.msra.mxu0 %v119
    %207 = vmatpush.msra.mxu0 %v117
    %208 = vmatpush.msra.mxu0 %v115
    %209 = vmatpush.msra.mxu0 %v113
    %210 = vmatpush.msra.mxu0 %v111
    %211 = vmatpush.msra.mxu0 %v109
    %212 = vmatmul.f32.gmra.mxu0 %v132
    %v213 = vpop.f32.mrf.mxu0
    %v214 = vadd.f32 %v127, %v213
    %215 = vmatmul.f32.gmra.mxu0 %v135
    %v216 = vpop.f32.mrf.mxu0
    %v217 = vadd.f32 %v127, %v216
    %218 = vmatmul.f32.gmra.mxu0 %v138
    %v219 = vpop.f32.mrf.mxu0
    %v220 = vadd.f32 %v127, %v219
    %221 = vmatmul.f32.gmra.mxu0 %v141
    %v222 = vpop.f32.mrf.mxu0
    %v223 = vadd.f32 %v127, %v222
    %224 = vmatmul.f32.gmra.mxu0 %v144
    %v225 = vpop.f32.mrf.mxu0
    %v226 = vadd.f32 %v127, %v225
    %227 = vmatmul.f32.gmra.mxu0 %v147
    %v228 = vpop.f32.mrf.mxu0
    %v229 = vadd.f32 %v127, %v228
    %230 = vmatmul.f32.gmra.mxu0 %v150
    %v231 = vpop.f32.mrf.mxu0
    %v232 = vadd.f32 %v127, %v231
    %233 = vmatmul.f32.gmra.mxu0 %v153
    %v234 = vpop.f32.mrf.mxu0
    %v235 = vadd.f32 %v127, %v234
    %236 = vdwg.mxu0
    %237 = vst [vmem:[#allocation2] sm:$0xff] %v173
    %238 = vst [vmem:[#allocation2 + $0x8] sm:$0xff] %v214
    %239 = vst [vmem:[#allocation2 + $0x10] sm:$0xff] %v176
    %240 = vst [vmem:[#allocation2 + $0x18] sm:$0xff] %v217
    %241 = vst [vmem:[#allocation2 + $0x20] sm:$0xff] %v179
    %242 = vst [vmem:[#allocation2 + $0x28] sm:$0xff] %v220
    %243 = vst [vmem:[#allocation2 + $0x30] sm:$0xff] %v182
    %244 = vst [vmem:[#allocation2 + $0x38] sm:$0xff] %v223
    %245 = vst [vmem:[#allocation2 + $0x40] sm:$0xff] %v185
    %246 = vst [vmem:[#allocation2 + $0x48] sm:$0xff] %v226
    %247 = vst [vmem:[#allocation2 + $0x50] sm:$0xff] %v188
    %248 = vst [vmem:[#allocation2 + $0x58] sm:$0xff] %v229
    %249 = vst [vmem:[#allocation2 + $0x60] sm:$0xff] %v191
    %250 = vst [vmem:[#allocation2 + $0x68] sm:$0xff] %v232
    %251 = vst [vmem:[#allocation2 + $0x70] sm:$0xff] %v194
    %252 = vst [vmem:[#allocation2 + $0x78] sm:$0xff] %v235
    %v253 = vld [vmem:[%s5] sm:$0x3]
    %v254 = vld [vmem:[%s7] sm:$0x3]
    %v255 = vld [vmem:[#allocation2] sm:$0xff]
    %v256 = vld [vmem:[#allocation2 + $0x8] sm:$0xff]
    %v257 = vld [vmem:[#allocation6] sm:$0xff]
    %v258 = vld [vmem:[#allocation6 + $0x8] sm:$0xff]
    %v259 = vld [vmem:[#allocation6 + $0x10] sm:$0xff]
    %v260 = vld [vmem:[#allocation6 + $0x18] sm:$0xff]
    %v261 = vld [vmem:[#allocation6 + $0x20] sm:$0xff]
    %v262 = vld [vmem:[#allocation6 + $0x28] sm:$0xff]
    %v263 = vld [vmem:[#allocation6 + $0x30] sm:$0xff]
    %v264 = vld [vmem:[#allocation6 + $0x38] sm:$0xff]
    %v265 = vld [vmem:[#allocation6 + $0x40] sm:$0xff]
    %v266 = vld [vmem:[#allocation6 + $0x48] sm:$0xff]
    %v267 = vld [vmem:[#allocation6 + $0x50] sm:$0xff]
    %v268 = vld [vmem:[#allocation6 + $0x58] sm:$0xff]
    %v269 = vld [vmem:[#allocation6 + $0x60] sm:$0xff]
    %v270 = vld [vmem:[#allocation6 + $0x68] sm:$0xff]
    %v271 = vld [vmem:[#allocation6 + $0x70] sm:$0xff]
    %v272 = vld [vmem:[#allocation6 + $0x78] sm:$0xff]
    %v274 = vsel %vm130, 0.0, 0
    %276 = vmatpush.msra.mxu0 0.0
    %277 = vmatpush.msra.mxu0 0.0
    %278 = vmatpush.msra.mxu0 0.0
    %279 = vmatpush.msra.mxu0 0.0
    %280 = vmatpush.msra.mxu0 0.0
    %281 = vmatpush.msra.mxu0 0.0
    %282 = vmatpush.msra.mxu0 0.0
    %283 = vmatpush.msra.mxu0 0.0
    %284 = vmatpush.msra.mxu0 %v271
    %285 = vmatpush.msra.mxu0 %v269
    %286 = vmatpush.msra.mxu0 %v267
    %287 = vmatpush.msra.mxu0 %v265
    %288 = vmatpush.msra.mxu0 %v263
    %289 = vmatpush.msra.mxu0 %v261
    %290 = vmatpush.msra.mxu0 %v259
    %291 = vmatpush.msra.mxu0 %v257
    %292 = vmatmul.f32.gmra.mxu0 %v274
    %v293 = vpop.f32.mrf.mxu0
    %v294 = vadd.f32 0.0, %v293
    %295 = vdwg.mxu0
    %296 = vmatpush.msra.mxu0 0.0
    %297 = vmatpush.msra.mxu0 0.0
    %298 = vmatpush.msra.mxu0 0.0
    %299 = vmatpush.msra.mxu0 0.0
    %300 = vmatpush.msra.mxu0 0.0
    %301 = vmatpush.msra.mxu0 0.0
    %302 = vmatpush.msra.mxu0 0.0
    %303 = vmatpush.msra.mxu0 0.0
    %304 = vmatpush.msra.mxu0 %v272
    %305 = vmatpush.msra.mxu0 %v270
    %306 = vmatpush.msra.mxu0 %v268
    %307 = vmatpush.msra.mxu0 %v266
    %308 = vmatpush.msra.mxu0 %v264
    %309 = vmatpush.msra.mxu0 %v262
    %310 = vmatpush.msra.mxu0 %v260
    %311 = vmatpush.msra.mxu0 %v258
    %312 = vmatmul.f32.gmra.mxu0 %v274
    %v313 = vpop.f32.mrf.mxu0
    %v314 = vadd.f32 0.0, %v313
    %315 = vdwg.mxu0
    %v316 = vadd.f32 %v255, %v294
    %v317 = vadd.f32 %v256, %v314
    %v318 = vxor.u32 %v316, 2147483648
    %v319 = vxor.u32 %v317, 2147483648
    %v320 = vmul.f32 %v318, 1.442695
    %v321 = vpow.pop %v320
    %v322 = vmul.f32 %v319, 1.442695
    %v323 = vpow.pop %v322
    %v324 = vadd.f32 %v321, 1.0
    %v325 = vadd.f32 %v323, 1.0
    %v326 = vrcp.pop %v324
    %v327 = vmul.f32 %v324, %v326
    %v328 = vsub.f32 1.0, %v327
    %v329 = vmul.f32 %v326, %v328
    %v330 = vadd.f32 %v326, %v329
    %vm331 = vweird.f32 %v324
    %vm332 = vweird.f32 %v326
    %vm333 = vmor %vm331, %vm332
    %v334 = vsel %vm333, %v326, %v330
    %v335 = vand.u32 2147483647, %v324
    %vm336 = vcmp.eq.f32.partialorder %v335, 8.507059e+37
    %v337 = vand.u32 %v324, 2147483648
    %v338 = vor.u32 1.1754944e-38, %v337
    %v339 = vsel %vm336, %v338, %v334
    %v340 = vmul.f32 1.0, %v339
    %v341 = vrcp.pop %v325
    %v342 = vmul.f32 %v325, %v341
    %v343 = vsub.f32 1.0, %v342
    %v344 = vmul.f32 %v341, %v343
    %v345 = vadd.f32 %v341, %v344
    %vm346 = vweird.f32 %v325
    %vm347 = vweird.f32 %v341
    %vm348 = vmor %vm346, %vm347
    %v349 = vsel %vm348, %v341, %v345
    %v350 = vand.u32 2147483647, %v325
    %vm351 = vcmp.eq.f32.partialorder %v350, 8.507059e+37
    %v352 = vand.u32 %v325, 2147483648
    %v353 = vor.u32 1.1754944e-38, %v352
    %v354 = vsel %vm351, %v353, %v349
    %v355 = vmul.f32 1.0, %v354
    %v356 = vtanh.pop %v317
    %v357 = vmul.f32 %v340, 0.0
    %359 = vrot.lane.b32.xlu0 %v356, 64
    %v360 = vpop.permute.xlu0 %359
    %v362 = vmul.f32 %v340, %v360
    %364 = vrot.lane.b32.xlu0 %v362, 64
    %v365 = vpop.permute.xlu0 %364
    %v367 = vadd.f32 %v357, %v365
    %v368 = vtanh.pop %v367
    %370 = vrot.lane.b32.xlu0 %v368, 64
    %v371 = vpop.permute.xlu0 %370
    %v373 = vmul.f32 %v355, %v371
    %v374 = vsel %vm130, %v373, 0.0
    %v375 = vld [vmem:[#allocation8] sm:$0xff]
    %v376 = vld [vmem:[#allocation8 + $0x8] sm:$0xff]
    %v377 = vld [vmem:[#allocation8 + $0x10] sm:$0xff]
    %v378 = vld [vmem:[#allocation8 + $0x18] sm:$0xff]
    %v379 = vld [vmem:[#allocation8 + $0x20] sm:$0xff]
    %v380 = vld [vmem:[#allocation8 + $0x28] sm:$0xff]
    %v381 = vld [vmem:[#allocation8 + $0x30] sm:$0xff]
    %v382 = vld [vmem:[#allocation8 + $0x38] sm:$0xff]
    %v383 = vld [vmem:[#allocation8 + $0x40] sm:$0xff]
    %v384 = vld [vmem:[#allocation8 + $0x48] sm:$0xff]
    %v385 = vld [vmem:[#allocation8 + $0x50] sm:$0xff]
    %v386 = vld [vmem:[#allocation8 + $0x58] sm:$0xff]
    %v387 = vld [vmem:[#allocation8 + $0x60] sm:$0xff]
    %v388 = vld [vmem:[#allocation8 + $0x68] sm:$0xff]
    %v389 = vld [vmem:[#allocation8 + $0x70] sm:$0xff]
    %v390 = vld [vmem:[#allocation8 + $0x78] sm:$0xff]
    %v391 = vld [vmem:[#allocation8 + $0x80] sm:$0xff]
    %v392 = vld [vmem:[#allocation8 + $0x88] sm:$0xff]
    %v393 = vld [vmem:[#allocation8 + $0x90] sm:$0xff]
    %v394 = vld [vmem:[#allocation8 + $0x98] sm:$0xff]
    %v395 = vld [vmem:[#allocation8 + $0xa0] sm:$0xff]
    %v396 = vld [vmem:[#allocation8 + $0xa8] sm:$0xff]
    %v397 = vld [vmem:[#allocation8 + $0xb0] sm:$0xff]
    %v398 = vld [vmem:[#allocation8 + $0xb8] sm:$0xff]
    %v399 = vld [vmem:[#allocation8 + $0xc0] sm:$0xff]
    %v400 = vld [vmem:[#allocation8 + $0xc8] sm:$0xff]
    %v401 = vld [vmem:[#allocation8 + $0xd0] sm:$0xff]
    %v402 = vld [vmem:[#allocation8 + $0xd8] sm:$0xff]
    %v403 = vld [vmem:[#allocation8 + $0xe0] sm:$0xff]
    %v404 = vld [vmem:[#allocation8 + $0xe8] sm:$0xff]
    %v405 = vld [vmem:[#allocation8 + $0xf0] sm:$0xff]
    %v406 = vld [vmem:[#allocation8 + $0xf8] sm:$0xff]
    %v408 = vperm.slane %v253, 0
    %v409 = vperm.slane %v253, 1
    %412 = vmatpush.msra.mxu0 %v405
    %413 = vmatpush.msra.mxu0 %v403
    %414 = vmatpush.msra.mxu0 %v401
    %415 = vmatpush.msra.mxu0 %v399
    %416 = vmatpush.msra.mxu0 %v397
    %417 = vmatpush.msra.mxu0 %v395
    %418 = vmatpush.msra.mxu0 %v393
    %419 = vmatpush.msra.mxu0 %v391
    %420 = vmatpush.msra.mxu0 %v389
    %421 = vmatpush.msra.mxu0 %v387
    %422 = vmatpush.msra.mxu0 %v385
    %423 = vmatpush.msra.mxu0 %v383
    %424 = vmatpush.msra.mxu0 %v381
    %425 = vmatpush.msra.mxu0 %v379
    %426 = vmatpush.msra.mxu0 %v377
    %427 = vmatpush.msra.mxu0 %v375
    %428 = vmatmul.f32.gmra.mxu0 %v374
    %v429 = vpop.f32.mrf.mxu0
    %v430 = vadd.f32 %v408, %v429
    %431 = vdwg.mxu0
    %432 = vmatpush.msra.mxu0 %v406
    %433 = vmatpush.msra.mxu0 %v404
    %434 = vmatpush.msra.mxu0 %v402
    %435 = vmatpush.msra.mxu0 %v400
    %436 = vmatpush.msra.mxu0 %v398
    %437 = vmatpush.msra.mxu0 %v396
    %438 = vmatpush.msra.mxu0 %v394
    %439 = vmatpush.msra.mxu0 %v392
    %440 = vmatpush.msra.mxu0 %v390
    %441 = vmatpush.msra.mxu0 %v388
    %442 = vmatpush.msra.mxu0 %v386
    %443 = vmatpush.msra.mxu0 %v384
    %444 = vmatpush.msra.mxu0 %v382
    %445 = vmatpush.msra.mxu0 %v380
    %446 = vmatpush.msra.mxu0 %v378
    %447 = vmatpush.msra.mxu0 %v376
    %448 = vmatmul.f32.gmra.mxu0 %v374
    %v449 = vpop.f32.mrf.mxu0
    %v450 = vadd.f32 %v409, %v449
    %451 = vdwg.mxu0
    %v452 = vxor.u32 %v430, 2147483648
    %v453 = vxor.u32 %v450, 2147483648
    %v454 = vmul.f32 %v452, 1.442695
    %v455 = vpow.pop %v454
    %v456 = vmul.f32 %v453, 1.442695
    %v457 = vpow.pop %v456
    %v458 = vadd.f32 %v455, 1.0
    %v459 = vadd.f32 %v457, 1.0
    %v460 = vrcp.pop %v458
    %v461 = vmul.f32 %v458, %v460
    %v462 = vsub.f32 1.0, %v461
    %v463 = vmul.f32 %v460, %v462
    %v464 = vadd.f32 %v460, %v463
    %vm465 = vweird.f32 %v458
    %vm466 = vweird.f32 %v460
    %vm467 = vmor %vm465, %vm466
    %v468 = vsel %vm467, %v460, %v464
    %v469 = vand.u32 2147483647, %v458
    %vm470 = vcmp.eq.f32.partialorder %v469, 8.507059e+37
    %v471 = vand.u32 %v458, 2147483648
    %v472 = vor.u32 1.1754944e-38, %v471
    %v473 = vsel %vm470, %v472, %v468
    %v474 = vmul.f32 1.0, %v473
    %v475 = vrcp.pop %v459
    %v476 = vmul.f32 %v459, %v475
    %v477 = vsub.f32 1.0, %v476
    %v478 = vmul.f32 %v475, %v477
    %v479 = vadd.f32 %v475, %v478
    %vm480 = vweird.f32 %v459
    %vm481 = vweird.f32 %v475
    %vm482 = vmor %vm480, %vm481
    %v483 = vsel %vm482, %v475, %v479
    %v484 = vand.u32 2147483647, %v459
    %vm485 = vcmp.eq.f32.partialorder %v484, 8.507059e+37
    %v486 = vand.u32 %v459, 2147483648
    %v487 = vor.u32 1.1754944e-38, %v486
    %v488 = vsel %vm485, %v487, %v483
    %v489 = vmul.f32 1.0, %v488
    %v490 = vtanh.pop %v450
    %v491 = vmul.f32 %v474, 0.0
    %493 = vrot.lane.b32.xlu0 %v490, 64
    %v494 = vpop.permute.xlu0 %493
    %v496 = vmul.f32 %v474, %v494
    %498 = vrot.lane.b32.xlu0 %v496, 64
    %v499 = vpop.permute.xlu0 %498
    %v501 = vadd.f32 %v491, %v499
    %v502 = vtanh.pop %v501
    %504 = vrot.lane.b32.xlu0 %v502, 64
    %v505 = vpop.permute.xlu0 %504
    %v507 = vmul.f32 %v489, %v505
    %v508 = vsel %vm130, %v507, 0.0
    %v509 = vld [vmem:[#allocation9] sm:$0xff]
    %v510 = vld [vmem:[#allocation9 + $0x8] sm:$0xff]
    %v511 = vld [vmem:[#allocation9 + $0x10] sm:$0xff]
    %v512 = vld [vmem:[#allocation9 + $0x18] sm:$0xff]
    %v513 = vld [vmem:[#allocation9 + $0x20] sm:$0xff]
    %v514 = vld [vmem:[#allocation9 + $0x28] sm:$0xff]
    %v515 = vld [vmem:[#allocation9 + $0x30] sm:$0xff]
    %v516 = vld [vmem:[#allocation9 + $0x38] sm:$0xff]
    %v517 = vld [vmem:[#allocation9 + $0x40] sm:$0xff]
    %v518 = vld [vmem:[#allocation9 + $0x48] sm:$0xff]
    %v519 = vld [vmem:[#allocation9 + $0x50] sm:$0xff]
    %v520 = vld [vmem:[#allocation9 + $0x58] sm:$0xff]
    %v521 = vld [vmem:[#allocation9 + $0x60] sm:$0xff]
    %v522 = vld [vmem:[#allocation9 + $0x68] sm:$0xff]
    %v523 = vld [vmem:[#allocation9 + $0x70] sm:$0xff]
    %v524 = vld [vmem:[#allocation9 + $0x78] sm:$0xff]
    %v525 = vld [vmem:[#allocation9 + $0x80] sm:$0xff]
    %v526 = vld [vmem:[#allocation9 + $0x88] sm:$0xff]
    %v527 = vld [vmem:[#allocation9 + $0x90] sm:$0xff]
    %v528 = vld [vmem:[#allocation9 + $0x98] sm:$0xff]
    %v529 = vld [vmem:[#allocation9 + $0xa0] sm:$0xff]
    %v530 = vld [vmem:[#allocation9 + $0xa8] sm:$0xff]
    %v531 = vld [vmem:[#allocation9 + $0xb0] sm:$0xff]
    %v532 = vld [vmem:[#allocation9 + $0xb8] sm:$0xff]
    %v533 = vld [vmem:[#allocation9 + $0xc0] sm:$0xff]
    %v534 = vld [vmem:[#allocation9 + $0xc8] sm:$0xff]
    %v535 = vld [vmem:[#allocation9 + $0xd0] sm:$0xff]
    %v536 = vld [vmem:[#allocation9 + $0xd8] sm:$0xff]
    %v537 = vld [vmem:[#allocation9 + $0xe0] sm:$0xff]
    %v538 = vld [vmem:[#allocation9 + $0xe8] sm:$0xff]
    %v539 = vld [vmem:[#allocation9 + $0xf0] sm:$0xff]
    %v540 = vld [vmem:[#allocation9 + $0xf8] sm:$0xff]
    %v542 = vperm.slane %v254, 0
    %v543 = vperm.slane %v254, 1
    %546 = vmatpush.msra.mxu0 %v539
    %547 = vmatpush.msra.mxu0 %v537
    %548 = vmatpush.msra.mxu0 %v535
    %549 = vmatpush.msra.mxu0 %v533
    %550 = vmatpush.msra.mxu0 %v531
    %551 = vmatpush.msra.mxu0 %v529
    %552 = vmatpush.msra.mxu0 %v527
    %553 = vmatpush.msra.mxu0 %v525
    %554 = vmatpush.msra.mxu0 %v523
    %555 = vmatpush.msra.mxu0 %v521
    %556 = vmatpush.msra.mxu0 %v519
    %557 = vmatpush.msra.mxu0 %v517
    %558 = vmatpush.msra.mxu0 %v515
    %559 = vmatpush.msra.mxu0 %v513
    %560 = vmatpush.msra.mxu0 %v511
    %561 = vmatpush.msra.mxu0 %v509
    %562 = vmatmul.f32.gmra.mxu0 %v508
    %v563 = vpop.f32.mrf.mxu0
    %v564 = vadd.f32 %v542, %v563
    %565 = vdwg.mxu0
    %566 = vmatpush.msra.mxu0 %v540
    %567 = vmatpush.msra.mxu0 %v538
    %568 = vmatpush.msra.mxu0 %v536
    %569 = vmatpush.msra.mxu0 %v534
    %570 = vmatpush.msra.mxu0 %v532
    %571 = vmatpush.msra.mxu0 %v530
    %572 = vmatpush.msra.mxu0 %v528
    %573 = vmatpush.msra.mxu0 %v526
    %574 = vmatpush.msra.mxu0 %v524
    %575 = vmatpush.msra.mxu0 %v522
    %576 = vmatpush.msra.mxu0 %v520
    %577 = vmatpush.msra.mxu0 %v518
    %578 = vmatpush.msra.mxu0 %v516
    %579 = vmatpush.msra.mxu0 %v514
    %580 = vmatpush.msra.mxu0 %v512
    %581 = vmatpush.msra.mxu0 %v510
    %582 = vmatmul.f32.gmra.mxu0 %v508
    %v583 = vpop.f32.mrf.mxu0
    %v584 = vadd.f32 %v543, %v583
    %585 = vdwg.mxu0
    %v586 = vxor.u32 %v564, 2147483648
    %v587 = vxor.u32 %v584, 2147483648
    %v588 = vmul.f32 %v586, 1.442695
    %v589 = vpow.pop %v588
    %v590 = vmul.f32 %v587, 1.442695
    %v591 = vpow.pop %v590
    %v592 = vadd.f32 %v589, 1.0
    %v593 = vadd.f32 %v591, 1.0
    %v594 = vrcp.pop %v592
    %v595 = vmul.f32 %v592, %v594
    %v596 = vsub.f32 1.0, %v595
    %v597 = vmul.f32 %v594, %v596
    %v598 = vadd.f32 %v594, %v597
    %vm599 = vweird.f32 %v592
    %vm600 = vweird.f32 %v594
    %vm601 = vmor %vm599, %vm600
    %v602 = vsel %vm601, %v594, %v598
    %v603 = vand.u32 2147483647, %v592
    %vm604 = vcmp.eq.f32.partialorder %v603, 8.507059e+37
    %v605 = vand.u32 %v592, 2147483648
    %v606 = vor.u32 1.1754944e-38, %v605
    %v607 = vsel %vm604, %v606, %v602
    %v608 = vmul.f32 1.0, %v607
    %v609 = vrcp.pop %v593
    %v610 = vmul.f32 %v593, %v609
    %v611 = vsub.f32 1.0, %v610
    %v612 = vmul.f32 %v609, %v611
    %v613 = vadd.f32 %v609, %v612
    %vm614 = vweird.f32 %v593
    %vm615 = vweird.f32 %v609
    %vm616 = vmor %vm614, %vm615
    %v617 = vsel %vm616, %v609, %v613
    %v618 = vand.u32 2147483647, %v593
    %vm619 = vcmp.eq.f32.partialorder %v618, 8.507059e+37
    %v620 = vand.u32 %v593, 2147483648
    %v621 = vor.u32 1.1754944e-38, %v620
    %v622 = vsel %vm619, %v621, %v617
    %v623 = vmul.f32 1.0, %v622
    %v624 = vtanh.pop %v584
    %v625 = vmul.f32 %v608, 0.0
    %627 = vrot.lane.b32.xlu0 %v624, 64
    %v628 = vpop.permute.xlu0 %627
    %v630 = vmul.f32 %v608, %v628
    %632 = vrot.lane.b32.xlu0 %v630, 64
    %v633 = vpop.permute.xlu0 %632
    %v635 = vadd.f32 %v625, %v633
    %v636 = vtanh.pop %v635
    %638 = vrot.lane.b32.xlu0 %v636, 64
    %v639 = vpop.permute.xlu0 %638
    %v641 = vmul.f32 %v623, %v639
    %v642 = vld [vmem:[#allocation2 + $0x10] sm:$0xff]
    %v643 = vld [vmem:[#allocation2 + $0x18] sm:$0xff]
    %v645 = vsel %vm130, %v373, 0
    %647 = vmatpush.msra.mxu0 0.0
    %648 = vmatpush.msra.mxu0 0.0
    %649 = vmatpush.msra.mxu0 0.0
    %650 = vmatpush.msra.mxu0 0.0
    %651 = vmatpush.msra.mxu0 0.0
    %652 = vmatpush.msra.mxu0 0.0
    %653 = vmatpush.msra.mxu0 0.0
    %654 = vmatpush.msra.mxu0 0.0
    %655 = vmatpush.msra.mxu0 %v271
    %656 = vmatpush.msra.mxu0 %v269
    %657 = vmatpush.msra.mxu0 %v267
    %658 = vmatpush.msra.mxu0 %v265
    %659 = vmatpush.msra.mxu0 %v263
    %660 = vmatpush.msra.mxu0 %v261
    %661 = vmatpush.msra.mxu0 %v259
    %662 = vmatpush.msra.mxu0 %v257
    %663 = vmatmul.f32.gmra.mxu0 %v645
    %v664 = vpop.f32.mrf.mxu0
    %v665 = vadd.f32 0.0, %v664
    %666 = vdwg.mxu0
    %667 = vmatpush.msra.mxu0 0.0
    %668 = vmatpush.msra.mxu0 0.0
    %669 = vmatpush.msra.mxu0 0.0
    %670 = vmatpush.msra.mxu0 0.0
    %671 = vmatpush.msra.mxu0 0.0
    %672 = vmatpush.msra.mxu0 0.0
    %673 = vmatpush.msra.mxu0 0.0
    %674 = vmatpush.msra.mxu0 0.0
    %675 = vmatpush.msra.mxu0 %v272
    %676 = vmatpush.msra.mxu0 %v270
    %677 = vmatpush.msra.mxu0 %v268
    %678 = vmatpush.msra.mxu0 %v266
    %679 = vmatpush.msra.mxu0 %v264
    %680 = vmatpush.msra.mxu0 %v262
    %681 = vmatpush.msra.mxu0 %v260
    %682 = vmatpush.msra.mxu0 %v258
    %683 = vmatmul.f32.gmra.mxu0 %v645
    %v684 = vpop.f32.mrf.mxu0
    %v685 = vadd.f32 0.0, %v684
    %686 = vdwg.mxu0
    %v687 = vadd.f32 %v642, %v665
    %v688 = vadd.f32 %v643, %v685
    %v689 = vxor.u32 %v687, 2147483648
    %v690 = vxor.u32 %v688, 2147483648
    %v691 = vmul.f32 %v689, 1.442695
    %v692 = vpow.pop %v691
    %v693 = vmul.f32 %v690, 1.442695
    %v694 = vpow.pop %v693
    %v695 = vadd.f32 %v692, 1.0
    %v696 = vadd.f32 %v694, 1.0
    %v697 = vrcp.pop %v695
    %v698 = vmul.f32 %v695, %v697
    %v699 = vsub.f32 1.0, %v698
    %v700 = vmul.f32 %v697, %v699
    %v701 = vadd.f32 %v697, %v700
    %vm702 = vweird.f32 %v695
    %vm703 = vweird.f32 %v697
    %vm704 = vmor %vm702, %vm703
    %v705 = vsel %vm704, %v697, %v701
    %v706 = vand.u32 2147483647, %v695
    %vm707 = vcmp.eq.f32.partialorder %v706, 8.507059e+37
    %v708 = vand.u32 %v695, 2147483648
    %v709 = vor.u32 1.1754944e-38, %v708
    %v710 = vsel %vm707, %v709, %v705
    %v711 = vmul.f32 1.0, %v710
    %v712 = vrcp.pop %v696
    %v713 = vmul.f32 %v696, %v712
    %v714 = vsub.f32 1.0, %v713
    %v715 = vmul.f32 %v712, %v714
    %v716 = vadd.f32 %v712, %v715
    %vm717 = vweird.f32 %v696
    %vm718 = vweird.f32 %v712
    %vm719 = vmor %vm717, %vm718
    %v720 = vsel %vm719, %v712, %v716
    %v721 = vand.u32 2147483647, %v696
    %vm722 = vcmp.eq.f32.partialorder %v721, 8.507059e+37
    %v723 = vand.u32 %v696, 2147483648
    %v724 = vor.u32 1.1754944e-38, %v723
    %v725 = vsel %vm722, %v724, %v720
    %v726 = vmul.f32 1.0, %v725
    %v727 = vtanh.pop %v688
    %v728 = vmul.f32 %v711, %v367
    %730 = vrot.lane.b32.xlu0 %v727, 64
    %v731 = vpop.permute.xlu0 %730
    %v733 = vmul.f32 %v711, %v731
    %735 = vrot.lane.b32.xlu0 %v733, 64
    %v736 = vpop.permute.xlu0 %735
    %v738 = vadd.f32 %v728, %v736
    %v739 = vtanh.pop %v738
    %741 = vrot.lane.b32.xlu0 %v739, 64
    %v742 = vpop.permute.xlu0 %741
    %v744 = vmul.f32 %v726, %v742
    %746 = vrot.lane.b32.xlu0 %v507, 64
    %v747 = vpop.permute.xlu0 %746
    %v749 = vsel %vm130, %v744, %v747
    %750 = vmatpush.msra.mxu0 %v405
    %751 = vmatpush.msra.mxu0 %v403
    %752 = vmatpush.msra.mxu0 %v401
    %753 = vmatpush.msra.mxu0 %v399
    %754 = vmatpush.msra.mxu0 %v397
    %755 = vmatpush.msra.mxu0 %v395
    %756 = vmatpush.msra.mxu0 %v393
    %757 = vmatpush.msra.mxu0 %v391
    %758 = vmatpush.msra.mxu0 %v389
    %759 = vmatpush.msra.mxu0 %v387
    %760 = vmatpush.msra.mxu0 %v385
    %761 = vmatpush.msra.mxu0 %v383
    %762 = vmatpush.msra.mxu0 %v381
    %763 = vmatpush.msra.mxu0 %v379
    %764 = vmatpush.msra.mxu0 %v377
    %765 = vmatpush.msra.mxu0 %v375
    %766 = vmatmul.f32.gmra.mxu0 %v749
    %v767 = vpop.f32.mrf.mxu0
    %v768 = vadd.f32 %v408, %v767
    %769 = vdwg.mxu0
    %770 = vmatpush.msra.mxu0 %v406
    %771 = vmatpush.msra.mxu0 %v404
    %772 = vmatpush.msra.mxu0 %v402
    %773 = vmatpush.msra.mxu0 %v400
    %774 = vmatpush.msra.mxu0 %v398
    %775 = vmatpush.msra.mxu0 %v396
    %776 = vmatpush.msra.mxu0 %v394
    %777 = vmatpush.msra.mxu0 %v392
    %778 = vmatpush.msra.mxu0 %v390
    %779 = vmatpush.msra.mxu0 %v388
    %780 = vmatpush.msra.mxu0 %v386
    %781 = vmatpush.msra.mxu0 %v384
    %782 = vmatpush.msra.mxu0 %v382
    %783 = vmatpush.msra.mxu0 %v380
    %784 = vmatpush.msra.mxu0 %v378
    %785 = vmatpush.msra.mxu0 %v376
    %786 = vmatmul.f32.gmra.mxu0 %v749
    %v787 = vpop.f32.mrf.mxu0
    %v788 = vadd.f32 %v409, %v787
    %789 = vdwg.mxu0
    %v790 = vxor.u32 %v768, 2147483648
    %v791 = vxor.u32 %v788, 2147483648
    %v792 = vmul.f32 %v790, 1.442695
    %v793 = vpow.pop %v792
    %v794 = vmul.f32 %v791, 1.442695
    %v795 = vpow.pop %v794
    %v796 = vadd.f32 %v793, 1.0
    %v797 = vadd.f32 %v795, 1.0
    %v798 = vrcp.pop %v796
    %v799 = vmul.f32 %v796, %v798
    %v800 = vsub.f32 1.0, %v799
    %v801 = vmul.f32 %v798, %v800
    %v802 = vadd.f32 %v798, %v801
    %vm803 = vweird.f32 %v796
    %vm804 = vweird.f32 %v798
    %vm805 = vmor %vm803, %vm804
    %v806 = vsel %vm805, %v798, %v802
    %v807 = vand.u32 2147483647, %v796
    %vm808 = vcmp.eq.f32.partialorder %v807, 8.507059e+37
    %v809 = vand.u32 %v796, 2147483648
    %v810 = vor.u32 1.1754944e-38, %v809
    %v811 = vsel %vm808, %v810, %v806
    %v812 = vmul.f32 1.0, %v811
    %v813 = vrcp.pop %v797
    %v814 = vmul.f32 %v797, %v813
    %v815 = vsub.f32 1.0, %v814
    %v816 = vmul.f32 %v813, %v815
    %v817 = vadd.f32 %v813, %v816
    %vm818 = vweird.f32 %v797
    %vm819 = vweird.f32 %v813
    %vm820 = vmor %vm818, %vm819
    %v821 = vsel %vm820, %v813, %v817
    %v822 = vand.u32 2147483647, %v797
    %vm823 = vcmp.eq.f32.partialorder %v822, 8.507059e+37
    %v824 = vand.u32 %v797, 2147483648
    %v825 = vor.u32 1.1754944e-38, %v824
    %v826 = vsel %vm823, %v825, %v821
    %v827 = vmul.f32 1.0, %v826
    %v828 = vtanh.pop %v788
    %v829 = vmul.f32 %v812, %v501
    %831 = vrot.lane.b32.xlu0 %v828, 64
    %v832 = vpop.permute.xlu0 %831
    %v834 = vmul.f32 %v812, %v832
    %836 = vrot.lane.b32.xlu0 %v834, 64
    %v837 = vpop.permute.xlu0 %836
    %v839 = vadd.f32 %v829, %v837
    %v840 = vtanh.pop %v839
    %842 = vrot.lane.b32.xlu0 %v840, 64
    %v843 = vpop.permute.xlu0 %842
    %v845 = vmul.f32 %v827, %v843
    %847 = vrot.lane.b32.xlu0 %v641, 64
    %v848 = vpop.permute.xlu0 %847
    %v850 = vsel %vm130, %v845, %v848
    %851 = vmatpush.msra.mxu0 %v539
    %852 = vmatpush.msra.mxu0 %v537
    %853 = vmatpush.msra.mxu0 %v535
    %854 = vmatpush.msra.mxu0 %v533
    %855 = vmatpush.msra.mxu0 %v531
    %856 = vmatpush.msra.mxu0 %v529
    %857 = vmatpush.msra.mxu0 %v527
    %858 = vmatpush.msra.mxu0 %v525
    %859 = vmatpush.msra.mxu0 %v523
    %860 = vmatpush.msra.mxu0 %v521
    %861 = vmatpush.msra.mxu0 %v519
    %862 = vmatpush.msra.mxu0 %v517
    %863 = vmatpush.msra.mxu0 %v515
    %864 = vmatpush.msra.mxu0 %v513
    %865 = vmatpush.msra.mxu0 %v511
    %866 = vmatpush.msra.mxu0 %v509
    %867 = vmatmul.f32.gmra.mxu0 %v850
    %v868 = vpop.f32.mrf.mxu0
    %v869 = vadd.f32 %v542, %v868
    %870 = vdwg.mxu0
    %871 = vmatpush.msra.mxu0 %v540
    %872 = vmatpush.msra.mxu0 %v538
    %873 = vmatpush.msra.mxu0 %v536
    %874 = vmatpush.msra.mxu0 %v534
    %875 = vmatpush.msra.mxu0 %v532
    %876 = vmatpush.msra.mxu0 %v530
    %877 = vmatpush.msra.mxu0 %v528
    %878 = vmatpush.msra.mxu0 %v526
    %879 = vmatpush.msra.mxu0 %v524
    %880 = vmatpush.msra.mxu0 %v522
    %881 = vmatpush.msra.mxu0 %v520
    %882 = vmatpush.msra.mxu0 %v518
    %883 = vmatpush.msra.mxu0 %v516
    %884 = vmatpush.msra.mxu0 %v514
    %885 = vmatpush.msra.mxu0 %v512
    %886 = vmatpush.msra.mxu0 %v510
    %887 = vmatmul.f32.gmra.mxu0 %v850
    %v888 = vpop.f32.mrf.mxu0
    %v889 = vadd.f32 %v543, %v888
    %890 = vdwg.mxu0
    %v891 = vxor.u32 %v869, 2147483648
    %v892 = vxor.u32 %v889, 2147483648
    %v893 = vmul.f32 %v891, 1.442695
    %v894 = vpow.pop %v893
    %v895 = vmul.f32 %v892, 1.442695
    %v896 = vpow.pop %v895
    %v897 = vadd.f32 %v894, 1.0
    %v898 = vadd.f32 %v896, 1.0
    %v899 = vrcp.pop %v897
    %v900 = vmul.f32 %v897, %v899
    %v901 = vsub.f32 1.0, %v900
    %v902 = vmul.f32 %v899, %v901
    %v903 = vadd.f32 %v899, %v902
    %vm904 = vweird.f32 %v897
    %vm905 = vweird.f32 %v899
    %vm906 = vmor %vm904, %vm905
    %v907 = vsel %vm906, %v899, %v903
    %v908 = vand.u32 2147483647, %v897
    %vm909 = vcmp.eq.f32.partialorder %v908, 8.507059e+37
    %v910 = vand.u32 %v897, 2147483648
    %v911 = vor.u32 1.1754944e-38, %v910
    %v912 = vsel %vm909, %v911, %v907
    %v913 = vmul.f32 1.0, %v912
    %v914 = vrcp.pop %v898
    %v915 = vmul.f32 %v898, %v914
    %v916 = vsub.f32 1.0, %v915
    %v917 = vmul.f32 %v914, %v916
    %v918 = vadd.f32 %v914, %v917
    %vm919 = vweird.f32 %v898
    %vm920 = vweird.f32 %v914
    %vm921 = vmor %vm919, %vm920
    %v922 = vsel %vm921, %v914, %v918
    %v923 = vand.u32 2147483647, %v898
    %vm924 = vcmp.eq.f32.partialorder %v923, 8.507059e+37
    %v925 = vand.u32 %v898, 2147483648
    %v926 = vor.u32 1.1754944e-38, %v925
    %v927 = vsel %vm924, %v926, %v922
    %v928 = vmul.f32 1.0, %v927
    %v929 = vtanh.pop %v889
    %v930 = vmul.f32 %v913, %v635
    %932 = vrot.lane.b32.xlu0 %v929, 64
    %v933 = vpop.permute.xlu0 %932
    %v935 = vmul.f32 %v913, %v933
    %937 = vrot.lane.b32.xlu0 %v935, 64
    %v938 = vpop.permute.xlu0 %937
    %v940 = vadd.f32 %v930, %v938
    %v941 = vtanh.pop %v940
    %943 = vrot.lane.b32.xlu0 %v941, 64
    %v944 = vpop.permute.xlu0 %943
    %v946 = vmul.f32 %v928, %v944
    %v947 = vld [vmem:[#allocation2 + $0x20] sm:$0xff]
    %v948 = vld [vmem:[#allocation2 + $0x28] sm:$0xff]
    %v950 = vsel %vm130, %v744, 0
    %952 = vmatpush.msra.mxu0 0.0
    %953 = vmatpush.msra.mxu0 0.0
    %954 = vmatpush.msra.mxu0 0.0
    %955 = vmatpush.msra.mxu0 0.0
    %956 = vmatpush.msra.mxu0 0.0
    %957 = vmatpush.msra.mxu0 0.0
    %958 = vmatpush.msra.mxu0 0.0
    %959 = vmatpush.msra.mxu0 0.0
    %960 = vmatpush.msra.mxu0 %v271
    %961 = vmatpush.msra.mxu0 %v269
    %962 = vmatpush.msra.mxu0 %v267
    %963 = vmatpush.msra.mxu0 %v265
    %964 = vmatpush.msra.mxu0 %v263
    %965 = vmatpush.msra.mxu0 %v261
    %966 = vmatpush.msra.mxu0 %v259
    %967 = vmatpush.msra.mxu0 %v257
    %968 = vmatmul.f32.gmra.mxu0 %v950
    %v969 = vpop.f32.mrf.mxu0
    %v970 = vadd.f32 0.0, %v969
    %971 = vdwg.mxu0
    %972 = vmatpush.msra.mxu0 0.0
    %973 = vmatpush.msra.mxu0 0.0
    %974 = vmatpush.msra.mxu0 0.0
    %975 = vmatpush.msra.mxu0 0.0
    %976 = vmatpush.msra.mxu0 0.0
    %977 = vmatpush.msra.mxu0 0.0
    %978 = vmatpush.msra.mxu0 0.0
    %979 = vmatpush.msra.mxu0 0.0
    %980 = vmatpush.msra.mxu0 %v272
    %981 = vmatpush.msra.mxu0 %v270
    %982 = vmatpush.msra.mxu0 %v268
    %983 = vmatpush.msra.mxu0 %v266
    %984 = vmatpush.msra.mxu0 %v264
    %985 = vmatpush.msra.mxu0 %v262
    %986 = vmatpush.msra.mxu0 %v260
    %987 = vmatpush.msra.mxu0 %v258
    %988 = vmatmul.f32.gmra.mxu0 %v950
    %v989 = vpop.f32.mrf.mxu0
    %v990 = vadd.f32 0.0, %v989
    %991 = vdwg.mxu0
    %v992 = vadd.f32 %v947, %v970
    %v993 = vadd.f32 %v948, %v990
    %v994 = vxor.u32 %v992, 2147483648
    %v995 = vxor.u32 %v993, 2147483648
    %v996 = vmul.f32 %v994, 1.442695
    %v997 = vpow.pop %v996
    %v998 = vmul.f32 %v995, 1.442695
    %v999 = vpow.pop %v998
    %v1000 = vadd.f32 %v997, 1.0
    %v1001 = vadd.f32 %v999, 1.0
    %v1002 = vrcp.pop %v1000
    %v1003 = vmul.f32 %v1000, %v1002
    %v1004 = vsub.f32 1.0, %v1003
    %v1005 = vmul.f32 %v1002, %v1004
    %v1006 = vadd.f32 %v1002, %v1005
    %vm1007 = vweird.f32 %v1000
    %vm1008 = vweird.f32 %v1002
    %vm1009 = vmor %vm1007, %vm1008
    %v1010 = vsel %vm1009, %v1002, %v1006
    %v1011 = vand.u32 2147483647, %v1000
    %vm1012 = vcmp.eq.f32.partialorder %v1011, 8.507059e+37
    %v1013 = vand.u32 %v1000, 2147483648
    %v1014 = vor.u32 1.1754944e-38, %v1013
    %v1015 = vsel %vm1012, %v1014, %v1010
    %v1016 = vmul.f32 1.0, %v1015
    %v1017 = vrcp.pop %v1001
    %v1018 = vmul.f32 %v1001, %v1017
    %v1019 = vsub.f32 1.0, %v1018
    %v1020 = vmul.f32 %v1017, %v1019
    %v1021 = vadd.f32 %v1017, %v1020
    %vm1022 = vweird.f32 %v1001
    %vm1023 = vweird.f32 %v1017
    %vm1024 = vmor %vm1022, %vm1023
    %v1025 = vsel %vm1024, %v1017, %v1021
    %v1026 = vand.u32 2147483647, %v1001
    %vm1027 = vcmp.eq.f32.partialorder %v1026, 8.507059e+37
    %v1028 = vand.u32 %v1001, 2147483648
    %v1029 = vor.u32 1.1754944e-38, %v1028
    %v1030 = vsel %vm1027, %v1029, %v1025
    %v1031 = vmul.f32 1.0, %v1030
    %v1032 = vtanh.pop %v993
    %v1033 = vmul.f32 %v1016, %v738
    %1035 = vrot.lane.b32.xlu0 %v1032, 64
    %v1036 = vpop.permute.xlu0 %1035
    %v1038 = vmul.f32 %v1016, %v1036
    %1040 = vrot.lane.b32.xlu0 %v1038, 64
    %v1041 = vpop.permute.xlu0 %1040
    %v1043 = vadd.f32 %v1033, %v1041
    %v1044 = vtanh.pop %v1043
    %1046 = vrot.lane.b32.xlu0 %v1044, 64
    %v1047 = vpop.permute.xlu0 %1046
    %v1049 = vmul.f32 %v1031, %v1047
    %1051 = vrot.lane.b32.xlu0 %v845, 64
    %v1052 = vpop.permute.xlu0 %1051
    %v1054 = vsel %vm130, %v1049, %v1052
    %1055 = vmatpush.msra.mxu0 %v405
    %1056 = vmatpush.msra.mxu0 %v403
    %1057 = vmatpush.msra.mxu0 %v401
    %1058 = vmatpush.msra.mxu0 %v399
    %1059 = vmatpush.msra.mxu0 %v397
    %1060 = vmatpush.msra.mxu0 %v395
    %1061 = vmatpush.msra.mxu0 %v393
    %1062 = vmatpush.msra.mxu0 %v391
    %1063 = vmatpush.msra.mxu0 %v389
    %1064 = vmatpush.msra.mxu0 %v387
    %1065 = vmatpush.msra.mxu0 %v385
    %1066 = vmatpush.msra.mxu0 %v383
    %1067 = vmatpush.msra.mxu0 %v381
    %1068 = vmatpush.msra.mxu0 %v379
    %1069 = vmatpush.msra.mxu0 %v377
    %1070 = vmatpush.msra.mxu0 %v375
    %1071 = vmatmul.f32.gmra.mxu0 %v1054
    %v1072 = vpop.f32.mrf.mxu0
    %v1073 = vadd.f32 %v408, %v1072
    %1074 = vdwg.mxu0
    %1075 = vmatpush.msra.mxu0 %v406
    %1076 = vmatpush.msra.mxu0 %v404
    %1077 = vmatpush.msra.mxu0 %v402
    %1078 = vmatpush.msra.mxu0 %v400
    %1079 = vmatpush.msra.mxu0 %v398
    %1080 = vmatpush.msra.mxu0 %v396
    %1081 = vmatpush.msra.mxu0 %v394
    %1082 = vmatpush.msra.mxu0 %v392
    %1083 = vmatpush.msra.mxu0 %v390
    %1084 = vmatpush.msra.mxu0 %v388
    %1085 = vmatpush.msra.mxu0 %v386
    %1086 = vmatpush.msra.mxu0 %v384
    %1087 = vmatpush.msra.mxu0 %v382
    %1088 = vmatpush.msra.mxu0 %v380
    %1089 = vmatpush.msra.mxu0 %v378
    %1090 = vmatpush.msra.mxu0 %v376
    %1091 = vmatmul.f32.gmra.mxu0 %v1054
    %v1092 = vpop.f32.mrf.mxu0
    %v1093 = vadd.f32 %v409, %v1092
    %1094 = vdwg.mxu0
    %v1095 = vxor.u32 %v1073, 2147483648
    %v1096 = vxor.u32 %v1093, 2147483648
    %v1097 = vmul.f32 %v1095, 1.442695
    %v1098 = vpow.pop %v1097
    %v1099 = vmul.f32 %v1096, 1.442695
    %v1100 = vpow.pop %v1099
    %v1101 = vadd.f32 %v1098, 1.0
    %v1102 = vadd.f32 %v1100, 1.0
    %v1103 = vrcp.pop %v1101
    %v1104 = vmul.f32 %v1101, %v1103
    %v1105 = vsub.f32 1.0, %v1104
    %v1106 = vmul.f32 %v1103, %v1105
    %v1107 = vadd.f32 %v1103, %v1106
    %vm1108 = vweird.f32 %v1101
    %vm1109 = vweird.f32 %v1103
    %vm1110 = vmor %vm1108, %vm1109
    %v1111 = vsel %vm1110, %v1103, %v1107
    %v1112 = vand.u32 2147483647, %v1101
    %vm1113 = vcmp.eq.f32.partialorder %v1112, 8.507059e+37
    %v1114 = vand.u32 %v1101, 2147483648
    %v1115 = vor.u32 1.1754944e-38, %v1114
    %v1116 = vsel %vm1113, %v1115, %v1111
    %v1117 = vmul.f32 1.0, %v1116
    %v1118 = vrcp.pop %v1102
    %v1119 = vmul.f32 %v1102, %v1118
    %v1120 = vsub.f32 1.0, %v1119
    %v1121 = vmul.f32 %v1118, %v1120
    %v1122 = vadd.f32 %v1118, %v1121
    %vm1123 = vweird.f32 %v1102
    %vm1124 = vweird.f32 %v1118
    %vm1125 = vmor %vm1123, %vm1124
    %v1126 = vsel %vm1125, %v1118, %v1122
    %v1127 = vand.u32 2147483647, %v1102
    %vm1128 = vcmp.eq.f32.partialorder %v1127, 8.507059e+37
    %v1129 = vand.u32 %v1102, 2147483648
    %v1130 = vor.u32 1.1754944e-38, %v1129
    %v1131 = vsel %vm1128, %v1130, %v1126
    %v1132 = vmul.f32 1.0, %v1131
    %v1133 = vtanh.pop %v1093
    %v1134 = vmul.f32 %v1117, %v839
    %1136 = vrot.lane.b32.xlu0 %v1133, 64
    %v1137 = vpop.permute.xlu0 %1136
    %v1139 = vmul.f32 %v1117, %v1137
    %1141 = vrot.lane.b32.xlu0 %v1139, 64
    %v1142 = vpop.permute.xlu0 %1141
    %v1144 = vadd.f32 %v1134, %v1142
    %v1145 = vtanh.pop %v1144
    %1147 = vrot.lane.b32.xlu0 %v1145, 64
    %v1148 = vpop.permute.xlu0 %1147
    %v1150 = vmul.f32 %v1132, %v1148
    %1152 = vrot.lane.b32.xlu0 %v946, 64
    %v1153 = vpop.permute.xlu0 %1152
    %v1155 = vsel %vm130, %v1150, %v1153
    %1156 = vmatpush.msra.mxu0 %v539
    %1157 = vmatpush.msra.mxu0 %v537
    %1158 = vmatpush.msra.mxu0 %v535
    %1159 = vmatpush.msra.mxu0 %v533
    %1160 = vmatpush.msra.mxu0 %v531
    %1161 = vmatpush.msra.mxu0 %v529
    %1162 = vmatpush.msra.mxu0 %v527
    %1163 = vmatpush.msra.mxu0 %v525
    %1164 = vmatpush.msra.mxu0 %v523
    %1165 = vmatpush.msra.mxu0 %v521
    %1166 = vmatpush.msra.mxu0 %v519
    %1167 = vmatpush.msra.mxu0 %v517
    %1168 = vmatpush.msra.mxu0 %v515
    %1169 = vmatpush.msra.mxu0 %v513
    %1170 = vmatpush.msra.mxu0 %v511
    %1171 = vmatpush.msra.mxu0 %v509
    %1172 = vmatmul.f32.gmra.mxu0 %v1155
    %v1173 = vpop.f32.mrf.mxu0
    %v1174 = vadd.f32 %v542, %v1173
    %1175 = vdwg.mxu0
    %1176 = vmatpush.msra.mxu0 %v540
    %1177 = vmatpush.msra.mxu0 %v538
    %1178 = vmatpush.msra.mxu0 %v536
    %1179 = vmatpush.msra.mxu0 %v534
    %1180 = vmatpush.msra.mxu0 %v532
    %1181 = vmatpush.msra.mxu0 %v530
    %1182 = vmatpush.msra.mxu0 %v528
    %1183 = vmatpush.msra.mxu0 %v526
    %1184 = vmatpush.msra.mxu0 %v524
    %1185 = vmatpush.msra.mxu0 %v522
    %1186 = vmatpush.msra.mxu0 %v520
    %1187 = vmatpush.msra.mxu0 %v518
    %1188 = vmatpush.msra.mxu0 %v516
    %1189 = vmatpush.msra.mxu0 %v514
    %1190 = vmatpush.msra.mxu0 %v512
    %1191 = vmatpush.msra.mxu0 %v510
    %1192 = vmatmul.f32.gmra.mxu0 %v1155
    %v1193 = vpop.f32.mrf.mxu0
    %v1194 = vadd.f32 %v543, %v1193
    %1195 = vdwg.mxu0
    %v1196 = vxor.u32 %v1174, 2147483648
    %v1197 = vxor.u32 %v1194, 2147483648
    %v1198 = vmul.f32 %v1196, 1.442695
    %v1199 = vpow.pop %v1198
    %v1200 = vmul.f32 %v1197, 1.442695
    %v1201 = vpow.pop %v1200
    %v1202 = vadd.f32 %v1199, 1.0
    %v1203 = vadd.f32 %v1201, 1.0
    %v1204 = vrcp.pop %v1202
    %v1205 = vmul.f32 %v1202, %v1204
    %v1206 = vsub.f32 1.0, %v1205
    %v1207 = vmul.f32 %v1204, %v1206
    %v1208 = vadd.f32 %v1204, %v1207
    %vm1209 = vweird.f32 %v1202
    %vm1210 = vweird.f32 %v1204
    %vm1211 = vmor %vm1209, %vm1210
    %v1212 = vsel %vm1211, %v1204, %v1208
    %v1213 = vand.u32 2147483647, %v1202
    %vm1214 = vcmp.eq.f32.partialorder %v1213, 8.507059e+37
    %v1215 = vand.u32 %v1202, 2147483648
    %v1216 = vor.u32 1.1754944e-38, %v1215
    %v1217 = vsel %vm1214, %v1216, %v1212
    %v1218 = vmul.f32 1.0, %v1217
    %v1219 = vrcp.pop %v1203
    %v1220 = vmul.f32 %v1203, %v1219
    %v1221 = vsub.f32 1.0, %v1220
    %v1222 = vmul.f32 %v1219, %v1221
    %v1223 = vadd.f32 %v1219, %v1222
    %vm1224 = vweird.f32 %v1203
    %vm1225 = vweird.f32 %v1219
    %vm1226 = vmor %vm1224, %vm1225
    %v1227 = vsel %vm1226, %v1219, %v1223
    %v1228 = vand.u32 2147483647, %v1203
    %vm1229 = vcmp.eq.f32.partialorder %v1228, 8.507059e+37
    %v1230 = vand.u32 %v1203, 2147483648
    %v1231 = vor.u32 1.1754944e-38, %v1230
    %v1232 = vsel %vm1229, %v1231, %v1227
    %v1233 = vmul.f32 1.0, %v1232
    %v1234 = vtanh.pop %v1194
    %v1235 = vmul.f32 %v1218, %v940
    %1237 = vrot.lane.b32.xlu0 %v1234, 64
    %v1238 = vpop.permute.xlu0 %1237
    %v1240 = vmul.f32 %v1218, %v1238
    %1242 = vrot.lane.b32.xlu0 %v1240, 64
    %v1243 = vpop.permute.xlu0 %1242
    %v1245 = vadd.f32 %v1235, %v1243
    %v1246 = vtanh.pop %v1245
    %1248 = vrot.lane.b32.xlu0 %v1246, 64
    %v1249 = vpop.permute.xlu0 %1248
    %v1251 = vmul.f32 %v1233, %v1249
    %v1252 = vld [vmem:[#allocation2 + $0x30] sm:$0xff]
    %v1253 = vld [vmem:[#allocation2 + $0x38] sm:$0xff]
    %v1255 = vsel %vm130, %v1049, 0
    %1257 = vmatpush.msra.mxu0 0.0
    %1258 = vmatpush.msra.mxu0 0.0
    %1259 = vmatpush.msra.mxu0 0.0
    %1260 = vmatpush.msra.mxu0 0.0
    %1261 = vmatpush.msra.mxu0 0.0
    %1262 = vmatpush.msra.mxu0 0.0
    %1263 = vmatpush.msra.mxu0 0.0
    %1264 = vmatpush.msra.mxu0 0.0
    %1265 = vmatpush.msra.mxu0 %v271
    %1266 = vmatpush.msra.mxu0 %v269
    %1267 = vmatpush.msra.mxu0 %v267
    %1268 = vmatpush.msra.mxu0 %v265
    %1269 = vmatpush.msra.mxu0 %v263
    %1270 = vmatpush.msra.mxu0 %v261
    %1271 = vmatpush.msra.mxu0 %v259
    %1272 = vmatpush.msra.mxu0 %v257
    %1273 = vmatmul.f32.gmra.mxu0 %v1255
    %v1274 = vpop.f32.mrf.mxu0
    %v1275 = vadd.f32 0.0, %v1274
    %1276 = vdwg.mxu0
    %1277 = vmatpush.msra.mxu0 0.0
    %1278 = vmatpush.msra.mxu0 0.0
    %1279 = vmatpush.msra.mxu0 0.0
    %1280 = vmatpush.msra.mxu0 0.0
    %1281 = vmatpush.msra.mxu0 0.0
    %1282 = vmatpush.msra.mxu0 0.0
    %1283 = vmatpush.msra.mxu0 0.0
    %1284 = vmatpush.msra.mxu0 0.0
    %1285 = vmatpush.msra.mxu0 %v272
    %1286 = vmatpush.msra.mxu0 %v270
    %1287 = vmatpush.msra.mxu0 %v268
    %1288 = vmatpush.msra.mxu0 %v266
    %1289 = vmatpush.msra.mxu0 %v264
    %1290 = vmatpush.msra.mxu0 %v262
    %1291 = vmatpush.msra.mxu0 %v260
    %1292 = vmatpush.msra.mxu0 %v258
    %1293 = vmatmul.f32.gmra.mxu0 %v1255
    %v1294 = vpop.f32.mrf.mxu0
    %v1295 = vadd.f32 0.0, %v1294
    %1296 = vdwg.mxu0
    %v1297 = vadd.f32 %v1252, %v1275
    %v1298 = vadd.f32 %v1253, %v1295
    %v1299 = vxor.u32 %v1297, 2147483648
    %v1300 = vxor.u32 %v1298, 2147483648
    %v1301 = vmul.f32 %v1299, 1.442695
    %v1302 = vpow.pop %v1301
    %v1303 = vmul.f32 %v1300, 1.442695
    %v1304 = vpow.pop %v1303
    %v1305 = vadd.f32 %v1302, 1.0
    %v1306 = vadd.f32 %v1304, 1.0
    %v1307 = vrcp.pop %v1305
    %v1308 = vmul.f32 %v1305, %v1307
    %v1309 = vsub.f32 1.0, %v1308
    %v1310 = vmul.f32 %v1307, %v1309
    %v1311 = vadd.f32 %v1307, %v1310
    %vm1312 = vweird.f32 %v1305
    %vm1313 = vweird.f32 %v1307
    %vm1314 = vmor %vm1312, %vm1313
    %v1315 = vsel %vm1314, %v1307, %v1311
    %v1316 = vand.u32 2147483647, %v1305
    %vm1317 = vcmp.eq.f32.partialorder %v1316, 8.507059e+37
    %v1318 = vand.u32 %v1305, 2147483648
    %v1319 = vor.u32 1.1754944e-38, %v1318
    %v1320 = vsel %vm1317, %v1319, %v1315
    %v1321 = vmul.f32 1.0, %v1320
    %v1322 = vrcp.pop %v1306
    %v1323 = vmul.f32 %v1306, %v1322
    %v1324 = vsub.f32 1.0, %v1323
    %v1325 = vmul.f32 %v1322, %v1324
    %v1326 = vadd.f32 %v1322, %v1325
    %vm1327 = vweird.f32 %v1306
    %vm1328 = vweird.f32 %v1322
    %vm1329 = vmor %vm1327, %vm1328
    %v1330 = vsel %vm1329, %v1322, %v1326
    %v1331 = vand.u32 2147483647, %v1306
    %vm1332 = vcmp.eq.f32.partialorder %v1331, 8.507059e+37
    %v1333 = vand.u32 %v1306, 2147483648
    %v1334 = vor.u32 1.1754944e-38, %v1333
    %v1335 = vsel %vm1332, %v1334, %v1330
    %v1336 = vmul.f32 1.0, %v1335
    %v1337 = vtanh.pop %v1298
    %v1338 = vmul.f32 %v1321, %v1043
    %1340 = vrot.lane.b32.xlu0 %v1337, 64
    %v1341 = vpop.permute.xlu0 %1340
    %v1343 = vmul.f32 %v1321, %v1341
    %1345 = vrot.lane.b32.xlu0 %v1343, 64
    %v1346 = vpop.permute.xlu0 %1345
    %v1348 = vadd.f32 %v1338, %v1346
    %v1349 = vtanh.pop %v1348
    %1351 = vrot.lane.b32.xlu0 %v1349, 64
    %v1352 = vpop.permute.xlu0 %1351
    %v1354 = vmul.f32 %v1336, %v1352
    %1356 = vrot.lane.b32.xlu0 %v1150, 64
    %v1357 = vpop.permute.xlu0 %1356
    %v1359 = vsel %vm130, %v1354, %v1357
    %1360 = vmatpush.msra.mxu0 %v405
    %1361 = vmatpush.msra.mxu0 %v403
    %1362 = vmatpush.msra.mxu0 %v401
    %1363 = vmatpush.msra.mxu0 %v399
    %1364 = vmatpush.msra.mxu0 %v397
    %1365 = vmatpush.msra.mxu0 %v395
    %1366 = vmatpush.msra.mxu0 %v393
    %1367 = vmatpush.msra.mxu0 %v391
    %1368 = vmatpush.msra.mxu0 %v389
    %1369 = vmatpush.msra.mxu0 %v387
    %1370 = vmatpush.msra.mxu0 %v385
    %1371 = vmatpush.msra.mxu0 %v383
    %1372 = vmatpush.msra.mxu0 %v381
    %1373 = vmatpush.msra.mxu0 %v379
    %1374 = vmatpush.msra.mxu0 %v377
    %1375 = vmatpush.msra.mxu0 %v375
    %1376 = vmatmul.f32.gmra.mxu0 %v1359
    %v1377 = vpop.f32.mrf.mxu0
    %v1378 = vadd.f32 %v408, %v1377
    %1379 = vdwg.mxu0
    %1380 = vmatpush.msra.mxu0 %v406
    %1381 = vmatpush.msra.mxu0 %v404
    %1382 = vmatpush.msra.mxu0 %v402
    %1383 = vmatpush.msra.mxu0 %v400
    %1384 = vmatpush.msra.mxu0 %v398
    %1385 = vmatpush.msra.mxu0 %v396
    %1386 = vmatpush.msra.mxu0 %v394
    %1387 = vmatpush.msra.mxu0 %v392
    %1388 = vmatpush.msra.mxu0 %v390
    %1389 = vmatpush.msra.mxu0 %v388
    %1390 = vmatpush.msra.mxu0 %v386
    %1391 = vmatpush.msra.mxu0 %v384
    %1392 = vmatpush.msra.mxu0 %v382
    %1393 = vmatpush.msra.mxu0 %v380
    %1394 = vmatpush.msra.mxu0 %v378
    %1395 = vmatpush.msra.mxu0 %v376
    %1396 = vmatmul.f32.gmra.mxu0 %v1359
    %v1397 = vpop.f32.mrf.mxu0
    %v1398 = vadd.f32 %v409, %v1397
    %1399 = vdwg.mxu0
    %v1400 = vxor.u32 %v1378, 2147483648
    %v1401 = vxor.u32 %v1398, 2147483648
    %v1402 = vmul.f32 %v1400, 1.442695
    %v1403 = vpow.pop %v1402
    %v1404 = vmul.f32 %v1401, 1.442695
    %v1405 = vpow.pop %v1404
    %v1406 = vadd.f32 %v1403, 1.0
    %v1407 = vadd.f32 %v1405, 1.0
    %v1408 = vrcp.pop %v1406
    %v1409 = vmul.f32 %v1406, %v1408
    %v1410 = vsub.f32 1.0, %v1409
    %v1411 = vmul.f32 %v1408, %v1410
    %v1412 = vadd.f32 %v1408, %v1411
    %vm1413 = vweird.f32 %v1406
    %vm1414 = vweird.f32 %v1408
    %vm1415 = vmor %vm1413, %vm1414
    %v1416 = vsel %vm1415, %v1408, %v1412
    %v1417 = vand.u32 2147483647, %v1406
    %vm1418 = vcmp.eq.f32.partialorder %v1417, 8.507059e+37
    %v1419 = vand.u32 %v1406, 2147483648
    %v1420 = vor.u32 1.1754944e-38, %v1419
    %v1421 = vsel %vm1418, %v1420, %v1416
    %v1422 = vmul.f32 1.0, %v1421
    %v1423 = vrcp.pop %v1407
    %v1424 = vmul.f32 %v1407, %v1423
    %v1425 = vsub.f32 1.0, %v1424
    %v1426 = vmul.f32 %v1423, %v1425
    %v1427 = vadd.f32 %v1423, %v1426
    %vm1428 = vweird.f32 %v1407
    %vm1429 = vweird.f32 %v1423
    %vm1430 = vmor %vm1428, %vm1429
    %v1431 = vsel %vm1430, %v1423, %v1427
    %v1432 = vand.u32 2147483647, %v1407
    %vm1433 = vcmp.eq.f32.partialorder %v1432, 8.507059e+37
    %v1434 = vand.u32 %v1407, 2147483648
    %v1435 = vor.u32 1.1754944e-38, %v1434
    %v1436 = vsel %vm1433, %v1435, %v1431
    %v1437 = vmul.f32 1.0, %v1436
    %v1438 = vtanh.pop %v1398
    %v1439 = vmul.f32 %v1422, %v1144
    %1441 = vrot.lane.b32.xlu0 %v1438, 64
    %v1442 = vpop.permute.xlu0 %1441
    %v1444 = vmul.f32 %v1422, %v1442
    %1446 = vrot.lane.b32.xlu0 %v1444, 64
    %v1447 = vpop.permute.xlu0 %1446
    %v1449 = vadd.f32 %v1439, %v1447
    %v1450 = vtanh.pop %v1449
    %1452 = vrot.lane.b32.xlu0 %v1450, 64
    %v1453 = vpop.permute.xlu0 %1452
    %v1455 = vmul.f32 %v1437, %v1453
    %1457 = vrot.lane.b32.xlu0 %v1251, 64
    %v1458 = vpop.permute.xlu0 %1457
    %v1460 = vsel %vm130, %v1455, %v1458
    %1461 = vmatpush.msra.mxu0 %v539
    %1462 = vmatpush.msra.mxu0 %v537
    %1463 = vmatpush.msra.mxu0 %v535
    %1464 = vmatpush.msra.mxu0 %v533
    %1465 = vmatpush.msra.mxu0 %v531
    %1466 = vmatpush.msra.mxu0 %v529
    %1467 = vmatpush.msra.mxu0 %v527
    %1468 = vmatpush.msra.mxu0 %v525
    %1469 = vmatpush.msra.mxu0 %v523
    %1470 = vmatpush.msra.mxu0 %v521
    %1471 = vmatpush.msra.mxu0 %v519
    %1472 = vmatpush.msra.mxu0 %v517
    %1473 = vmatpush.msra.mxu0 %v515
    %1474 = vmatpush.msra.mxu0 %v513
    %1475 = vmatpush.msra.mxu0 %v511
    %1476 = vmatpush.msra.mxu0 %v509
    %1477 = vmatmul.f32.gmra.mxu0 %v1460
    %v1478 = vpop.f32.mrf.mxu0
    %v1479 = vadd.f32 %v542, %v1478
    %1480 = vdwg.mxu0
    %1481 = vmatpush.msra.mxu0 %v540
    %1482 = vmatpush.msra.mxu0 %v538
    %1483 = vmatpush.msra.mxu0 %v536
    %1484 = vmatpush.msra.mxu0 %v534
    %1485 = vmatpush.msra.mxu0 %v532
    %1486 = vmatpush.msra.mxu0 %v530
    %1487 = vmatpush.msra.mxu0 %v528
    %1488 = vmatpush.msra.mxu0 %v526
    %1489 = vmatpush.msra.mxu0 %v524
    %1490 = vmatpush.msra.mxu0 %v522
    %1491 = vmatpush.msra.mxu0 %v520
    %1492 = vmatpush.msra.mxu0 %v518
    %1493 = vmatpush.msra.mxu0 %v516
    %1494 = vmatpush.msra.mxu0 %v514
    %1495 = vmatpush.msra.mxu0 %v512
    %1496 = vmatpush.msra.mxu0 %v510
    %1497 = vmatmul.f32.gmra.mxu0 %v1460
    %v1498 = vpop.f32.mrf.mxu0
    %v1499 = vadd.f32 %v543, %v1498
    %1500 = vdwg.mxu0
    %v1501 = vxor.u32 %v1479, 2147483648
    %v1502 = vxor.u32 %v1499, 2147483648
    %v1503 = vmul.f32 %v1501, 1.442695
    %v1504 = vpow.pop %v1503
    %v1505 = vmul.f32 %v1502, 1.442695
    %v1506 = vpow.pop %v1505
    %v1507 = vadd.f32 %v1504, 1.0
    %v1508 = vadd.f32 %v1506, 1.0
    %v1509 = vrcp.pop %v1507
    %v1510 = vmul.f32 %v1507, %v1509
    %v1511 = vsub.f32 1.0, %v1510
    %v1512 = vmul.f32 %v1509, %v1511
    %v1513 = vadd.f32 %v1509, %v1512
    %vm1514 = vweird.f32 %v1507
    %vm1515 = vweird.f32 %v1509
    %vm1516 = vmor %vm1514, %vm1515
    %v1517 = vsel %vm1516, %v1509, %v1513
    %v1518 = vand.u32 2147483647, %v1507
    %vm1519 = vcmp.eq.f32.partialorder %v1518, 8.507059e+37
    %v1520 = vand.u32 %v1507, 2147483648
    %v1521 = vor.u32 1.1754944e-38, %v1520
    %v1522 = vsel %vm1519, %v1521, %v1517
    %v1523 = vmul.f32 1.0, %v1522
    %v1524 = vrcp.pop %v1508
    %v1525 = vmul.f32 %v1508, %v1524
    %v1526 = vsub.f32 1.0, %v1525
    %v1527 = vmul.f32 %v1524, %v1526
    %v1528 = vadd.f32 %v1524, %v1527
    %vm1529 = vweird.f32 %v1508
    %vm1530 = vweird.f32 %v1524
    %vm1531 = vmor %vm1529, %vm1530
    %v1532 = vsel %vm1531, %v1524, %v1528
    %v1533 = vand.u32 2147483647, %v1508
    %vm1534 = vcmp.eq.f32.partialorder %v1533, 8.507059e+37
    %v1535 = vand.u32 %v1508, 2147483648
    %v1536 = vor.u32 1.1754944e-38, %v1535
    %v1537 = vsel %vm1534, %v1536, %v1532
    %v1538 = vmul.f32 1.0, %v1537
    %v1539 = vtanh.pop %v1499
    %v1540 = vmul.f32 %v1523, %v1245
    %1542 = vrot.lane.b32.xlu0 %v1539, 64
    %v1543 = vpop.permute.xlu0 %1542
    %v1545 = vmul.f32 %v1523, %v1543
    %1547 = vrot.lane.b32.xlu0 %v1545, 64
    %v1548 = vpop.permute.xlu0 %1547
    %v1550 = vadd.f32 %v1540, %v1548
    %v1551 = vtanh.pop %v1550
    %1553 = vrot.lane.b32.xlu0 %v1551, 64
    %v1554 = vpop.permute.xlu0 %1553
    %v1556 = vmul.f32 %v1538, %v1554
    %v1557 = vld [vmem:[#allocation2 + $0x40] sm:$0xff]
    %v1558 = vld [vmem:[#allocation2 + $0x48] sm:$0xff]
    %v1560 = vsel %vm130, %v1354, 0
    %1562 = vmatpush.msra.mxu0 0.0
    %1563 = vmatpush.msra.mxu0 0.0
    %1564 = vmatpush.msra.mxu0 0.0
    %1565 = vmatpush.msra.mxu0 0.0
    %1566 = vmatpush.msra.mxu0 0.0
    %1567 = vmatpush.msra.mxu0 0.0
    %1568 = vmatpush.msra.mxu0 0.0
    %1569 = vmatpush.msra.mxu0 0.0
    %1570 = vmatpush.msra.mxu0 %v271
    %1571 = vmatpush.msra.mxu0 %v269
    %1572 = vmatpush.msra.mxu0 %v267
    %1573 = vmatpush.msra.mxu0 %v265
    %1574 = vmatpush.msra.mxu0 %v263
    %1575 = vmatpush.msra.mxu0 %v261
    %1576 = vmatpush.msra.mxu0 %v259
    %1577 = vmatpush.msra.mxu0 %v257
    %1578 = vmatmul.f32.gmra.mxu0 %v1560
    %v1579 = vpop.f32.mrf.mxu0
    %v1580 = vadd.f32 0.0, %v1579
    %1581 = vdwg.mxu0
    %1582 = vmatpush.msra.mxu0 0.0
    %1583 = vmatpush.msra.mxu0 0.0
    %1584 = vmatpush.msra.mxu0 0.0
    %1585 = vmatpush.msra.mxu0 0.0
    %1586 = vmatpush.msra.mxu0 0.0
    %1587 = vmatpush.msra.mxu0 0.0
    %1588 = vmatpush.msra.mxu0 0.0
    %1589 = vmatpush.msra.mxu0 0.0
    %1590 = vmatpush.msra.mxu0 %v272
    %1591 = vmatpush.msra.mxu0 %v270
    %1592 = vmatpush.msra.mxu0 %v268
    %1593 = vmatpush.msra.mxu0 %v266
    %1594 = vmatpush.msra.mxu0 %v264
    %1595 = vmatpush.msra.mxu0 %v262
    %1596 = vmatpush.msra.mxu0 %v260
    %1597 = vmatpush.msra.mxu0 %v258
    %1598 = vmatmul.f32.gmra.mxu0 %v1560
    %v1599 = vpop.f32.mrf.mxu0
    %v1600 = vadd.f32 0.0, %v1599
    %1601 = vdwg.mxu0
    %v1602 = vadd.f32 %v1557, %v1580
    %v1603 = vadd.f32 %v1558, %v1600
    %v1604 = vxor.u32 %v1602, 2147483648
    %v1605 = vxor.u32 %v1603, 2147483648
    %v1606 = vmul.f32 %v1604, 1.442695
    %v1607 = vpow.pop %v1606
    %v1608 = vmul.f32 %v1605, 1.442695
    %v1609 = vpow.pop %v1608
    %v1610 = vadd.f32 %v1607, 1.0
    %v1611 = vadd.f32 %v1609, 1.0
    %v1612 = vrcp.pop %v1610
    %v1613 = vmul.f32 %v1610, %v1612
    %v1614 = vsub.f32 1.0, %v1613
    %v1615 = vmul.f32 %v1612, %v1614
    %v1616 = vadd.f32 %v1612, %v1615
    %vm1617 = vweird.f32 %v1610
    %vm1618 = vweird.f32 %v1612
    %vm1619 = vmor %vm1617, %vm1618
    %v1620 = vsel %vm1619, %v1612, %v1616
    %v1621 = vand.u32 2147483647, %v1610
    %vm1622 = vcmp.eq.f32.partialorder %v1621, 8.507059e+37
    %v1623 = vand.u32 %v1610, 2147483648
    %v1624 = vor.u32 1.1754944e-38, %v1623
    %v1625 = vsel %vm1622, %v1624, %v1620
    %v1626 = vmul.f32 1.0, %v1625
    %v1627 = vrcp.pop %v1611
    %v1628 = vmul.f32 %v1611, %v1627
    %v1629 = vsub.f32 1.0, %v1628
    %v1630 = vmul.f32 %v1627, %v1629
    %v1631 = vadd.f32 %v1627, %v1630
    %vm1632 = vweird.f32 %v1611
    %vm1633 = vweird.f32 %v1627
    %vm1634 = vmor %vm1632, %vm1633
    %v1635 = vsel %vm1634, %v1627, %v1631
    %v1636 = vand.u32 2147483647, %v1611
    %vm1637 = vcmp.eq.f32.partialorder %v1636, 8.507059e+37
    %v1638 = vand.u32 %v1611, 2147483648
    %v1639 = vor.u32 1.1754944e-38, %v1638
    %v1640 = vsel %vm1637, %v1639, %v1635
    %v1641 = vmul.f32 1.0, %v1640
    %v1642 = vtanh.pop %v1603
    %v1643 = vmul.f32 %v1626, %v1348
    %1645 = vrot.lane.b32.xlu0 %v1642, 64
    %v1646 = vpop.permute.xlu0 %1645
    %v1648 = vmul.f32 %v1626, %v1646
    %1650 = vrot.lane.b32.xlu0 %v1648, 64
    %v1651 = vpop.permute.xlu0 %1650
    %v1653 = vadd.f32 %v1643, %v1651
    %v1654 = vtanh.pop %v1653
    %1656 = vrot.lane.b32.xlu0 %v1654, 64
    %v1657 = vpop.permute.xlu0 %1656
    %v1659 = vmul.f32 %v1641, %v1657
    %1661 = vrot.lane.b32.xlu0 %v1455, 64
    %v1662 = vpop.permute.xlu0 %1661
    %v1664 = vsel %vm130, %v1659, %v1662
    %1665 = vmatpush.msra.mxu0 %v405
    %1666 = vmatpush.msra.mxu0 %v403
    %1667 = vmatpush.msra.mxu0 %v401
    %1668 = vmatpush.msra.mxu0 %v399
    %1669 = vmatpush.msra.mxu0 %v397
    %1670 = vmatpush.msra.mxu0 %v395
    %1671 = vmatpush.msra.mxu0 %v393
    %1672 = vmatpush.msra.mxu0 %v391
    %1673 = vmatpush.msra.mxu0 %v389
    %1674 = vmatpush.msra.mxu0 %v387
    %1675 = vmatpush.msra.mxu0 %v385
    %1676 = vmatpush.msra.mxu0 %v383
    %1677 = vmatpush.msra.mxu0 %v381
    %1678 = vmatpush.msra.mxu0 %v379
    %1679 = vmatpush.msra.mxu0 %v377
    %1680 = vmatpush.msra.mxu0 %v375
    %1681 = vmatmul.f32.gmra.mxu0 %v1664
    %v1682 = vpop.f32.mrf.mxu0
    %v1683 = vadd.f32 %v408, %v1682
    %1684 = vdwg.mxu0
    %1685 = vmatpush.msra.mxu0 %v406
    %1686 = vmatpush.msra.mxu0 %v404
    %1687 = vmatpush.msra.mxu0 %v402
    %1688 = vmatpush.msra.mxu0 %v400
    %1689 = vmatpush.msra.mxu0 %v398
    %1690 = vmatpush.msra.mxu0 %v396
    %1691 = vmatpush.msra.mxu0 %v394
    %1692 = vmatpush.msra.mxu0 %v392
    %1693 = vmatpush.msra.mxu0 %v390
    %1694 = vmatpush.msra.mxu0 %v388
    %1695 = vmatpush.msra.mxu0 %v386
    %1696 = vmatpush.msra.mxu0 %v384
    %1697 = vmatpush.msra.mxu0 %v382
    %1698 = vmatpush.msra.mxu0 %v380
    %1699 = vmatpush.msra.mxu0 %v378
    %1700 = vmatpush.msra.mxu0 %v376
    %1701 = vmatmul.f32.gmra.mxu0 %v1664
    %v1702 = vpop.f32.mrf.mxu0
    %v1703 = vadd.f32 %v409, %v1702
    %1704 = vdwg.mxu0
    %v1705 = vxor.u32 %v1683, 2147483648
    %v1706 = vxor.u32 %v1703, 2147483648
    %v1707 = vmul.f32 %v1705, 1.442695
    %v1708 = vpow.pop %v1707
    %v1709 = vmul.f32 %v1706, 1.442695
    %v1710 = vpow.pop %v1709
    %v1711 = vadd.f32 %v1708, 1.0
    %v1712 = vadd.f32 %v1710, 1.0
    %v1713 = vrcp.pop %v1711
    %v1714 = vmul.f32 %v1711, %v1713
    %v1715 = vsub.f32 1.0, %v1714
    %v1716 = vmul.f32 %v1713, %v1715
    %v1717 = vadd.f32 %v1713, %v1716
    %vm1718 = vweird.f32 %v1711
    %vm1719 = vweird.f32 %v1713
    %vm1720 = vmor %vm1718, %vm1719
    %v1721 = vsel %vm1720, %v1713, %v1717
    %v1722 = vand.u32 2147483647, %v1711
    %vm1723 = vcmp.eq.f32.partialorder %v1722, 8.507059e+37
    %v1724 = vand.u32 %v1711, 2147483648
    %v1725 = vor.u32 1.1754944e-38, %v1724
    %v1726 = vsel %vm1723, %v1725, %v1721
    %v1727 = vmul.f32 1.0, %v1726
    %v1728 = vrcp.pop %v1712
    %v1729 = vmul.f32 %v1712, %v1728
    %v1730 = vsub.f32 1.0, %v1729
    %v1731 = vmul.f32 %v1728, %v1730
    %v1732 = vadd.f32 %v1728, %v1731
    %vm1733 = vweird.f32 %v1712
    %vm1734 = vweird.f32 %v1728
    %vm1735 = vmor %vm1733, %vm1734
    %v1736 = vsel %vm1735, %v1728, %v1732
    %v1737 = vand.u32 2147483647, %v1712
    %vm1738 = vcmp.eq.f32.partialorder %v1737, 8.507059e+37
    %v1739 = vand.u32 %v1712, 2147483648
    %v1740 = vor.u32 1.1754944e-38, %v1739
    %v1741 = vsel %vm1738, %v1740, %v1736
    %v1742 = vmul.f32 1.0, %v1741
    %v1743 = vtanh.pop %v1703
    %v1744 = vmul.f32 %v1727, %v1449
    %1746 = vrot.lane.b32.xlu0 %v1743, 64
    %v1747 = vpop.permute.xlu0 %1746
    %v1749 = vmul.f32 %v1727, %v1747
    %1751 = vrot.lane.b32.xlu0 %v1749, 64
    %v1752 = vpop.permute.xlu0 %1751
    %v1754 = vadd.f32 %v1744, %v1752
    %v1755 = vtanh.pop %v1754
    %1757 = vrot.lane.b32.xlu0 %v1755, 64
    %v1758 = vpop.permute.xlu0 %1757
    %v1760 = vmul.f32 %v1742, %v1758
    %1762 = vrot.lane.b32.xlu0 %v1556, 64
    %v1763 = vpop.permute.xlu0 %1762
    %v1765 = vsel %vm130, %v1760, %v1763
    %1766 = vmatpush.msra.mxu0 %v539
    %1767 = vmatpush.msra.mxu0 %v537
    %1768 = vmatpush.msra.mxu0 %v535
    %1769 = vmatpush.msra.mxu0 %v533
    %1770 = vmatpush.msra.mxu0 %v531
    %1771 = vmatpush.msra.mxu0 %v529
    %1772 = vmatpush.msra.mxu0 %v527
    %1773 = vmatpush.msra.mxu0 %v525
    %1774 = vmatpush.msra.mxu0 %v523
    %1775 = vmatpush.msra.mxu0 %v521
    %1776 = vmatpush.msra.mxu0 %v519
    %1777 = vmatpush.msra.mxu0 %v517
    %1778 = vmatpush.msra.mxu0 %v515
    %1779 = vmatpush.msra.mxu0 %v513
    %1780 = vmatpush.msra.mxu0 %v511
    %1781 = vmatpush.msra.mxu0 %v509
    %1782 = vmatmul.f32.gmra.mxu0 %v1765
    %v1783 = vpop.f32.mrf.mxu0
    %v1784 = vadd.f32 %v542, %v1783
    %1785 = vdwg.mxu0
    %1786 = vmatpush.msra.mxu0 %v540
    %1787 = vmatpush.msra.mxu0 %v538
    %1788 = vmatpush.msra.mxu0 %v536
    %1789 = vmatpush.msra.mxu0 %v534
    %1790 = vmatpush.msra.mxu0 %v532
    %1791 = vmatpush.msra.mxu0 %v530
    %1792 = vmatpush.msra.mxu0 %v528
    %1793 = vmatpush.msra.mxu0 %v526
    %1794 = vmatpush.msra.mxu0 %v524
    %1795 = vmatpush.msra.mxu0 %v522
    %1796 = vmatpush.msra.mxu0 %v520
    %1797 = vmatpush.msra.mxu0 %v518
    %1798 = vmatpush.msra.mxu0 %v516
    %1799 = vmatpush.msra.mxu0 %v514
    %1800 = vmatpush.msra.mxu0 %v512
    %1801 = vmatpush.msra.mxu0 %v510
    %1802 = vmatmul.f32.gmra.mxu0 %v1765
    %v1803 = vpop.f32.mrf.mxu0
    %v1804 = vadd.f32 %v543, %v1803
    %1805 = vdwg.mxu0
    %v1806 = vxor.u32 %v1784, 2147483648
    %v1807 = vxor.u32 %v1804, 2147483648
    %v1808 = vmul.f32 %v1806, 1.442695
    %v1809 = vpow.pop %v1808
    %v1810 = vmul.f32 %v1807, 1.442695
    %v1811 = vpow.pop %v1810
    %v1812 = vadd.f32 %v1809, 1.0
    %v1813 = vadd.f32 %v1811, 1.0
    %v1814 = vrcp.pop %v1812
    %v1815 = vmul.f32 %v1812, %v1814
    %v1816 = vsub.f32 1.0, %v1815
    %v1817 = vmul.f32 %v1814, %v1816
    %v1818 = vadd.f32 %v1814, %v1817
    %vm1819 = vweird.f32 %v1812
    %vm1820 = vweird.f32 %v1814
    %vm1821 = vmor %vm1819, %vm1820
    %v1822 = vsel %vm1821, %v1814, %v1818
    %v1823 = vand.u32 2147483647, %v1812
    %vm1824 = vcmp.eq.f32.partialorder %v1823, 8.507059e+37
    %v1825 = vand.u32 %v1812, 2147483648
    %v1826 = vor.u32 1.1754944e-38, %v1825
    %v1827 = vsel %vm1824, %v1826, %v1822
    %v1828 = vmul.f32 1.0, %v1827
    %v1829 = vrcp.pop %v1813
    %v1830 = vmul.f32 %v1813, %v1829
    %v1831 = vsub.f32 1.0, %v1830
    %v1832 = vmul.f32 %v1829, %v1831
    %v1833 = vadd.f32 %v1829, %v1832
    %vm1834 = vweird.f32 %v1813
    %vm1835 = vweird.f32 %v1829
    %vm1836 = vmor %vm1834, %vm1835
    %v1837 = vsel %vm1836, %v1829, %v1833
    %v1838 = vand.u32 2147483647, %v1813
    %vm1839 = vcmp.eq.f32.partialorder %v1838, 8.507059e+37
    %v1840 = vand.u32 %v1813, 2147483648
    %v1841 = vor.u32 1.1754944e-38, %v1840
    %v1842 = vsel %vm1839, %v1841, %v1837
    %v1843 = vmul.f32 1.0, %v1842
    %v1844 = vtanh.pop %v1804
    %v1845 = vmul.f32 %v1828, %v1550
    %1847 = vrot.lane.b32.xlu0 %v1844, 64
    %v1848 = vpop.permute.xlu0 %1847
    %v1850 = vmul.f32 %v1828, %v1848
    %1852 = vrot.lane.b32.xlu0 %v1850, 64
    %v1853 = vpop.permute.xlu0 %1852
    %v1855 = vadd.f32 %v1845, %v1853
    %v1856 = vtanh.pop %v1855
    %1858 = vrot.lane.b32.xlu0 %v1856, 64
    %v1859 = vpop.permute.xlu0 %1858
    %v1861 = vmul.f32 %v1843, %v1859
    %v1862 = vld [vmem:[#allocation2 + $0x50] sm:$0xff]
    %v1863 = vld [vmem:[#allocation2 + $0x58] sm:$0xff]
    %v1865 = vsel %vm130, %v1659, 0
    %1867 = vmatpush.msra.mxu0 0.0
    %1868 = vmatpush.msra.mxu0 0.0
    %1869 = vmatpush.msra.mxu0 0.0
    %1870 = vmatpush.msra.mxu0 0.0
    %1871 = vmatpush.msra.mxu0 0.0
    %1872 = vmatpush.msra.mxu0 0.0
    %1873 = vmatpush.msra.mxu0 0.0
    %1874 = vmatpush.msra.mxu0 0.0
    %1875 = vmatpush.msra.mxu0 %v271
    %1876 = vmatpush.msra.mxu0 %v269
    %1877 = vmatpush.msra.mxu0 %v267
    %1878 = vmatpush.msra.mxu0 %v265
    %1879 = vmatpush.msra.mxu0 %v263
    %1880 = vmatpush.msra.mxu0 %v261
    %1881 = vmatpush.msra.mxu0 %v259
    %1882 = vmatpush.msra.mxu0 %v257
    %1883 = vmatmul.f32.gmra.mxu0 %v1865
    %v1884 = vpop.f32.mrf.mxu0
    %v1885 = vadd.f32 0.0, %v1884
    %1886 = vdwg.mxu0
    %1887 = vmatpush.msra.mxu0 0.0
    %1888 = vmatpush.msra.mxu0 0.0
    %1889 = vmatpush.msra.mxu0 0.0
    %1890 = vmatpush.msra.mxu0 0.0
    %1891 = vmatpush.msra.mxu0 0.0
    %1892 = vmatpush.msra.mxu0 0.0
    %1893 = vmatpush.msra.mxu0 0.0
    %1894 = vmatpush.msra.mxu0 0.0
    %1895 = vmatpush.msra.mxu0 %v272
    %1896 = vmatpush.msra.mxu0 %v270
    %1897 = vmatpush.msra.mxu0 %v268
    %1898 = vmatpush.msra.mxu0 %v266
    %1899 = vmatpush.msra.mxu0 %v264
    %1900 = vmatpush.msra.mxu0 %v262
    %1901 = vmatpush.msra.mxu0 %v260
    %1902 = vmatpush.msra.mxu0 %v258
    %1903 = vmatmul.f32.gmra.mxu0 %v1865
    %v1904 = vpop.f32.mrf.mxu0
    %v1905 = vadd.f32 0.0, %v1904
    %1906 = vdwg.mxu0
    %v1907 = vadd.f32 %v1862, %v1885
    %v1908 = vadd.f32 %v1863, %v1905
    %v1909 = vxor.u32 %v1907, 2147483648
    %v1910 = vxor.u32 %v1908, 2147483648
    %v1911 = vmul.f32 %v1909, 1.442695
    %v1912 = vpow.pop %v1911
    %v1913 = vmul.f32 %v1910, 1.442695
    %v1914 = vpow.pop %v1913
    %v1915 = vadd.f32 %v1912, 1.0
    %v1916 = vadd.f32 %v1914, 1.0
    %v1917 = vrcp.pop %v1915
    %v1918 = vmul.f32 %v1915, %v1917
    %v1919 = vsub.f32 1.0, %v1918
    %v1920 = vmul.f32 %v1917, %v1919
    %v1921 = vadd.f32 %v1917, %v1920
    %vm1922 = vweird.f32 %v1915
    %vm1923 = vweird.f32 %v1917
    %vm1924 = vmor %vm1922, %vm1923
    %v1925 = vsel %vm1924, %v1917, %v1921
    %v1926 = vand.u32 2147483647, %v1915
    %vm1927 = vcmp.eq.f32.partialorder %v1926, 8.507059e+37
    %v1928 = vand.u32 %v1915, 2147483648
    %v1929 = vor.u32 1.1754944e-38, %v1928
    %v1930 = vsel %vm1927, %v1929, %v1925
    %v1931 = vmul.f32 1.0, %v1930
    %v1932 = vrcp.pop %v1916
    %v1933 = vmul.f32 %v1916, %v1932
    %v1934 = vsub.f32 1.0, %v1933
    %v1935 = vmul.f32 %v1932, %v1934
    %v1936 = vadd.f32 %v1932, %v1935
    %vm1937 = vweird.f32 %v1916
    %vm1938 = vweird.f32 %v1932
    %vm1939 = vmor %vm1937, %vm1938
    %v1940 = vsel %vm1939, %v1932, %v1936
    %v1941 = vand.u32 2147483647, %v1916
    %vm1942 = vcmp.eq.f32.partialorder %v1941, 8.507059e+37
    %v1943 = vand.u32 %v1916, 2147483648
    %v1944 = vor.u32 1.1754944e-38, %v1943
    %v1945 = vsel %vm1942, %v1944, %v1940
    %v1946 = vmul.f32 1.0, %v1945
    %v1947 = vtanh.pop %v1908
    %v1948 = vmul.f32 %v1931, %v1653
    %1950 = vrot.lane.b32.xlu0 %v1947, 64
    %v1951 = vpop.permute.xlu0 %1950
    %v1953 = vmul.f32 %v1931, %v1951
    %1955 = vrot.lane.b32.xlu0 %v1953, 64
    %v1956 = vpop.permute.xlu0 %1955
    %v1958 = vadd.f32 %v1948, %v1956
    %v1959 = vtanh.pop %v1958
    %1961 = vrot.lane.b32.xlu0 %v1959, 64
    %v1962 = vpop.permute.xlu0 %1961
    %v1964 = vmul.f32 %v1946, %v1962
    %1966 = vrot.lane.b32.xlu0 %v1760, 64
    %v1967 = vpop.permute.xlu0 %1966
    %v1969 = vsel %vm130, %v1964, %v1967
    %1970 = vmatpush.msra.mxu0 %v405
    %1971 = vmatpush.msra.mxu0 %v403
    %1972 = vmatpush.msra.mxu0 %v401
    %1973 = vmatpush.msra.mxu0 %v399
    %1974 = vmatpush.msra.mxu0 %v397
    %1975 = vmatpush.msra.mxu0 %v395
    %1976 = vmatpush.msra.mxu0 %v393
    %1977 = vmatpush.msra.mxu0 %v391
    %1978 = vmatpush.msra.mxu0 %v389
    %1979 = vmatpush.msra.mxu0 %v387
    %1980 = vmatpush.msra.mxu0 %v385
    %1981 = vmatpush.msra.mxu0 %v383
    %1982 = vmatpush.msra.mxu0 %v381
    %1983 = vmatpush.msra.mxu0 %v379
    %1984 = vmatpush.msra.mxu0 %v377
    %1985 = vmatpush.msra.mxu0 %v375
    %1986 = vmatmul.f32.gmra.mxu0 %v1969
    %v1987 = vpop.f32.mrf.mxu0
    %v1988 = vadd.f32 %v408, %v1987
    %1989 = vdwg.mxu0
    %1990 = vmatpush.msra.mxu0 %v406
    %1991 = vmatpush.msra.mxu0 %v404
    %1992 = vmatpush.msra.mxu0 %v402
    %1993 = vmatpush.msra.mxu0 %v400
    %1994 = vmatpush.msra.mxu0 %v398
    %1995 = vmatpush.msra.mxu0 %v396
    %1996 = vmatpush.msra.mxu0 %v394
    %1997 = vmatpush.msra.mxu0 %v392
    %1998 = vmatpush.msra.mxu0 %v390
    %1999 = vmatpush.msra.mxu0 %v388
    %2000 = vmatpush.msra.mxu0 %v386
    %2001 = vmatpush.msra.mxu0 %v384
    %2002 = vmatpush.msra.mxu0 %v382
    %2003 = vmatpush.msra.mxu0 %v380
    %2004 = vmatpush.msra.mxu0 %v378
    %2005 = vmatpush.msra.mxu0 %v376
    %2006 = vmatmul.f32.gmra.mxu0 %v1969
    %v2007 = vpop.f32.mrf.mxu0
    %v2008 = vadd.f32 %v409, %v2007
    %2009 = vdwg.mxu0
    %v2010 = vxor.u32 %v1988, 2147483648
    %v2011 = vxor.u32 %v2008, 2147483648
    %v2012 = vmul.f32 %v2010, 1.442695
    %v2013 = vpow.pop %v2012
    %v2014 = vmul.f32 %v2011, 1.442695
    %v2015 = vpow.pop %v2014
    %v2016 = vadd.f32 %v2013, 1.0
    %v2017 = vadd.f32 %v2015, 1.0
    %v2018 = vrcp.pop %v2016
    %v2019 = vmul.f32 %v2016, %v2018
    %v2020 = vsub.f32 1.0, %v2019
    %v2021 = vmul.f32 %v2018, %v2020
    %v2022 = vadd.f32 %v2018, %v2021
    %vm2023 = vweird.f32 %v2016
    %vm2024 = vweird.f32 %v2018
    %vm2025 = vmor %vm2023, %vm2024
    %v2026 = vsel %vm2025, %v2018, %v2022
    %v2027 = vand.u32 2147483647, %v2016
    %vm2028 = vcmp.eq.f32.partialorder %v2027, 8.507059e+37
    %v2029 = vand.u32 %v2016, 2147483648
    %v2030 = vor.u32 1.1754944e-38, %v2029
    %v2031 = vsel %vm2028, %v2030, %v2026
    %v2032 = vmul.f32 1.0, %v2031
    %v2033 = vrcp.pop %v2017
    %v2034 = vmul.f32 %v2017, %v2033
    %v2035 = vsub.f32 1.0, %v2034
    %v2036 = vmul.f32 %v2033, %v2035
    %v2037 = vadd.f32 %v2033, %v2036
    %vm2038 = vweird.f32 %v2017
    %vm2039 = vweird.f32 %v2033
    %vm2040 = vmor %vm2038, %vm2039
    %v2041 = vsel %vm2040, %v2033, %v2037
    %v2042 = vand.u32 2147483647, %v2017
    %vm2043 = vcmp.eq.f32.partialorder %v2042, 8.507059e+37
    %v2044 = vand.u32 %v2017, 2147483648
    %v2045 = vor.u32 1.1754944e-38, %v2044
    %v2046 = vsel %vm2043, %v2045, %v2041
    %v2047 = vmul.f32 1.0, %v2046
    %v2048 = vtanh.pop %v2008
    %v2049 = vmul.f32 %v2032, %v1754
    %2051 = vrot.lane.b32.xlu0 %v2048, 64
    %v2052 = vpop.permute.xlu0 %2051
    %v2054 = vmul.f32 %v2032, %v2052
    %2056 = vrot.lane.b32.xlu0 %v2054, 64
    %v2057 = vpop.permute.xlu0 %2056
    %v2059 = vadd.f32 %v2049, %v2057
    %v2060 = vtanh.pop %v2059
    %2062 = vrot.lane.b32.xlu0 %v2060, 64
    %v2063 = vpop.permute.xlu0 %2062
    %v2065 = vmul.f32 %v2047, %v2063
    %2067 = vrot.lane.b32.xlu0 %v1861, 64
    %v2068 = vpop.permute.xlu0 %2067
    %v2070 = vsel %vm130, %v2065, %v2068
    %2071 = vmatpush.msra.mxu0 %v539
    %2072 = vmatpush.msra.mxu0 %v537
    %2073 = vmatpush.msra.mxu0 %v535
    %2074 = vmatpush.msra.mxu0 %v533
    %2075 = vmatpush.msra.mxu0 %v531
    %2076 = vmatpush.msra.mxu0 %v529
    %2077 = vmatpush.msra.mxu0 %v527
    %2078 = vmatpush.msra.mxu0 %v525
    %2079 = vmatpush.msra.mxu0 %v523
    %2080 = vmatpush.msra.mxu0 %v521
    %2081 = vmatpush.msra.mxu0 %v519
    %2082 = vmatpush.msra.mxu0 %v517
    %2083 = vmatpush.msra.mxu0 %v515
    %2084 = vmatpush.msra.mxu0 %v513
    %2085 = vmatpush.msra.mxu0 %v511
    %2086 = vmatpush.msra.mxu0 %v509
    %2087 = vmatmul.f32.gmra.mxu0 %v2070
    %v2088 = vpop.f32.mrf.mxu0
    %v2089 = vadd.f32 %v542, %v2088
    %2090 = vdwg.mxu0
    %2091 = vmatpush.msra.mxu0 %v540
    %2092 = vmatpush.msra.mxu0 %v538
    %2093 = vmatpush.msra.mxu0 %v536
    %2094 = vmatpush.msra.mxu0 %v534
    %2095 = vmatpush.msra.mxu0 %v532
    %2096 = vmatpush.msra.mxu0 %v530
    %2097 = vmatpush.msra.mxu0 %v528
    %2098 = vmatpush.msra.mxu0 %v526
    %2099 = vmatpush.msra.mxu0 %v524
    %2100 = vmatpush.msra.mxu0 %v522
    %2101 = vmatpush.msra.mxu0 %v520
    %2102 = vmatpush.msra.mxu0 %v518
    %2103 = vmatpush.msra.mxu0 %v516
    %2104 = vmatpush.msra.mxu0 %v514
    %2105 = vmatpush.msra.mxu0 %v512
    %2106 = vmatpush.msra.mxu0 %v510
    %2107 = vmatmul.f32.gmra.mxu0 %v2070
    %v2108 = vpop.f32.mrf.mxu0
    %v2109 = vadd.f32 %v543, %v2108
    %2110 = vdwg.mxu0
    %v2111 = vxor.u32 %v2089, 2147483648
    %v2112 = vxor.u32 %v2109, 2147483648
    %v2113 = vmul.f32 %v2111, 1.442695
    %v2114 = vpow.pop %v2113
    %v2115 = vmul.f32 %v2112, 1.442695
    %v2116 = vpow.pop %v2115
    %v2117 = vadd.f32 %v2114, 1.0
    %v2118 = vadd.f32 %v2116, 1.0
    %v2119 = vrcp.pop %v2117
    %v2120 = vmul.f32 %v2117, %v2119
    %v2121 = vsub.f32 1.0, %v2120
    %v2122 = vmul.f32 %v2119, %v2121
    %v2123 = vadd.f32 %v2119, %v2122
    %vm2124 = vweird.f32 %v2117
    %vm2125 = vweird.f32 %v2119
    %vm2126 = vmor %vm2124, %vm2125
    %v2127 = vsel %vm2126, %v2119, %v2123
    %v2128 = vand.u32 2147483647, %v2117
    %vm2129 = vcmp.eq.f32.partialorder %v2128, 8.507059e+37
    %v2130 = vand.u32 %v2117, 2147483648
    %v2131 = vor.u32 1.1754944e-38, %v2130
    %v2132 = vsel %vm2129, %v2131, %v2127
    %v2133 = vmul.f32 1.0, %v2132
    %v2134 = vrcp.pop %v2118
    %v2135 = vmul.f32 %v2118, %v2134
    %v2136 = vsub.f32 1.0, %v2135
    %v2137 = vmul.f32 %v2134, %v2136
    %v2138 = vadd.f32 %v2134, %v2137
    %vm2139 = vweird.f32 %v2118
    %vm2140 = vweird.f32 %v2134
    %vm2141 = vmor %vm2139, %vm2140
    %v2142 = vsel %vm2141, %v2134, %v2138
    %v2143 = vand.u32 2147483647, %v2118
    %vm2144 = vcmp.eq.f32.partialorder %v2143, 8.507059e+37
    %v2145 = vand.u32 %v2118, 2147483648
    %v2146 = vor.u32 1.1754944e-38, %v2145
    %v2147 = vsel %vm2144, %v2146, %v2142
    %v2148 = vmul.f32 1.0, %v2147
    %v2149 = vtanh.pop %v2109
    %v2150 = vmul.f32 %v2133, %v1855
    %2152 = vrot.lane.b32.xlu0 %v2149, 64
    %v2153 = vpop.permute.xlu0 %2152
    %v2155 = vmul.f32 %v2133, %v2153
    %2157 = vrot.lane.b32.xlu0 %v2155, 64
    %v2158 = vpop.permute.xlu0 %2157
    %v2160 = vadd.f32 %v2150, %v2158
    %v2161 = vtanh.pop %v2160
    %2163 = vrot.lane.b32.xlu0 %v2161, 64
    %v2164 = vpop.permute.xlu0 %2163
    %v2166 = vmul.f32 %v2148, %v2164
    %v2167 = vld [vmem:[#allocation2 + $0x60] sm:$0xff]
    %v2168 = vld [vmem:[#allocation2 + $0x68] sm:$0xff]
    %v2170 = vsel %vm130, %v1964, 0
    %2172 = vmatpush.msra.mxu0 0.0
    %2173 = vmatpush.msra.mxu0 0.0
    %2174 = vmatpush.msra.mxu0 0.0
    %2175 = vmatpush.msra.mxu0 0.0
    %2176 = vmatpush.msra.mxu0 0.0
    %2177 = vmatpush.msra.mxu0 0.0
    %2178 = vmatpush.msra.mxu0 0.0
    %2179 = vmatpush.msra.mxu0 0.0
    %2180 = vmatpush.msra.mxu0 %v271
    %2181 = vmatpush.msra.mxu0 %v269
    %2182 = vmatpush.msra.mxu0 %v267
    %2183 = vmatpush.msra.mxu0 %v265
    %2184 = vmatpush.msra.mxu0 %v263
    %2185 = vmatpush.msra.mxu0 %v261
    %2186 = vmatpush.msra.mxu0 %v259
    %2187 = vmatpush.msra.mxu0 %v257
    %2188 = vmatmul.f32.gmra.mxu0 %v2170
    %v2189 = vpop.f32.mrf.mxu0
    %v2190 = vadd.f32 0.0, %v2189
    %2191 = vdwg.mxu0
    %2192 = vmatpush.msra.mxu0 0.0
    %2193 = vmatpush.msra.mxu0 0.0
    %2194 = vmatpush.msra.mxu0 0.0
    %2195 = vmatpush.msra.mxu0 0.0
    %2196 = vmatpush.msra.mxu0 0.0
    %2197 = vmatpush.msra.mxu0 0.0
    %2198 = vmatpush.msra.mxu0 0.0
    %2199 = vmatpush.msra.mxu0 0.0
    %2200 = vmatpush.msra.mxu0 %v272
    %2201 = vmatpush.msra.mxu0 %v270
    %2202 = vmatpush.msra.mxu0 %v268
    %2203 = vmatpush.msra.mxu0 %v266
    %2204 = vmatpush.msra.mxu0 %v264
    %2205 = vmatpush.msra.mxu0 %v262
    %2206 = vmatpush.msra.mxu0 %v260
    %2207 = vmatpush.msra.mxu0 %v258
    %2208 = vmatmul.f32.gmra.mxu0 %v2170
    %v2209 = vpop.f32.mrf.mxu0
    %v2210 = vadd.f32 0.0, %v2209
    %2211 = vdwg.mxu0
    %v2212 = vadd.f32 %v2167, %v2190
    %v2213 = vadd.f32 %v2168, %v2210
    %v2214 = vxor.u32 %v2212, 2147483648
    %v2215 = vxor.u32 %v2213, 2147483648
    %v2216 = vmul.f32 %v2214, 1.442695
    %v2217 = vpow.pop %v2216
    %v2218 = vmul.f32 %v2215, 1.442695
    %v2219 = vpow.pop %v2218
    %v2220 = vadd.f32 %v2217, 1.0
    %v2221 = vadd.f32 %v2219, 1.0
    %v2222 = vrcp.pop %v2220
    %v2223 = vmul.f32 %v2220, %v2222
    %v2224 = vsub.f32 1.0, %v2223
    %v2225 = vmul.f32 %v2222, %v2224
    %v2226 = vadd.f32 %v2222, %v2225
    %vm2227 = vweird.f32 %v2220
    %vm2228 = vweird.f32 %v2222
    %vm2229 = vmor %vm2227, %vm2228
    %v2230 = vsel %vm2229, %v2222, %v2226
    %v2231 = vand.u32 2147483647, %v2220
    %vm2232 = vcmp.eq.f32.partialorder %v2231, 8.507059e+37
    %v2233 = vand.u32 %v2220, 2147483648
    %v2234 = vor.u32 1.1754944e-38, %v2233
    %v2235 = vsel %vm2232, %v2234, %v2230
    %v2236 = vmul.f32 1.0, %v2235
    %v2237 = vrcp.pop %v2221
    %v2238 = vmul.f32 %v2221, %v2237
    %v2239 = vsub.f32 1.0, %v2238
    %v2240 = vmul.f32 %v2237, %v2239
    %v2241 = vadd.f32 %v2237, %v2240
    %vm2242 = vweird.f32 %v2221
    %vm2243 = vweird.f32 %v2237
    %vm2244 = vmor %vm2242, %vm2243
    %v2245 = vsel %vm2244, %v2237, %v2241
    %v2246 = vand.u32 2147483647, %v2221
    %vm2247 = vcmp.eq.f32.partialorder %v2246, 8.507059e+37
    %v2248 = vand.u32 %v2221, 2147483648
    %v2249 = vor.u32 1.1754944e-38, %v2248
    %v2250 = vsel %vm2247, %v2249, %v2245
    %v2251 = vmul.f32 1.0, %v2250
    %v2252 = vtanh.pop %v2213
    %v2253 = vmul.f32 %v2236, %v1958
    %2255 = vrot.lane.b32.xlu0 %v2252, 64
    %v2256 = vpop.permute.xlu0 %2255
    %v2258 = vmul.f32 %v2236, %v2256
    %2260 = vrot.lane.b32.xlu0 %v2258, 64
    %v2261 = vpop.permute.xlu0 %2260
    %v2263 = vadd.f32 %v2253, %v2261
    %v2264 = vtanh.pop %v2263
    %2266 = vrot.lane.b32.xlu0 %v2264, 64
    %v2267 = vpop.permute.xlu0 %2266
    %v2269 = vmul.f32 %v2251, %v2267
    %2271 = vrot.lane.b32.xlu0 %v2065, 64
    %v2272 = vpop.permute.xlu0 %2271
    %v2274 = vsel %vm130, %v2269, %v2272
    %2275 = vmatpush.msra.mxu0 %v405
    %2276 = vmatpush.msra.mxu0 %v403
    %2277 = vmatpush.msra.mxu0 %v401
    %2278 = vmatpush.msra.mxu0 %v399
    %2279 = vmatpush.msra.mxu0 %v397
    %2280 = vmatpush.msra.mxu0 %v395
    %2281 = vmatpush.msra.mxu0 %v393
    %2282 = vmatpush.msra.mxu0 %v391
    %2283 = vmatpush.msra.mxu0 %v389
    %2284 = vmatpush.msra.mxu0 %v387
    %2285 = vmatpush.msra.mxu0 %v385
    %2286 = vmatpush.msra.mxu0 %v383
    %2287 = vmatpush.msra.mxu0 %v381
    %2288 = vmatpush.msra.mxu0 %v379
    %2289 = vmatpush.msra.mxu0 %v377
    %2290 = vmatpush.msra.mxu0 %v375
    %2291 = vmatmul.f32.gmra.mxu0 %v2274
    %v2292 = vpop.f32.mrf.mxu0
    %v2293 = vadd.f32 %v408, %v2292
    %2294 = vdwg.mxu0
    %2295 = vmatpush.msra.mxu0 %v406
    %2296 = vmatpush.msra.mxu0 %v404
    %2297 = vmatpush.msra.mxu0 %v402
    %2298 = vmatpush.msra.mxu0 %v400
    %2299 = vmatpush.msra.mxu0 %v398
    %2300 = vmatpush.msra.mxu0 %v396
    %2301 = vmatpush.msra.mxu0 %v394
    %2302 = vmatpush.msra.mxu0 %v392
    %2303 = vmatpush.msra.mxu0 %v390
    %2304 = vmatpush.msra.mxu0 %v388
    %2305 = vmatpush.msra.mxu0 %v386
    %2306 = vmatpush.msra.mxu0 %v384
    %2307 = vmatpush.msra.mxu0 %v382
    %2308 = vmatpush.msra.mxu0 %v380
    %2309 = vmatpush.msra.mxu0 %v378
    %2310 = vmatpush.msra.mxu0 %v376
    %2311 = vmatmul.f32.gmra.mxu0 %v2274
    %v2312 = vpop.f32.mrf.mxu0
    %v2313 = vadd.f32 %v409, %v2312
    %2314 = vdwg.mxu0
    %v2315 = vxor.u32 %v2293, 2147483648
    %v2316 = vxor.u32 %v2313, 2147483648
    %v2317 = vmul.f32 %v2315, 1.442695
    %v2318 = vpow.pop %v2317
    %v2319 = vmul.f32 %v2316, 1.442695
    %v2320 = vpow.pop %v2319
    %v2321 = vadd.f32 %v2318, 1.0
    %v2322 = vadd.f32 %v2320, 1.0
    %v2323 = vrcp.pop %v2321
    %v2324 = vmul.f32 %v2321, %v2323
    %v2325 = vsub.f32 1.0, %v2324
    %v2326 = vmul.f32 %v2323, %v2325
    %v2327 = vadd.f32 %v2323, %v2326
    %vm2328 = vweird.f32 %v2321
    %vm2329 = vweird.f32 %v2323
    %vm2330 = vmor %vm2328, %vm2329
    %v2331 = vsel %vm2330, %v2323, %v2327
    %v2332 = vand.u32 2147483647, %v2321
    %vm2333 = vcmp.eq.f32.partialorder %v2332, 8.507059e+37
    %v2334 = vand.u32 %v2321, 2147483648
    %v2335 = vor.u32 1.1754944e-38, %v2334
    %v2336 = vsel %vm2333, %v2335, %v2331
    %v2337 = vmul.f32 1.0, %v2336
    %v2338 = vrcp.pop %v2322
    %v2339 = vmul.f32 %v2322, %v2338
    %v2340 = vsub.f32 1.0, %v2339
    %v2341 = vmul.f32 %v2338, %v2340
    %v2342 = vadd.f32 %v2338, %v2341
    %vm2343 = vweird.f32 %v2322
    %vm2344 = vweird.f32 %v2338
    %vm2345 = vmor %vm2343, %vm2344
    %v2346 = vsel %vm2345, %v2338, %v2342
    %v2347 = vand.u32 2147483647, %v2322
    %vm2348 = vcmp.eq.f32.partialorder %v2347, 8.507059e+37
    %v2349 = vand.u32 %v2322, 2147483648
    %v2350 = vor.u32 1.1754944e-38, %v2349
    %v2351 = vsel %vm2348, %v2350, %v2346
    %v2352 = vmul.f32 1.0, %v2351
    %v2353 = vtanh.pop %v2313
    %v2354 = vmul.f32 %v2337, %v2059
    %2356 = vrot.lane.b32.xlu0 %v2353, 64
    %v2357 = vpop.permute.xlu0 %2356
    %v2359 = vmul.f32 %v2337, %v2357
    %2361 = vrot.lane.b32.xlu0 %v2359, 64
    %v2362 = vpop.permute.xlu0 %2361
    %v2364 = vadd.f32 %v2354, %v2362
    %v2365 = vtanh.pop %v2364
    %2367 = vrot.lane.b32.xlu0 %v2365, 64
    %v2368 = vpop.permute.xlu0 %2367
    %v2370 = vmul.f32 %v2352, %v2368
    %2372 = vrot.lane.b32.xlu0 %v2166, 64
    %v2373 = vpop.permute.xlu0 %2372
    %v2375 = vsel %vm130, %v2370, %v2373
    %2376 = vmatpush.msra.mxu0 %v539
    %2377 = vmatpush.msra.mxu0 %v537
    %2378 = vmatpush.msra.mxu0 %v535
    %2379 = vmatpush.msra.mxu0 %v533
    %2380 = vmatpush.msra.mxu0 %v531
    %2381 = vmatpush.msra.mxu0 %v529
    %2382 = vmatpush.msra.mxu0 %v527
    %2383 = vmatpush.msra.mxu0 %v525
    %2384 = vmatpush.msra.mxu0 %v523
    %2385 = vmatpush.msra.mxu0 %v521
    %2386 = vmatpush.msra.mxu0 %v519
    %2387 = vmatpush.msra.mxu0 %v517
    %2388 = vmatpush.msra.mxu0 %v515
    %2389 = vmatpush.msra.mxu0 %v513
    %2390 = vmatpush.msra.mxu0 %v511
    %2391 = vmatpush.msra.mxu0 %v509
    %2392 = vmatmul.f32.gmra.mxu0 %v2375
    %v2393 = vpop.f32.mrf.mxu0
    %v2394 = vadd.f32 %v542, %v2393
    %2395 = vdwg.mxu0
    %2396 = vmatpush.msra.mxu0 %v540
    %2397 = vmatpush.msra.mxu0 %v538
    %2398 = vmatpush.msra.mxu0 %v536
    %2399 = vmatpush.msra.mxu0 %v534
    %2400 = vmatpush.msra.mxu0 %v532
    %2401 = vmatpush.msra.mxu0 %v530
    %2402 = vmatpush.msra.mxu0 %v528
    %2403 = vmatpush.msra.mxu0 %v526
    %2404 = vmatpush.msra.mxu0 %v524
    %2405 = vmatpush.msra.mxu0 %v522
    %2406 = vmatpush.msra.mxu0 %v520
    %2407 = vmatpush.msra.mxu0 %v518
    %2408 = vmatpush.msra.mxu0 %v516
    %2409 = vmatpush.msra.mxu0 %v514
    %2410 = vmatpush.msra.mxu0 %v512
    %2411 = vmatpush.msra.mxu0 %v510
    %2412 = vmatmul.f32.gmra.mxu0 %v2375
    %v2413 = vpop.f32.mrf.mxu0
    %v2414 = vadd.f32 %v543, %v2413
    %2415 = vdwg.mxu0
    %v2416 = vxor.u32 %v2394, 2147483648
    %v2417 = vxor.u32 %v2414, 2147483648
    %v2418 = vmul.f32 %v2416, 1.442695
    %v2419 = vpow.pop %v2418
    %v2420 = vmul.f32 %v2417, 1.442695
    %v2421 = vpow.pop %v2420
    %v2422 = vadd.f32 %v2419, 1.0
    %v2423 = vadd.f32 %v2421, 1.0
    %v2424 = vrcp.pop %v2422
    %v2425 = vmul.f32 %v2422, %v2424
    %v2426 = vsub.f32 1.0, %v2425
    %v2427 = vmul.f32 %v2424, %v2426
    %v2428 = vadd.f32 %v2424, %v2427
    %vm2429 = vweird.f32 %v2422
    %vm2430 = vweird.f32 %v2424
    %vm2431 = vmor %vm2429, %vm2430
    %v2432 = vsel %vm2431, %v2424, %v2428
    %v2433 = vand.u32 2147483647, %v2422
    %vm2434 = vcmp.eq.f32.partialorder %v2433, 8.507059e+37
    %v2435 = vand.u32 %v2422, 2147483648
    %v2436 = vor.u32 1.1754944e-38, %v2435
    %v2437 = vsel %vm2434, %v2436, %v2432
    %v2438 = vmul.f32 1.0, %v2437
    %v2439 = vrcp.pop %v2423
    %v2440 = vmul.f32 %v2423, %v2439
    %v2441 = vsub.f32 1.0, %v2440
    %v2442 = vmul.f32 %v2439, %v2441
    %v2443 = vadd.f32 %v2439, %v2442
    %vm2444 = vweird.f32 %v2423
    %vm2445 = vweird.f32 %v2439
    %vm2446 = vmor %vm2444, %vm2445
    %v2447 = vsel %vm2446, %v2439, %v2443
    %v2448 = vand.u32 2147483647, %v2423
    %vm2449 = vcmp.eq.f32.partialorder %v2448, 8.507059e+37
    %v2450 = vand.u32 %v2423, 2147483648
    %v2451 = vor.u32 1.1754944e-38, %v2450
    %v2452 = vsel %vm2449, %v2451, %v2447
    %v2453 = vmul.f32 1.0, %v2452
    %v2454 = vtanh.pop %v2414
    %v2455 = vmul.f32 %v2438, %v2160
    %2457 = vrot.lane.b32.xlu0 %v2454, 64
    %v2458 = vpop.permute.xlu0 %2457
    %v2460 = vmul.f32 %v2438, %v2458
    %2462 = vrot.lane.b32.xlu0 %v2460, 64
    %v2463 = vpop.permute.xlu0 %2462
    %v2465 = vadd.f32 %v2455, %v2463
    %v2466 = vtanh.pop %v2465
    %2468 = vrot.lane.b32.xlu0 %v2466, 64
    %v2469 = vpop.permute.xlu0 %2468
    %v2471 = vmul.f32 %v2453, %v2469
    %v2472 = vld [vmem:[#allocation2 + $0x70] sm:$0xff]
    %v2473 = vld [vmem:[#allocation2 + $0x78] sm:$0xff]
    %v2475 = vsel %vm130, %v2269, 0
    %2477 = vmatpush.msra.mxu0 0.0
    %2478 = vmatpush.msra.mxu0 0.0
    %2479 = vmatpush.msra.mxu0 0.0
    %2480 = vmatpush.msra.mxu0 0.0
    %2481 = vmatpush.msra.mxu0 0.0
    %2482 = vmatpush.msra.mxu0 0.0
    %2483 = vmatpush.msra.mxu0 0.0
    %2484 = vmatpush.msra.mxu0 0.0
    %2485 = vmatpush.msra.mxu0 %v271
    %2486 = vmatpush.msra.mxu0 %v269
    %2487 = vmatpush.msra.mxu0 %v267
    %2488 = vmatpush.msra.mxu0 %v265
    %2489 = vmatpush.msra.mxu0 %v263
    %2490 = vmatpush.msra.mxu0 %v261
    %2491 = vmatpush.msra.mxu0 %v259
    %2492 = vmatpush.msra.mxu0 %v257
    %2493 = vmatmul.f32.gmra.mxu0 %v2475
    %v2494 = vpop.f32.mrf.mxu0
    %v2495 = vadd.f32 0.0, %v2494
    %2496 = vdwg.mxu0
    %2497 = vmatpush.msra.mxu0 0.0
    %2498 = vmatpush.msra.mxu0 0.0
    %2499 = vmatpush.msra.mxu0 0.0
    %2500 = vmatpush.msra.mxu0 0.0
    %2501 = vmatpush.msra.mxu0 0.0
    %2502 = vmatpush.msra.mxu0 0.0
    %2503 = vmatpush.msra.mxu0 0.0
    %2504 = vmatpush.msra.mxu0 0.0
    %2505 = vmatpush.msra.mxu0 %v272
    %2506 = vmatpush.msra.mxu0 %v270
    %2507 = vmatpush.msra.mxu0 %v268
    %2508 = vmatpush.msra.mxu0 %v266
    %2509 = vmatpush.msra.mxu0 %v264
    %2510 = vmatpush.msra.mxu0 %v262
    %2511 = vmatpush.msra.mxu0 %v260
    %2512 = vmatpush.msra.mxu0 %v258
    %2513 = vmatmul.f32.gmra.mxu0 %v2475
    %v2514 = vpop.f32.mrf.mxu0
    %v2515 = vadd.f32 0.0, %v2514
    %2516 = vdwg.mxu0
    %v2517 = vadd.f32 %v2472, %v2495
    %v2518 = vadd.f32 %v2473, %v2515
    %v2519 = vxor.u32 %v2517, 2147483648
    %v2520 = vxor.u32 %v2518, 2147483648
    %v2521 = vmul.f32 %v2519, 1.442695
    %v2522 = vpow.pop %v2521
    %v2523 = vmul.f32 %v2520, 1.442695
    %v2524 = vpow.pop %v2523
    %v2525 = vadd.f32 %v2522, 1.0
    %v2526 = vadd.f32 %v2524, 1.0
    %v2527 = vrcp.pop %v2525
    %v2528 = vmul.f32 %v2525, %v2527
    %v2529 = vsub.f32 1.0, %v2528
    %v2530 = vmul.f32 %v2527, %v2529
    %v2531 = vadd.f32 %v2527, %v2530
    %vm2532 = vweird.f32 %v2525
    %vm2533 = vweird.f32 %v2527
    %vm2534 = vmor %vm2532, %vm2533
    %v2535 = vsel %vm2534, %v2527, %v2531
    %v2536 = vand.u32 2147483647, %v2525
    %vm2537 = vcmp.eq.f32.partialorder %v2536, 8.507059e+37
    %v2538 = vand.u32 %v2525, 2147483648
    %v2539 = vor.u32 1.1754944e-38, %v2538
    %v2540 = vsel %vm2537, %v2539, %v2535
    %v2541 = vmul.f32 1.0, %v2540
    %v2542 = vrcp.pop %v2526
    %v2543 = vmul.f32 %v2526, %v2542
    %v2544 = vsub.f32 1.0, %v2543
    %v2545 = vmul.f32 %v2542, %v2544
    %v2546 = vadd.f32 %v2542, %v2545
    %vm2547 = vweird.f32 %v2526
    %vm2548 = vweird.f32 %v2542
    %vm2549 = vmor %vm2547, %vm2548
    %v2550 = vsel %vm2549, %v2542, %v2546
    %v2551 = vand.u32 2147483647, %v2526
    %vm2552 = vcmp.eq.f32.partialorder %v2551, 8.507059e+37
    %v2553 = vand.u32 %v2526, 2147483648
    %v2554 = vor.u32 1.1754944e-38, %v2553
    %v2555 = vsel %vm2552, %v2554, %v2550
    %v2556 = vmul.f32 1.0, %v2555
    %v2557 = vtanh.pop %v2518
    %v2558 = vmul.f32 %v2541, %v2263
    %2560 = vrot.lane.b32.xlu0 %v2557, 64
    %v2561 = vpop.permute.xlu0 %2560
    %v2563 = vmul.f32 %v2541, %v2561
    %2565 = vrot.lane.b32.xlu0 %v2563, 64
    %v2566 = vpop.permute.xlu0 %2565
    %v2568 = vadd.f32 %v2558, %v2566
    %v2569 = vtanh.pop %v2568
    %2571 = vrot.lane.b32.xlu0 %v2569, 64
    %v2572 = vpop.permute.xlu0 %2571
    %v2574 = vmul.f32 %v2556, %v2572
    %2576 = vrot.lane.b32.xlu0 %v2370, 64
    %v2577 = vpop.permute.xlu0 %2576
    %v2579 = vsel %vm130, %v2574, %v2577
    %2580 = vmatpush.msra.mxu0 %v405
    %2581 = vmatpush.msra.mxu0 %v403
    %2582 = vmatpush.msra.mxu0 %v401
    %2583 = vmatpush.msra.mxu0 %v399
    %2584 = vmatpush.msra.mxu0 %v397
    %2585 = vmatpush.msra.mxu0 %v395
    %2586 = vmatpush.msra.mxu0 %v393
    %2587 = vmatpush.msra.mxu0 %v391
    %2588 = vmatpush.msra.mxu0 %v389
    %2589 = vmatpush.msra.mxu0 %v387
    %2590 = vmatpush.msra.mxu0 %v385
    %2591 = vmatpush.msra.mxu0 %v383
    %2592 = vmatpush.msra.mxu0 %v381
    %2593 = vmatpush.msra.mxu0 %v379
    %2594 = vmatpush.msra.mxu0 %v377
    %2595 = vmatpush.msra.mxu0 %v375
    %2596 = vmatmul.f32.gmra.mxu0 %v2579
    %v2597 = vpop.f32.mrf.mxu0
    %v2598 = vadd.f32 %v408, %v2597
    %2599 = vdwg.mxu0
    %2600 = vmatpush.msra.mxu0 %v406
    %2601 = vmatpush.msra.mxu0 %v404
    %2602 = vmatpush.msra.mxu0 %v402
    %2603 = vmatpush.msra.mxu0 %v400
    %2604 = vmatpush.msra.mxu0 %v398
    %2605 = vmatpush.msra.mxu0 %v396
    %2606 = vmatpush.msra.mxu0 %v394
    %2607 = vmatpush.msra.mxu0 %v392
    %2608 = vmatpush.msra.mxu0 %v390
    %2609 = vmatpush.msra.mxu0 %v388
    %2610 = vmatpush.msra.mxu0 %v386
    %2611 = vmatpush.msra.mxu0 %v384
    %2612 = vmatpush.msra.mxu0 %v382
    %2613 = vmatpush.msra.mxu0 %v380
    %2614 = vmatpush.msra.mxu0 %v378
    %2615 = vmatpush.msra.mxu0 %v376
    %2616 = vmatmul.f32.gmra.mxu0 %v2579
    %v2617 = vpop.f32.mrf.mxu0
    %v2618 = vadd.f32 %v409, %v2617
    %2619 = vdwg.mxu0
    %v2620 = vxor.u32 %v2598, 2147483648
    %v2621 = vxor.u32 %v2618, 2147483648
    %v2622 = vmul.f32 %v2620, 1.442695
    %v2623 = vpow.pop %v2622
    %v2624 = vmul.f32 %v2621, 1.442695
    %v2625 = vpow.pop %v2624
    %v2626 = vadd.f32 %v2623, 1.0
    %v2627 = vadd.f32 %v2625, 1.0
    %v2628 = vrcp.pop %v2626
    %v2629 = vmul.f32 %v2626, %v2628
    %v2630 = vsub.f32 1.0, %v2629
    %v2631 = vmul.f32 %v2628, %v2630
    %v2632 = vadd.f32 %v2628, %v2631
    %vm2633 = vweird.f32 %v2626
    %vm2634 = vweird.f32 %v2628
    %vm2635 = vmor %vm2633, %vm2634
    %v2636 = vsel %vm2635, %v2628, %v2632
    %v2637 = vand.u32 2147483647, %v2626
    %vm2638 = vcmp.eq.f32.partialorder %v2637, 8.507059e+37
    %v2639 = vand.u32 %v2626, 2147483648
    %v2640 = vor.u32 1.1754944e-38, %v2639
    %v2641 = vsel %vm2638, %v2640, %v2636
    %v2642 = vmul.f32 1.0, %v2641
    %v2643 = vrcp.pop %v2627
    %v2644 = vmul.f32 %v2627, %v2643
    %v2645 = vsub.f32 1.0, %v2644
    %v2646 = vmul.f32 %v2643, %v2645
    %v2647 = vadd.f32 %v2643, %v2646
    %vm2648 = vweird.f32 %v2627
    %vm2649 = vweird.f32 %v2643
    %vm2650 = vmor %vm2648, %vm2649
    %v2651 = vsel %vm2650, %v2643, %v2647
    %v2652 = vand.u32 2147483647, %v2627
    %vm2653 = vcmp.eq.f32.partialorder %v2652, 8.507059e+37
    %v2654 = vand.u32 %v2627, 2147483648
    %v2655 = vor.u32 1.1754944e-38, %v2654
    %v2656 = vsel %vm2653, %v2655, %v2651
    %v2657 = vmul.f32 1.0, %v2656
    %v2658 = vtanh.pop %v2618
    %v2659 = vmul.f32 %v2642, %v2364
    %2661 = vrot.lane.b32.xlu0 %v2658, 64
    %v2662 = vpop.permute.xlu0 %2661
    %v2664 = vmul.f32 %v2642, %v2662
    %2666 = vrot.lane.b32.xlu0 %v2664, 64
    %v2667 = vpop.permute.xlu0 %2666
    %v2669 = vadd.f32 %v2659, %v2667
    %v2670 = vtanh.pop %v2669
    %2672 = vrot.lane.b32.xlu0 %v2670, 64
    %v2673 = vpop.permute.xlu0 %2672
    %v2675 = vmul.f32 %v2657, %v2673
    %2677 = vrot.lane.b32.xlu0 %v2471, 64
    %v2678 = vpop.permute.xlu0 %2677
    %v2680 = vsel %vm130, %v2675, %v2678
    %2681 = vmatpush.msra.mxu0 %v539
    %2682 = vmatpush.msra.mxu0 %v537
    %2683 = vmatpush.msra.mxu0 %v535
    %2684 = vmatpush.msra.mxu0 %v533
    %2685 = vmatpush.msra.mxu0 %v531
    %2686 = vmatpush.msra.mxu0 %v529
    %2687 = vmatpush.msra.mxu0 %v527
    %2688 = vmatpush.msra.mxu0 %v525
    %2689 = vmatpush.msra.mxu0 %v523
    %2690 = vmatpush.msra.mxu0 %v521
    %2691 = vmatpush.msra.mxu0 %v519
    %2692 = vmatpush.msra.mxu0 %v517
    %2693 = vmatpush.msra.mxu0 %v515
    %2694 = vmatpush.msra.mxu0 %v513
    %2695 = vmatpush.msra.mxu0 %v511
    %2696 = vmatpush.msra.mxu0 %v509
    %2697 = vmatmul.f32.gmra.mxu0 %v2680
    %v2698 = vpop.f32.mrf.mxu0
    %v2699 = vadd.f32 %v542, %v2698
    %2700 = vdwg.mxu0
    %2701 = vmatpush.msra.mxu0 %v540
    %2702 = vmatpush.msra.mxu0 %v538
    %2703 = vmatpush.msra.mxu0 %v536
    %2704 = vmatpush.msra.mxu0 %v534
    %2705 = vmatpush.msra.mxu0 %v532
    %2706 = vmatpush.msra.mxu0 %v530
    %2707 = vmatpush.msra.mxu0 %v528
    %2708 = vmatpush.msra.mxu0 %v526
    %2709 = vmatpush.msra.mxu0 %v524
    %2710 = vmatpush.msra.mxu0 %v522
    %2711 = vmatpush.msra.mxu0 %v520
    %2712 = vmatpush.msra.mxu0 %v518
    %2713 = vmatpush.msra.mxu0 %v516
    %2714 = vmatpush.msra.mxu0 %v514
    %2715 = vmatpush.msra.mxu0 %v512
    %2716 = vmatpush.msra.mxu0 %v510
    %2717 = vmatmul.f32.gmra.mxu0 %v2680
    %v2718 = vpop.f32.mrf.mxu0
    %v2719 = vadd.f32 %v543, %v2718
    %2720 = vdwg.mxu0
    %v2721 = vxor.u32 %v2699, 2147483648
    %v2722 = vxor.u32 %v2719, 2147483648
    %v2723 = vmul.f32 %v2721, 1.442695
    %v2724 = vpow.pop %v2723
    %v2725 = vmul.f32 %v2722, 1.442695
    %v2726 = vpow.pop %v2725
    %v2727 = vadd.f32 %v2724, 1.0
    %v2728 = vadd.f32 %v2726, 1.0
    %v2729 = vrcp.pop %v2727
    %v2730 = vmul.f32 %v2727, %v2729
    %v2731 = vsub.f32 1.0, %v2730
    %v2732 = vmul.f32 %v2729, %v2731
    %v2733 = vadd.f32 %v2729, %v2732
    %vm2734 = vweird.f32 %v2727
    %vm2735 = vweird.f32 %v2729
    %vm2736 = vmor %vm2734, %vm2735
    %v2737 = vsel %vm2736, %v2729, %v2733
    %v2738 = vand.u32 2147483647, %v2727
    %vm2739 = vcmp.eq.f32.partialorder %v2738, 8.507059e+37
    %v2740 = vand.u32 %v2727, 2147483648
    %v2741 = vor.u32 1.1754944e-38, %v2740
    %v2742 = vsel %vm2739, %v2741, %v2737
    %v2743 = vmul.f32 1.0, %v2742
    %v2744 = vrcp.pop %v2728
    %v2745 = vmul.f32 %v2728, %v2744
    %v2746 = vsub.f32 1.0, %v2745
    %v2747 = vmul.f32 %v2744, %v2746
    %v2748 = vadd.f32 %v2744, %v2747
    %vm2749 = vweird.f32 %v2728
    %vm2750 = vweird.f32 %v2744
    %vm2751 = vmor %vm2749, %vm2750
    %v2752 = vsel %vm2751, %v2744, %v2748
    %v2753 = vand.u32 2147483647, %v2728
    %vm2754 = vcmp.eq.f32.partialorder %v2753, 8.507059e+37
    %v2755 = vand.u32 %v2728, 2147483648
    %v2756 = vor.u32 1.1754944e-38, %v2755
    %v2757 = vsel %vm2754, %v2756, %v2752
    %v2758 = vmul.f32 1.0, %v2757
    %v2759 = vtanh.pop %v2719
    %v2760 = vmul.f32 %v2743, %v2465
    %2762 = vrot.lane.b32.xlu0 %v2759, 64
    %v2763 = vpop.permute.xlu0 %2762
    %v2765 = vmul.f32 %v2743, %v2763
    %2767 = vrot.lane.b32.xlu0 %v2765, 64
    %v2768 = vpop.permute.xlu0 %2767
    %v2770 = vadd.f32 %v2760, %v2768
    %v2771 = vtanh.pop %v2770
    %2773 = vrot.lane.b32.xlu0 %v2771, 64
    %v2774 = vpop.permute.xlu0 %2773
    %v2776 = vmul.f32 %v2758, %v2774
    %v2777 = vld [vmem:[%s8] sm:$0xff]
    %v2778 = vld [vmem:[%s8 + $0x8] sm:$0xff]
    %v2779 = vld [vmem:[%s8 + $0x10] sm:$0xff]
    %v2780 = vld [vmem:[%s8 + $0x18] sm:$0xff]
    %v2781 = vld [vmem:[%s8 + $0x20] sm:$0xff]
    %v2782 = vld [vmem:[%s8 + $0x28] sm:$0xff]
    %v2783 = vld [vmem:[%s8 + $0x30] sm:$0xff]
    %v2784 = vld [vmem:[%s8 + $0x38] sm:$0xff]
    %v2785 = vld [vmem:[#allocation3] sm:$0x1]
    %v2787 = vperm.slane %v2785, 0
    %v2790 = vsel %vm130, %v2776, 0
    %2792 = vmatpush.msra.mxu0 0.0
    %2793 = vmatpush.msra.mxu0 0.0
    %2794 = vmatpush.msra.mxu0 0.0
    %2795 = vmatpush.msra.mxu0 0.0
    %2796 = vmatpush.msra.mxu0 0.0
    %2797 = vmatpush.msra.mxu0 0.0
    %2798 = vmatpush.msra.mxu0 0.0
    %2799 = vmatpush.msra.mxu0 0.0
    %2800 = vmatpush.msra.mxu0 %v2784
    %2801 = vmatpush.msra.mxu0 %v2783
    %2802 = vmatpush.msra.mxu0 %v2782
    %2803 = vmatpush.msra.mxu0 %v2781
    %2804 = vmatpush.msra.mxu0 %v2780
    %2805 = vmatpush.msra.mxu0 %v2779
    %2806 = vmatpush.msra.mxu0 %v2778
    %2807 = vmatpush.msra.mxu0 %v2777
    %2808 = vmatmul.f32.gmra.mxu0 %v2790
    %v2809 = vpop.f32.mrf.mxu0
    %v2810 = vadd.f32 %v2787, %v2809
    %2811 = vdwg.mxu0
    %v2812 = vxor.u32 %v2810, 2147483648
    %v2813 = vmul.f32 %v2812, 1.442695
    %v2814 = vpow.pop %v2813
    %v2815 = vadd.f32 %v2814, 1.0
    %v2816 = vrcp.pop %v2815
    %v2817 = vmul.f32 %v2815, %v2816
    %v2818 = vsub.f32 1.0, %v2817
    %v2819 = vmul.f32 %v2816, %v2818
    %v2820 = vadd.f32 %v2816, %v2819
    %vm2821 = vweird.f32 %v2815
    %vm2822 = vweird.f32 %v2816
    %vm2823 = vmor %vm2821, %vm2822
    %v2824 = vsel %vm2823, %v2816, %v2820
    %v2825 = vand.u32 2147483647, %v2815
    %vm2826 = vcmp.eq.f32.partialorder %v2825, 8.507059e+37
    %v2827 = vand.u32 %v2815, 2147483648
    %v2828 = vor.u32 1.1754944e-38, %v2827
    %v2829 = vsel %vm2826, %v2828, %v2824
    %v2830 = vmul.f32 1.0, %v2829
    %vm2831 = vcmask 7168
    %2832 = vst.msk [vmem:[%s10] sm:$0xff] %vm2831, %v2830
    // Predicated region
    $region58: #{tpu_custom_call.1} parent=1 // pred_check
      _
    $region59: #{tpu_custom_call.1} parent=1 // pred_check_branch
      %2834 = sbr.rel (0) target = $region61
    $region60: #{tpu_custom_call.1} parent=1 // pred_region
      _
    $region61: #{tpu_custom_call.1} parent=1 // pred_fallthru
      _
    // Predicated region
    $region62: #{tpu_custom_call.1} parent=1 // pred_check
      _
    $region63: #{tpu_custom_call.1} parent=1 // pred_check_branch
      %2836 = sbr.rel (0) target = $region65
    $region64: #{tpu_custom_call.1} parent=1 // pred_region
      _
    $region65: #{tpu_custom_call.1} parent=1 // pred_fallthru
      _
    %2837 = vsyncpa [#allocation5], 1
    %2838 = vsyncpa [#allocation7], 1
    %2839 = vsyncpa [#allocation10], 1

</llo_original>
